<compile_context>
chip_gen: v7x
topology: tpu7x:2x2x1
jax: 0.10.0
libtpu: 0.0.40
codegen_flags: <defaults>
</compile_context>

<pallas_src>
import jax
import jax.numpy as jnp
from jax.experimental import pallas as pl
from jax.experimental.pallas import tpu as pltpu

# Module-implied geometry.
D_IN = 50            # input spatial extent
D1 = 25              # after conv1 (k=2, s=2)
D2 = 5               # after conv2 (k=5, s=5)
K1 = 8               # conv1 patch size  1*2*2*2
C1 = 4               # conv1 out channels
C2 = 2               # conv2 out channels
KP2 = 5 * 5 * 5      # conv2 kernel offsets per input channel = 125
M2 = D2 * D2 * D2    # conv2 output positions per batch = 125


# ------------------------- conv1 kernel (lane-dense) ------------------------ #
# relu(W1(4,8) @ S(8,TM) + b1) -> (4, TM).  M = B*25^3 patches ride the lanes.

def _conv1_kernel(sp_ref, w_ref, b_ref, o_ref):
    y = jnp.dot(w_ref[...], sp_ref[...], preferred_element_type=jnp.float32)
    o_ref[...] = jnp.maximum(y + b_ref[...], 0.0)


def _pick_tm(M, tm_max=65536, min_steps=4):
    """Biggest lane tile (multiple of 128) that still leaves >= min_steps steps."""
    if M <= 128:
        return M
    tm = min(tm_max, M)
    per_step = -(-M // min_steps)            # ceil(M / min_steps)
    per_step = -(-per_step // 128) * 128     # round up to a lane multiple
    tm = min(tm, per_step)
    if tm >= M:
        return M
    return max(tm, 128)


def conv1_matmul_relu_t(sp_t, w1t, b1):
    K, M = sp_t.shape                 # (8, B*15625)
    N = w1t.shape[0]                  # 4
    tm = _pick_tm(M)                  # big tiles; >=4 steps (>=2 per TC on v7x)
    grid = (pl.cdiv(M, tm),)          # ragged last tile -> masked boundary writes
    return pl.pallas_call(
        _conv1_kernel,
        out_shape=jax.ShapeDtypeStruct((N, M), jnp.float32),
        grid=grid,
        in_specs=[
            pl.BlockSpec((K, tm), lambda i: (0, i)),
            pl.BlockSpec((N, K), lambda i: (0, 0)),
            pl.BlockSpec((N, 1), lambda i: (0, 0)),
        ],
        out_specs=pl.BlockSpec((N, tm), lambda i: (0, i)),
        compiler_params=pltpu.CompilerParams(
            dimension_semantics=("parallel",)),   # megacore-shard M on v7x
    )(sp_t, w1t, b1.reshape(N, 1))


# ----------------- fused conv2 + flatten + linear kernel -------------------- #
# Per grid step: TB batch elements.  For each local batch j:
#   p = relu(sum_c W2[c](2,125) @ HP[c,j](125,125) + b2)    (lane-dense)
#   q = sum(p * WLr(2,125)) + bl     (torch.flatten order folded into WLr)
# Each step owns its output block (1, 1, TB): no cross-step dependence, so the
# batch grid axis is "parallel" (2-TC split on v7x).

def _conv2_flatten_linear_kernel(hp_ref, w2_ref, b2_ref, wl_ref, bl_ref, o_ref):
    nb = hp_ref.shape[1]                                       # TB (static)
    lane = jax.lax.broadcasted_iota(jnp.int32, (1, 1, nb), 2)
    out = jnp.zeros((1, 1, nb), jnp.float32)
    b2 = b2_ref[...]                                           # (2, 1)
    wl = wl_ref[...]                                           # (2, 125)
    for j in range(nb):                                        # static unroll
        p = jnp.dot(w2_ref[0], hp_ref[0, j],
                    preferred_element_type=jnp.float32)        # (2, 125)
        for c in range(1, C1):
            p += jnp.dot(w2_ref[c], hp_ref[c, j],
                         preferred_element_type=jnp.float32)
        p = jnp.maximum(p + b2, 0.0)                           # (2, 125)
        r = jnp.sum(p * wl, axis=1, keepdims=True)             # (2, 1)
        q = jnp.sum(r, axis=0, keepdims=True).reshape(1, 1, 1)
        out = out + jnp.where(lane == j, q, 0.0)
    o_ref[...] = out + bl_ref[...].reshape(1, 1, 1)


def _pick_tb(B, tb_max=8):
    """Largest divisor of B that is <= tb_max (keeps tiling exact, no ragged)."""
    tb = min(B, tb_max)
    while B % tb != 0:
        tb -= 1
    return tb


def conv2_flatten_linear(hp4, w2c, b2, wl_r, bl):
    C, B, K, M = hp4.shape            # (4, B, 125, 125)
    N = w2c.shape[1]                  # 2
    TB = _pick_tb(B)
    G = B // TB
    out = pl.pallas_call(
        _conv2_flatten_linear_kernel,
        out_shape=jax.ShapeDtypeStruct((G, 1, TB), jnp.float32),
        grid=(G,),
        in_specs=[
            pl.BlockSpec((C, TB, K, M), lambda i: (0, i, 0, 0)),
            pl.BlockSpec((C, N, K), lambda i: (0, 0, 0)),
            pl.BlockSpec((N, 1), lambda i: (0, 0)),
            pl.BlockSpec((N, M), lambda i: (0, 0)),
            pl.BlockSpec((1, 1), lambda i: (0, 0)),
        ],
        out_specs=pl.BlockSpec((1, 1, TB), lambda i: (i, 0, 0)),  # owned per step
        compiler_params=pltpu.CompilerParams(
            dimension_semantics=("parallel",)),
    )(hp4, w2c, b2.reshape(N, 1), wl_r, bl.reshape(1, 1))
    return out.reshape(B, 1)


# ------------------------------ im2col glue --------------------------------- #
# TODO(synk): the stride-2 patch gather of (x + a) is not expressible with a
# BlockSpec index_map (no strided element gather), so it stays as one fused XLA
# reshape/transpose pass.  Columns are ordered (b, kd2, kh2, kw2, D, H, W) so
# that conv1's output reshapes for free into conv2's patch layout (no second
# im2col HBM round trip).

def _im2col_conv1_t(s):
    # s: (B, 1, 50, 50, 50) -> (8, B*15625)
    # rows: (k1d, k1h, k1w); columns: (b, kd2, kh2, kw2, D, H, W)
    B = s.shape[0]
    p = s.reshape(B, D2, 5, 2, D2, 5, 2, D2, 5, 2)
    # dims: (b, D, kd2, k1d, H, kh2, k1h, W, kw2, k1w)
    p = p.transpose(3, 6, 9, 0, 2, 5, 8, 1, 4, 7)
    # dims: (k1d, k1h, k1w, b, kd2, kh2, kw2, D, H, W)
    return p.reshape(K1, B * D1 * D1 * D1)


# ------------------------------- parameters --------------------------------- #

def init_params(key):
    ks = jax.random.split(key, 6)

    def u(k, shape, fan_in):
        bound = 1.0 / jnp.sqrt(fan_in)
        return jax.random.uniform(k, shape, jnp.float32, -bound, bound)

    w1 = u(ks[0], (4, 1, 2, 2, 2), 1 * 2 * 2 * 2)    # Conv3d(1, 4, 2)
    b1 = u(ks[1], (4,), 1 * 2 * 2 * 2)
    w2 = u(ks[2], (2, 4, 5, 5, 5), 4 * 5 * 5 * 5)    # Conv3d(4, 2, 5)
    b2 = u(ks[3], (2,), 4 * 5 * 5 * 5)
    wl = u(ks[4], (1, 250), 250)                     # Linear(250, 1)
    bl = u(ks[5], (1,), 250)
    return dict(w1=w1, b1=b1, w2=w2, b2=b2, wl=wl, bl=bl)


# -------------------------------- forward ----------------------------------- #

@jax.jit
def critic_forward(x, a, params):
    B = x.shape[0]

    # conv1: relu(W1 @ (x+a)_patches^T + b1), lane-dense, tiled over patches.
    sp_t = _im2col_conv1_t(x + a)                            # (8, B*15625)
    w1t = params["w1"].reshape(C1, K1)                       # (4, 8): (k1d,k1h,k1w)
    h1_t = conv1_matmul_relu_t(sp_t, w1t, params["b1"])      # (4, B*15625)

    # Free (bitcast) reshape into conv2's patch layout: (c, b, kd2kh2kw2, DHW).
    hp4 = h1_t.reshape(C1, B, KP2, M2)                       # (4, B, 125, 125)

    # conv2 + flatten + linear, fused.  torch.flatten's (c, d, h, w) order is
    # folded into the linear weight: wl.reshape(2, 125).
    w2c = params["w2"].reshape(C2, C1, KP2).transpose(1, 0, 2)   # (4, 2, 125)
    wl_r = params["wl"].reshape(C2, M2)                          # (2, 125)
    return conv2_flatten_linear(hp4, w2c, params["b2"], wl_r, params["bl"])


# ------------------------------- reference ---------------------------------- #

def critic_forward_ref(x, a, params):
    dn = ("NCDHW", "OIDHW", "NCDHW")
    h = jax.lax.conv_general_dilated(x + a, params["w1"], (2, 2, 2), "VALID",
                                     dimension_numbers=dn)
    h = jax.nn.relu(h + params["b1"].reshape(1, 4, 1, 1, 1))
    h = jax.lax.conv_general_dilated(h, params["w2"], (5, 5, 5), "VALID",
                                     dimension_numbers=dn)
    h = jax.nn.relu(h + params["b2"].reshape(1, 2, 1, 1, 1))
    h = h.reshape(h.shape[0], -1)
    return h @ params["wl"].T + params["bl"]


# ---------------------------------- main ------------------------------------ #

if __name__ == "__main__":
    key = jax.random.PRNGKey(0)
    kp, kx, ka = jax.random.split(key, 3)
    params = init_params(kp)

    B = 2
    x = jax.random.normal(kx, (B, 1, D_IN, D_IN, D_IN), jnp.float32)
    a = jax.random.normal(ka, (B, 1, D_IN, D_IN, D_IN), jnp.float32)

    q = critic_forward(x, a, params)
    jax.block_until_ready(q)

    q_ref = critic_forward_ref(x, a, params)
    assert q.shape == (B, 1)
    assert jnp.all(jnp.isfinite(q))
    assert jnp.allclose(q, q_ref, atol=1e-4, rtol=1e-4)

    print("KERNEL_OK")
</pallas_src>

<mosaic_0001>
module attributes {stable_mosaic.version = 11 : i64} {
  func.func @_conv1_kernel(%arg0: i32, %arg1: memref<8x7936xf32, #tpu.memory_space<vmem>>, %arg2: memref<4x8xf32, #tpu.memory_space<vmem>>, %arg3: memref<4x1xf32, #tpu.memory_space<vmem>>, %arg4: memref<4x7936xf32, #tpu.memory_space<vmem>>) attributes {dimension_semantics = [#tpu.dimension_semantics<parallel>], iteration_bounds = array<i64: 4>, scalar_prefetch = 0 : i64, scratch_operands = 0 : i64, tpu.core_type = #tpu.core_type<tc>, window_params = [{transform_indices = @transform_0, window_bounds = array<i64: 8, 7936>}, {pipeline_mode = #tpu.pipeline_mode<synchronous>, transform_indices = @transform_1, window_bounds = array<i64: 4, 8>}, {pipeline_mode = #tpu.pipeline_mode<synchronous>, transform_indices = @transform_2, window_bounds = array<i64: 4, 1>}, {transform_indices = @transform_3, window_bounds = array<i64: 4, 7936>}]} {
    %c0 = arith.constant 0 : index
    %c0_0 = arith.constant 0 : index
    %0 = vector.load %arg2[%c0, %c0_0] : memref<4x8xf32, #tpu.memory_space<vmem>>, vector<4x8xf32>
    %c0_1 = arith.constant 0 : index
    %c0_2 = arith.constant 0 : index
    %1 = vector.load %arg1[%c0_1, %c0_2] : memref<8x7936xf32, #tpu.memory_space<vmem>>, vector<8x7936xf32>
    %cst = arith.constant dense<0.000000e+00> : vector<4x7936xf32>
    %2 = tpu.matmul %0, %1, %cst {dimension_numbers = #tpu.dot_dimension_numbers<[1], [0], [0], [1], [0, 0, 1, 1], [], []>} : vector<4x8xf32>, vector<8x7936xf32>, vector<4x7936xf32> -> vector<4x7936xf32>
    %c0_3 = arith.constant 0 : index
    %c0_4 = arith.constant 0 : index
    %3 = vector.load %arg3[%c0_3, %c0_4] : memref<4x1xf32, #tpu.memory_space<vmem>>, vector<4x1xf32>
    %4 = vector.broadcast %3 : vector<4x1xf32> to vector<4x7936xf32>
    %5 = arith.addf %2, %4 : vector<4x7936xf32>
    %cst_5 = arith.constant 0.000000e+00 : f32
    %6 = vector.broadcast %cst_5 : f32 to vector<4x7936xf32>
    %7 = arith.maximumf %5, %6 : vector<4x7936xf32>
    %c0_6 = arith.constant 0 : index
    %c0_7 = arith.constant 0 : index
    %8 = vector.load %arg4[%c0_6, %c0_7] : memref<4x7936xf32, #tpu.memory_space<vmem>>, vector<4x7936xf32>
    tpu.vector_store %arg4[%c0_6, %c0_7], %7 {strides = array<i32>} : memref<4x7936xf32, #tpu.memory_space<vmem>>, vector<4x7936xf32>,
    return
  }
  func.func @transform_0(%arg0: i32) -> (i32, i32) {
    %c0_i32 = arith.constant 0 : i32
    %c0_i32_0 = arith.constant 0 : i32
    return %c0_i32, %arg0 : i32, i32
  }
  func.func @transform_1(%arg0: i32) -> (i32, i32) {
    %c0_i32 = arith.constant 0 : i32
    %c0_i32_0 = arith.constant 0 : i32
    %c0_i32_1 = arith.constant 0 : i32
    return %c0_i32, %c0_i32_0 : i32, i32
  }
  func.func @transform_2(%arg0: i32) -> (i32, i32) {
    %c0_i32 = arith.constant 0 : i32
    %c0_i32_0 = arith.constant 0 : i32
    %c0_i32_1 = arith.constant 0 : i32
    return %c0_i32, %c0_i32_0 : i32, i32
  }
  func.func @transform_3(%arg0: i32) -> (i32, i32) {
    %c0_i32 = arith.constant 0 : i32
    %c0_i32_0 = arith.constant 0 : i32
    return %c0_i32, %arg0 : i32, i32
  }
}

module attributes {stable_mosaic.version = 11 : i64} {
  func.func @_conv2_flatten_linear_kernel(%arg0: i32, %arg1: memref<4x2x125x125xf32, #tpu.memory_space<vmem>>, %arg2: memref<4x2x125xf32, #tpu.memory_space<vmem>>, %arg3: memref<2x1xf32, #tpu.memory_space<vmem>>, %arg4: memref<2x125xf32, #tpu.memory_space<vmem>>, %arg5: memref<1x1xf32, #tpu.memory_space<vmem>>, %arg6: memref<1x1x2xf32, #tpu.memory_space<vmem>>) attributes {dimension_semantics = [#tpu.dimension_semantics<parallel>], iteration_bounds = array<i64: 1>, scalar_prefetch = 0 : i64, scratch_operands = 0 : i64, tpu.core_type = #tpu.core_type<tc>, window_params = [{transform_indices = @transform_0, window_bounds = array<i64: 4, 2, 125, 125>}, {pipeline_mode = #tpu.pipeline_mode<synchronous>, transform_indices = @transform_1, window_bounds = array<i64: 4, 2, 125>}, {pipeline_mode = #tpu.pipeline_mode<synchronous>, transform_indices = @transform_2, window_bounds = array<i64: 2, 1>}, {pipeline_mode = #tpu.pipeline_mode<synchronous>, transform_indices = @transform_3, window_bounds = array<i64: 2, 125>}, {pipeline_mode = #tpu.pipeline_mode<synchronous>, transform_indices = @transform_4, window_bounds = array<i64: 1, 1>}, {transform_indices = @transform_5, window_bounds = array<i64: 1, 1, 2>}]} {
    %0 = tpu.iota {dimensions = array<i32: 2>} : vector<1x1x2xi32>
    %cst = arith.constant 0.000000e+00 : f32
    %1 = vector.broadcast %cst : f32 to vector<1x1x2xf32>
    %c0 = arith.constant 0 : index
    %c0_0 = arith.constant 0 : index
    %2 = vector.load %arg3[%c0, %c0_0] : memref<2x1xf32, #tpu.memory_space<vmem>>, vector<2x1xf32>
    %c0_1 = arith.constant 0 : index
    %c0_2 = arith.constant 0 : index
    %3 = vector.load %arg4[%c0_1, %c0_2] : memref<2x125xf32, #tpu.memory_space<vmem>>, vector<2x125xf32>
    %c0_3 = arith.constant 0 : index
    %c0_4 = arith.constant 0 : index
    %c0_5 = arith.constant 0 : index
    %4 = vector.load %arg2[%c0_3, %c0_4, %c0_5] : memref<4x2x125xf32, #tpu.memory_space<vmem>>, vector<1x2x125xf32>
    %5 = vector.shape_cast %4 : vector<1x2x125xf32> to vector<2x125xf32>
    %c0_6 = arith.constant 0 : index
    %c0_7 = arith.constant 0 : index
    %c0_8 = arith.constant 0 : index
    %c0_9 = arith.constant 0 : index
    %6 = vector.load %arg1[%c0_6, %c0_7, %c0_8, %c0_9] : memref<4x2x125x125xf32, #tpu.memory_space<vmem>>, vector<1x1x125x125xf32>
    %7 = vector.shape_cast %6 : vector<1x1x125x125xf32> to vector<125x125xf32>
    %cst_10 = arith.constant dense<0.000000e+00> : vector<2x125xf32>
    %8 = tpu.matmul %5, %7, %cst_10 {dimension_numbers = #tpu.dot_dimension_numbers<[1], [0], [0], [1], [0, 0, 1, 1], [], []>} : vector<2x125xf32>, vector<125x125xf32>, vector<2x125xf32> -> vector<2x125xf32>
    %c1 = arith.constant 1 : index
    %c0_11 = arith.constant 0 : index
    %c0_12 = arith.constant 0 : index
    %9 = vector.load %arg2[%c1, %c0_11, %c0_12] : memref<4x2x125xf32, #tpu.memory_space<vmem>>, vector<1x2x125xf32>
    %10 = vector.shape_cast %9 : vector<1x2x125xf32> to vector<2x125xf32>
    %c1_13 = arith.constant 1 : index
    %c0_14 = arith.constant 0 : index
    %c0_15 = arith.constant 0 : index
    %c0_16 = arith.constant 0 : index
    %11 = vector.load %arg1[%c1_13, %c0_14, %c0_15, %c0_16] : memref<4x2x125x125xf32, #tpu.memory_space<vmem>>, vector<1x1x125x125xf32>
    %12 = vector.shape_cast %11 : vector<1x1x125x125xf32> to vector<125x125xf32>
    %cst_17 = arith.constant dense<0.000000e+00> : vector<2x125xf32>
    %13 = tpu.matmul %10, %12, %cst_17 {dimension_numbers = #tpu.dot_dimension_numbers<[1], [0], [0], [1], [0, 0, 1, 1], [], []>} : vector<2x125xf32>, vector<125x125xf32>, vector<2x125xf32> -> vector<2x125xf32>
    %14 = arith.addf %8, %13 : vector<2x125xf32>
    %c2 = arith.constant 2 : index
    %c0_18 = arith.constant 0 : index
    %c0_19 = arith.constant 0 : index
    %15 = vector.load %arg2[%c2, %c0_18, %c0_19] : memref<4x2x125xf32, #tpu.memory_space<vmem>>, vector<1x2x125xf32>
    %16 = vector.shape_cast %15 : vector<1x2x125xf32> to vector<2x125xf32>
    %c2_20 = arith.constant 2 : index
    %c0_21 = arith.constant 0 : index
    %c0_22 = arith.constant 0 : index
    %c0_23 = arith.constant 0 : index
    %17 = vector.load %arg1[%c2_20, %c0_21, %c0_22, %c0_23] : memref<4x2x125x125xf32, #tpu.memory_space<vmem>>, vector<1x1x125x125xf32>
    %18 = vector.shape_cast %17 : vector<1x1x125x125xf32> to vector<125x125xf32>
    %cst_24 = arith.constant dense<0.000000e+00> : vector<2x125xf32>
    %19 = tpu.matmul %16, %18, %cst_24 {dimension_numbers = #tpu.dot_dimension_numbers<[1], [0], [0], [1], [0, 0, 1, 1], [], []>} : vector<2x125xf32>, vector<125x125xf32>, vector<2x125xf32> -> vector<2x125xf32>
    %20 = arith.addf %14, %19 : vector<2x125xf32>
    %c3 = arith.constant 3 : index
    %c0_25 = arith.constant 0 : index
    %c0_26 = arith.constant 0 : index
    %21 = vector.load %arg2[%c3, %c0_25, %c0_26] : memref<4x2x125xf32, #tpu.memory_space<vmem>>, vector<1x2x125xf32>
    %22 = vector.shape_cast %21 : vector<1x2x125xf32> to vector<2x125xf32>
    %c3_27 = arith.constant 3 : index
    %c0_28 = arith.constant 0 : index
    %c0_29 = arith.constant 0 : index
    %c0_30 = arith.constant 0 : index
    %23 = vector.load %arg1[%c3_27, %c0_28, %c0_29, %c0_30] : memref<4x2x125x125xf32, #tpu.memory_space<vmem>>, vector<1x1x125x125xf32>
    %24 = vector.shape_cast %23 : vector<1x1x125x125xf32> to vector<125x125xf32>
    %cst_31 = arith.constant dense<0.000000e+00> : vector<2x125xf32>
    %25 = tpu.matmul %22, %24, %cst_31 {dimension_numbers = #tpu.dot_dimension_numbers<[1], [0], [0], [1], [0, 0, 1, 1], [], []>} : vector<2x125xf32>, vector<125x125xf32>, vector<2x125xf32> -> vector<2x125xf32>
    %26 = arith.addf %20, %25 : vector<2x125xf32>
    %27 = vector.broadcast %2 : vector<2x1xf32> to vector<2x125xf32>
    %28 = arith.addf %26, %27 : vector<2x125xf32>
    %cst_32 = arith.constant 0.000000e+00 : f32
    %29 = vector.broadcast %cst_32 : f32 to vector<2x125xf32>
    %30 = arith.maximumf %28, %29 : vector<2x125xf32>
    %31 = arith.mulf %30, %3 : vector<2x125xf32>
    %cst_33 = arith.constant dense<0.000000e+00> : vector<2xf32>
    %32 = vector.multi_reduction <add>, %31, %cst_33 [1] : vector<2x125xf32> to vector<2xf32>
    %33 = vector.shape_cast %32 : vector<2xf32> to vector<2x1xf32>
    %cst_34 = arith.constant dense<0.000000e+00> : vector<1xf32>
    %34 = vector.multi_reduction <add>, %33, %cst_34 [0] : vector<2x1xf32> to vector<1xf32>
    %35 = vector.shape_cast %34 : vector<1xf32> to vector<1x1xf32>
    %36 = vector.shape_cast %35 : vector<1x1xf32> to vector<1x1x1xf32>
    %c0_i32 = arith.constant 0 : i32
    %37 = vector.broadcast %c0_i32 : i32 to vector<1x1x2xi32>
    %38 = arith.cmpi eq, %0, %37 : vector<1x1x2xi32>
    %cst_35 = arith.constant 0.000000e+00 : f32
    %39 = vector.shape_cast %36 : vector<1x1x1xf32> to vector<1x1x1xf32>
    %40 = vector.broadcast %39 : vector<1x1x1xf32> to vector<1x1x2xf32>
    %41 = vector.broadcast %cst_35 : f32 to vector<1x1x2xf32>
    %42 = arith.select %38, %40, %41 : vector<1x1x2xi1>, vector<1x1x2xf32>
    %43 = arith.addf %1, %42 : vector<1x1x2xf32>
    %c0_36 = arith.constant 0 : index
    %c0_37 = arith.constant 0 : index
    %c0_38 = arith.constant 0 : index
    %44 = vector.load %arg2[%c0_36, %c0_37, %c0_38] : memref<4x2x125xf32, #tpu.memory_space<vmem>>, vector<1x2x125xf32>
    %45 = vector.shape_cast %44 : vector<1x2x125xf32> to vector<2x125xf32>
    %c0_39 = arith.constant 0 : index
    %c1_40 = arith.constant 1 : index
    %c0_41 = arith.constant 0 : index
    %c0_42 = arith.constant 0 : index
    %46 = vector.load %arg1[%c0_39, %c1_40, %c0_41, %c0_42] : memref<4x2x125x125xf32, #tpu.memory_space<vmem>>, vector<1x1x125x125xf32>
    %47 = vector.shape_cast %46 : vector<1x1x125x125xf32> to vector<125x125xf32>
    %cst_43 = arith.constant dense<0.000000e+00> : vector<2x125xf32>
    %48 = tpu.matmul %45, %47, %cst_43 {dimension_numbers = #tpu.dot_dimension_numbers<[1], [0], [0], [1], [0, 0, 1, 1], [], []>} : vector<2x125xf32>, vector<125x125xf32>, vector<2x125xf32> -> vector<2x125xf32>
    %c1_44 = arith.constant 1 : index
    %c0_45 = arith.constant 0 : index
    %c0_46 = arith.constant 0 : index
    %49 = vector.load %arg2[%c1_44, %c0_45, %c0_46] : memref<4x2x125xf32, #tpu.memory_space<vmem>>, vector<1x2x125xf32>
    %50 = vector.shape_cast %49 : vector<1x2x125xf32> to vector<2x125xf32>
    %c1_47 = arith.constant 1 : index
    %c1_48 = arith.constant 1 : index
    %c0_49 = arith.constant 0 : index
    %c0_50 = arith.constant 0 : index
    %51 = vector.load %arg1[%c1_47, %c1_48, %c0_49, %c0_50] : memref<4x2x125x125xf32, #tpu.memory_space<vmem>>, vector<1x1x125x125xf32>
    %52 = vector.shape_cast %51 : vector<1x1x125x125xf32> to vector<125x125xf32>
    %cst_51 = arith.constant dense<0.000000e+00> : vector<2x125xf32>
    %53 = tpu.matmul %50, %52, %cst_51 {dimension_numbers = #tpu.dot_dimension_numbers<[1], [0], [0], [1], [0, 0, 1, 1], [], []>} : vector<2x125xf32>, vector<125x125xf32>, vector<2x125xf32> -> vector<2x125xf32>
    %54 = arith.addf %48, %53 : vector<2x125xf32>
    %c2_52 = arith.constant 2 : index
    %c0_53 = arith.constant 0 : index
    %c0_54 = arith.constant 0 : index
    %55 = vector.load %arg2[%c2_52, %c0_53, %c0_54] : memref<4x2x125xf32, #tpu.memory_space<vmem>>, vector<1x2x125xf32>
    %56 = vector.shape_cast %55 : vector<1x2x125xf32> to vector<2x125xf32>
    %c2_55 = arith.constant 2 : index
    %c1_56 = arith.constant 1 : index
    %c0_57 = arith.constant 0 : index
    %c0_58 = arith.constant 0 : index
    %57 = vector.load %arg1[%c2_55, %c1_56, %c0_57, %c0_58] : memref<4x2x125x125xf32, #tpu.memory_space<vmem>>, vector<1x1x125x125xf32>
    %58 = vector.shape_cast %57 : vector<1x1x125x125xf32> to vector<125x125xf32>
    %cst_59 = arith.constant dense<0.000000e+00> : vector<2x125xf32>
    %59 = tpu.matmul %56, %58, %cst_59 {dimension_numbers = #tpu.dot_dimension_numbers<[1], [0], [0], [1], [0, 0, 1, 1], [], []>} : vector<2x125xf32>, vector<125x125xf32>, vector<2x125xf32> -> vector<2x125xf32>
    %60 = arith.addf %54, %59 : vector<2x125xf32>
    %c3_60 = arith.constant 3 : index
    %c0_61 = arith.constant 0 : index
    %c0_62 = arith.constant 0 : index
    %61 = vector.load %arg2[%c3_60, %c0_61, %c0_62] : memref<4x2x125xf32, #tpu.memory_space<vmem>>, vector<1x2x125xf32>
    %62 = vector.shape_cast %61 : vector<1x2x125xf32> to vector<2x125xf32>
    %c3_63 = arith.constant 3 : index
    %c1_64 = arith.constant 1 : index
    %c0_65 = arith.constant 0 : index
    %c0_66 = arith.constant 0 : index
    %63 = vector.load %arg1[%c3_63, %c1_64, %c0_65, %c0_66] : memref<4x2x125x125xf32, #tpu.memory_space<vmem>>, vector<1x1x125x125xf32>
    %64 = vector.shape_cast %63 : vector<1x1x125x125xf32> to vector<125x125xf32>
    %cst_67 = arith.constant dense<0.000000e+00> : vector<2x125xf32>
    %65 = tpu.matmul %62, %64, %cst_67 {dimension_numbers = #tpu.dot_dimension_numbers<[1], [0], [0], [1], [0, 0, 1, 1], [], []>} : vector<2x125xf32>, vector<125x125xf32>, vector<2x125xf32> -> vector<2x125xf32>
    %66 = arith.addf %60, %65 : vector<2x125xf32>
    %67 = vector.broadcast %2 : vector<2x1xf32> to vector<2x125xf32>
    %68 = arith.addf %66, %67 : vector<2x125xf32>
    %cst_68 = arith.constant 0.000000e+00 : f32
    %69 = vector.broadcast %cst_68 : f32 to vector<2x125xf32>
    %70 = arith.maximumf %68, %69 : vector<2x125xf32>
    %71 = arith.mulf %70, %3 : vector<2x125xf32>
    %cst_69 = arith.constant dense<0.000000e+00> : vector<2xf32>
    %72 = vector.multi_reduction <add>, %71, %cst_69 [1] : vector<2x125xf32> to vector<2xf32>
    %73 = vector.shape_cast %72 : vector<2xf32> to vector<2x1xf32>
    %cst_70 = arith.constant dense<0.000000e+00> : vector<1xf32>
    %74 = vector.multi_reduction <add>, %73, %cst_70 [0] : vector<2x1xf32> to vector<1xf32>
    %75 = vector.shape_cast %74 : vector<1xf32> to vector<1x1xf32>
    %76 = vector.shape_cast %75 : vector<1x1xf32> to vector<1x1x1xf32>
    %c1_i32 = arith.constant 1 : i32
    %77 = vector.broadcast %c1_i32 : i32 to vector<1x1x2xi32>
    %78 = arith.cmpi eq, %0, %77 : vector<1x1x2xi32>
    %cst_71 = arith.constant 0.000000e+00 : f32
    %79 = vector.shape_cast %76 : vector<1x1x1xf32> to vector<1x1x1xf32>
    %80 = vector.broadcast %79 : vector<1x1x1xf32> to vector<1x1x2xf32>
    %81 = vector.broadcast %cst_71 : f32 to vector<1x1x2xf32>
    %82 = arith.select %78, %80, %81 : vector<1x1x2xi1>, vector<1x1x2xf32>
    %83 = arith.addf %43, %82 : vector<1x1x2xf32>
    %c0_72 = arith.constant 0 : index
    %c0_73 = arith.constant 0 : index
    %84 = vector.load %arg5[%c0_72, %c0_73] : memref<1x1xf32, #tpu.memory_space<vmem>>, vector<1x1xf32>
    %85 = vector.shape_cast %84 : vector<1x1xf32> to vector<1x1x1xf32>
    %86 = vector.broadcast %85 : vector<1x1x1xf32> to vector<1x1x2xf32>
    %87 = arith.addf %83, %86 : vector<1x1x2xf32>
    %c0_74 = arith.constant 0 : index
    %c0_75 = arith.constant 0 : index
    %c0_76 = arith.constant 0 : index
    %88 = vector.load %arg6[%c0_74, %c0_75, %c0_76] : memref<1x1x2xf32, #tpu.memory_space<vmem>>, vector<1x1x2xf32>
    tpu.vector_store %arg6[%c0_74, %c0_75, %c0_76], %87 {strides = array<i32>} : memref<1x1x2xf32, #tpu.memory_space<vmem>>, vector<1x1x2xf32>,
    return
  }
  func.func @transform_0(%arg0: i32) -> (i32, i32, i32, i32) {
    %c0_i32 = arith.constant 0 : i32
    %c0_i32_0 = arith.constant 0 : i32
    %c0_i32_1 = arith.constant 0 : i32
    %c0_i32_2 = arith.constant 0 : i32
    return %c0_i32, %arg0, %c0_i32_0, %c0_i32_1 : i32, i32, i32, i32
  }
  func.func @transform_1(%arg0: i32) -> (i32, i32, i32) {
    %c0_i32 = arith.constant 0 : i32
    %c0_i32_0 = arith.constant 0 : i32
    %c0_i32_1 = arith.constant 0 : i32
    %c0_i32_2 = arith.constant 0 : i32
    return %c0_i32, %c0_i32_0, %c0_i32_1 : i32, i32, i32
  }
  func.func @transform_2(%arg0: i32) -> (i32, i32) {
    %c0_i32 = arith.constant 0 : i32
    %c0_i32_0 = arith.constant 0 : i32
    %c0_i32_1 = arith.constant 0 : i32
    return %c0_i32, %c0_i32_0 : i32, i32
  }
  func.func @transform_3(%arg0: i32) -> (i32, i32) {
    %c0_i32 = arith.constant 0 : i32
    %c0_i32_0 = arith.constant 0 : i32
    %c0_i32_1 = arith.constant 0 : i32
    return %c0_i32, %c0_i32_0 : i32, i32
  }
  func.func @transform_4(%arg0: i32) -> (i32, i32) {
    %c0_i32 = arith.constant 0 : i32
    %c0_i32_0 = arith.constant 0 : i32
    %c0_i32_1 = arith.constant 0 : i32
    return %c0_i32, %c0_i32_0 : i32, i32
  }
  func.func @transform_5(%arg0: i32) -> (i32, i32, i32) {
    %c0_i32 = arith.constant 0 : i32
    %c0_i32_0 = arith.constant 0 : i32
    %c0_i32_1 = arith.constant 0 : i32
    return %arg0, %c0_i32, %c0_i32_0 : i32, i32, i32
  }
}

</mosaic_0001>

<llo_original>
// kernel: critic_forward.2
$region0: #{critic_forward.2}
  #allocation0 [shape = 'u32[]', space=smem, size = 0x4, offset = 0x4, fixed_abs, tag = 'smem constant byte address 0x4 - core index']
  #allocation1 [shape = 'u32[144,128]{1,0:T(1,128)}', space=vmem, size = 0x12000, scoped, tag = 'internal scratch']
  %s0 = inlined_call_operand.vmem [shape: f32[8,31250], index: 0, kind: input, shape index: {}]
  %s1 = inlined_call_operand.vmem [shape: f32[4,8], index: 1, kind: input, shape index: {}]
  %s2 = inlined_call_operand.vmem [shape: f32[4,1], index: 2, kind: input, shape index: {}]
  %s3 = inlined_call_operand.vmem [shape: f32[4,31250], index: 3, kind: output, shape index: {}]
  %s4 = sld [smem:[#allocation0]]
  $region107: #{critic_forward.2} parent=0
    _
  %s6 = ssub.s32 1, %s4
  %s7 = scalar_select 0, %s6, %s4
  $region1: #{critic_forward.2} parent=0
    #allocation2 [shape = 'u8[253952]{0}', space=vmem, size = 0x3e000, scoped, tag = 'output window, operand 0']
    loop: start=0, step=1, limit=6
    $region2: #{critic_forward.2} parent=1 // loop_pre_header
      _
    $region3: #{critic_forward.2} parent=1 // loop_header
      %s9 = sphi 0, %s13
      %p10 = scmp.ge.s32.totalorder %s9, 6
      %s19 = sphi 0, %s21
      %s22 = sphi 0, %s19
      %s23 = sphi 0, %s22
      %s39 = sphi 0, %s23
      %s43 = sphi 0, %s43
      %s45 = sphi 0, %s43
      %s46 = sphi 0, %s45
      %s60 = sphi 0, %s46
      %s64 = sphi 0, %s64
      %s66 = sphi 0, %s64
      %s67 = sphi 0, %s66
      %s81 = sphi 0, %s67
      %s87 = sphi 0, %s89
      %s90 = sphi 0, %s87
      %s91 = sphi 0, %s90
      %s107 = sphi 0, %s91
    $region4: #{critic_forward.2} parent=1 // loop_header_branch
      %12 = sbr.rel (%p10) target = $region8
    $region5: #{critic_forward.2} parent=1 // loop_body
      %s14 = ssub.s32 %s9, 1
      %s15 = ssub.s32 %s9, 2
      %s16 = sadd.s32 %s9, 1
      %s17 = ssub.s32 %s9, %s16
      %p18 = scmp.eq.s32.totalorder %s17, 0
      %s20 = sadd.s32 %s19, 1
      %s21 = scalar_select %p18, %s19, %s20
      %p24 = pneg %p18
      %p25 = scmp.eq.s32.totalorder %s9, 3
      %p26 = por %p24, %p25
      %p27 = scmp.ne.s32.totalorder %s19, %s22
      %p28 = scmp.eq.s32.totalorder %s9, 0
      %p29 = por %p27, %p28
      %p30 = scmp.ne.s32.totalorder %s19, %s22
      %p31 = scmp.eq.s32.totalorder %s14, 3
      %p32 = por %p30, %p31
      %p33 = scmp.ne.s32.totalorder %s22, %s23
      %p34 = scmp.eq.s32.totalorder %s14, 0
      %p35 = por %p33, %p34
      %p36 = scmp.ne.s32.totalorder %s22, %s23
      %p37 = scmp.eq.s32.totalorder %s15, 3
      %p38 = por %p36, %p37
      %p40 = scmp.ne.s32.totalorder %s23, %s39
      %p41 = scmp.eq.s32.totalorder %s15, 0
      %p42 = por %p40, %p41
      %s44 = sadd.s32 %s43, 1
      %p47 = scmp.eq.s32.totalorder %s9, 3
      %p48 = scmp.ne.s32.totalorder %s43, %s45
      %p49 = scmp.eq.s32.totalorder %s9, 0
      %p50 = por %p48, %p49
      %p51 = scmp.ne.s32.totalorder %s43, %s45
      %p52 = scmp.eq.s32.totalorder %s14, 3
      %p53 = por %p51, %p52
      %p54 = scmp.ne.s32.totalorder %s45, %s46
      %p55 = scmp.eq.s32.totalorder %s14, 0
      %p56 = por %p54, %p55
      %p57 = scmp.ne.s32.totalorder %s45, %s46
      %p58 = scmp.eq.s32.totalorder %s15, 3
      %p59 = por %p57, %p58
      %p61 = scmp.ne.s32.totalorder %s46, %s60
      %p62 = scmp.eq.s32.totalorder %s15, 0
      %p63 = por %p61, %p62
      %s65 = sadd.s32 %s64, 1
      %p68 = scmp.eq.s32.totalorder %s9, 3
      %p69 = scmp.ne.s32.totalorder %s64, %s66
      %p70 = scmp.eq.s32.totalorder %s9, 0
      %p71 = por %p69, %p70
      %p72 = scmp.ne.s32.totalorder %s64, %s66
      %p73 = scmp.eq.s32.totalorder %s14, 3
      %p74 = por %p72, %p73
      %p75 = scmp.ne.s32.totalorder %s66, %s67
      %p76 = scmp.eq.s32.totalorder %s14, 0
      %p77 = por %p75, %p76
      %p78 = scmp.ne.s32.totalorder %s66, %s67
      %p79 = scmp.eq.s32.totalorder %s15, 3
      %p80 = por %p78, %p79
      %p82 = scmp.ne.s32.totalorder %s67, %s81
      %p83 = scmp.eq.s32.totalorder %s15, 0
      %p84 = por %p82, %p83
      %s85 = ssub.s32 %s9, %s16
      %p86 = scmp.eq.s32.totalorder %s85, 0
      %s88 = sadd.s32 %s87, 1
      %s89 = scalar_select %p86, %s87, %s88
      %p92 = pneg %p86
      %p93 = scmp.eq.s32.totalorder %s9, 3
      %p94 = por %p92, %p93
      %p95 = scmp.ne.s32.totalorder %s87, %s90
      %p96 = scmp.eq.s32.totalorder %s9, 0
      %p97 = por %p95, %p96
      %p98 = scmp.ne.s32.totalorder %s87, %s90
      %p99 = scmp.eq.s32.totalorder %s14, 3
      %p100 = por %p98, %p99
      %p101 = scmp.ne.s32.totalorder %s90, %s91
      %p102 = scmp.eq.s32.totalorder %s14, 0
      %p103 = por %p101, %p102
      %p104 = scmp.ne.s32.totalorder %s90, %s91
      %p105 = scmp.eq.s32.totalorder %s15, 3
      %p106 = por %p104, %p105
      %p108 = scmp.ne.s32.totalorder %s91, %s107
      %p109 = scmp.eq.s32.totalorder %s15, 0
      %p110 = por %p108, %p109
      %p111 = scmp.le.s32.totalorder 1, %s9
      %p112 = scmp.lt.s32.totalorder %s9, 5
      %p113 = pnand %p111, %p112
      %p114 = pneg %p113
      // Predicated region
      $region9: #{critic_forward.2} parent=5 // pred_check
        _
      $region10: #{critic_forward.2} parent=5 // pred_check_branch
        %116 = sbr.rel (%p113) target = $region12
      $region11: #{critic_forward.2} parent=5 // pred_region
        %s117 = ssub.s32 %s9, 1
        // Predicated region
        $region13: #{critic_forward.2} parent=11 // pred_check
          %p118 = pneg %p56
        $region14: #{critic_forward.2} parent=11 // pred_check_branch
          %120 = sbr.rel (%p118) target = $region16
        $region15: #{critic_forward.2} parent=11 // pred_region
          _
        $region16: #{critic_forward.2} parent=11 // pred_fallthru
          _
        // Predicated region
        $region17: #{critic_forward.2} parent=11 // pred_check
          %p121 = pneg %p77
        $region18: #{critic_forward.2} parent=11 // pred_check_branch
          %123 = sbr.rel (%p121) target = $region20
        $region19: #{critic_forward.2} parent=11 // pred_region
          _
        $region20: #{critic_forward.2} parent=11 // pred_fallthru
          _
      $region12: #{critic_forward.2} parent=5 // pred_fallthru
        _
      %p124 = scmp.lt.s32.totalorder %s9, 4
      // Predicated region
      $region21: #{critic_forward.2} parent=5 // pred_check
        %p125 = pneg %p124
      $region22: #{critic_forward.2} parent=5 // pred_check_branch
        %127 = sbr.rel (%p125) target = $region24
      $region23: #{critic_forward.2} parent=5 // pred_region
        // Predicated region
        $region25: #{critic_forward.2} parent=23 // pred_check
          %p128 = pneg %p29
        $region26: #{critic_forward.2} parent=23 // pred_check_branch
          %130 = sbr.rel (%p128) target = $region28
        $region27: #{critic_forward.2} parent=23 // pred_region
          %s131 = smul.u32 62, %s9
          %s132 = ssub.s32 245, %s131
          %p133 = scmp.lt.s32.totalorder %s132, 62
          %s134 = scalar_select %p133, %s132, 62
          %s135 = smul.u32 128, %s134
          %p136 = scmp.lt.s32.totalorder %s131, 244
          %s137 = scalar_select %p136, %s131, 244
          %s138 = smul.addr %s137, 8
          %s139 = scalar_lea.vmem %s0, %s138
          %s140 = smul.u32 62, %s9
          %s141 = ssub.s32 245, %s140
          %p142 = scmp.lt.s32.totalorder %s141, 62
          %s143 = scalar_select %p142, %s141, 62
          %s144 = smul.u32 128, %s143
        $region28: #{critic_forward.2} parent=23 // pred_fallthru
          _
      $region24: #{critic_forward.2} parent=5 // pred_fallthru
        _
      %p145 = scmp.le.s32.totalorder 1, %s9
      %p146 = scmp.lt.s32.totalorder %s9, 5
      %p147 = pnand %p145, %p146
      %p148 = pneg %p147
      // Predicated region
      $region29: #{critic_forward.2} parent=5 // pred_check
        _
      $region30: #{critic_forward.2} parent=5 // pred_check_branch
        %150 = sbr.rel (%p147) target = $region32
      $region31: #{critic_forward.2} parent=5 // pred_region
        %s151 = ssub.s32 %s9, 1
        %s152 = smul.u32 62, %s14
        %s153 = ssub.s32 245, %s152
        %p154 = scmp.lt.s32.totalorder %s153, 62
        %s155 = scalar_select %p154, %s153, 62
        %s156 = smul.u32 128, %s155
        %p157 = scmp.lt.s32.totalorder %s152, 244
        %s158 = scalar_select %p157, %s152, 244
        %s159 = smul.addr %s158, 8
        %s160 = scalar_lea.vmem %s0, %s159
        %p161 = pneg %p35
        %p162 = pneg %p32
        %p163 = pneg %p56
        %p164 = pneg %p53
        %p165 = pneg %p77
        %p166 = pneg %p74
        %p167 = pneg %p103
        %p168 = pneg %p100
        %s169 = sand.u32 %s90, 1
        %s170 = sand.u32 %s90, 1
        %s171 = smul.addr %s170, 248
        %s172 = scalar_lea.vmem [#allocation2], %s171
        %s173 = smul.u32 62, %s14
        %s174 = ssub.s32 245, %s173
        %p175 = scmp.lt.s32.totalorder %s174, 62
        %s176 = scalar_select %p175, %s174, 62
        %s177 = smul.u32 128, %s176
        %p178 = scmp.lt.s32.totalorder %s173, 244
        %s179 = scalar_select %p178, %s173, 244
        %s180 = smul.addr %s179, 8
        %s181 = scalar_lea.vmem %s0, %s180
        %s182 = smul.u32 62, %s14
        %s183 = ssub.s32 245, %s182
        %p184 = scmp.lt.s32.totalorder %s183, 62
        %s185 = scalar_select %p184, %s183, 62
        %s186 = smul.u32 128, %s185
        %s187 = smul.u32 62, %s14
        %s188 = ssub.s32 245, %s187
        %p189 = scmp.lt.s32.totalorder %s188, 62
        %s190 = scalar_select %p189, %s188, 62
        %s191 = smul.u32 64, %s190
        %v192 = vld [vmem:[%s1] sm:$0xf]
        %v193 = vld [vmem:[%s181] sm:$0xff]
        %v194 = vld [vmem:[%s181 + $0x8] sm:$0xff]
        %v195 = vld [vmem:[%s181 + $0x10] sm:$0xff]
        %v196 = vld [vmem:[%s181 + $0x18] sm:$0xff]
        %v197 = vld [vmem:[%s181 + $0x20] sm:$0xff]
        %v198 = vld [vmem:[%s181 + $0x28] sm:$0xff]
        %v199 = vld [vmem:[%s181 + $0x30] sm:$0xff]
        %v200 = vld [vmem:[%s181 + $0x38] sm:$0xff]
        %v201 = vld [vmem:[%s181 + $0x40] sm:$0xff]
        %v202 = vld [vmem:[%s181 + $0x48] sm:$0xff]
        %v203 = vld [vmem:[%s181 + $0x50] sm:$0xff]
        %v204 = vld [vmem:[%s181 + $0x58] sm:$0xff]
        %v205 = vld [vmem:[%s181 + $0x60] sm:$0xff]
        %v206 = vld [vmem:[%s181 + $0x68] sm:$0xff]
        %v207 = vld [vmem:[%s181 + $0x70] sm:$0xff]
        %v208 = vld [vmem:[%s181 + $0x78] sm:$0xff]
        %v209 = vld [vmem:[%s181 + $0x80] sm:$0xff]
        %v210 = vld [vmem:[%s181 + $0x88] sm:$0xff]
        %v211 = vld [vmem:[%s181 + $0x90] sm:$0xff]
        %v212 = vld [vmem:[%s181 + $0x98] sm:$0xff]
        %v213 = vld [vmem:[%s181 + $0xa0] sm:$0xff]
        %v214 = vld [vmem:[%s181 + $0xa8] sm:$0xff]
        %v215 = vld [vmem:[%s181 + $0xb0] sm:$0xff]
        %v216 = vld [vmem:[%s181 + $0xb8] sm:$0xff]
        %v217 = vld [vmem:[%s181 + $0xc0] sm:$0xff]
        %v218 = vld [vmem:[%s181 + $0xc8] sm:$0xff]
        %v219 = vld [vmem:[%s181 + $0xd0] sm:$0xff]
        %v220 = vld [vmem:[%s181 + $0xd8] sm:$0xff]
        %v221 = vld [vmem:[%s181 + $0xe0] sm:$0xff]
        %v222 = vld [vmem:[%s181 + $0xe8] sm:$0xff]
        %v223 = vld [vmem:[%s181 + $0xf0] sm:$0xff]
        %v224 = vld [vmem:[%s181 + $0xf8] sm:$0xff]
        %v225 = vld [vmem:[%s181 + $0x100] sm:$0xff]
        %v226 = vld [vmem:[%s181 + $0x108] sm:$0xff]
        %v227 = vld [vmem:[%s181 + $0x110] sm:$0xff]
        %v228 = vld [vmem:[%s181 + $0x118] sm:$0xff]
        %v229 = vld [vmem:[%s181 + $0x120] sm:$0xff]
        %v230 = vld [vmem:[%s181 + $0x128] sm:$0xff]
        %v231 = vld [vmem:[%s181 + $0x130] sm:$0xff]
        %v232 = vld [vmem:[%s181 + $0x138] sm:$0xff]
        %v233 = vld [vmem:[%s181 + $0x140] sm:$0xff]
        %v234 = vld [vmem:[%s181 + $0x148] sm:$0xff]
        %v235 = vld [vmem:[%s181 + $0x150] sm:$0xff]
        %v236 = vld [vmem:[%s181 + $0x158] sm:$0xff]
        %v237 = vld [vmem:[%s181 + $0x160] sm:$0xff]
        %v238 = vld [vmem:[%s181 + $0x168] sm:$0xff]
        %v239 = vld [vmem:[%s181 + $0x170] sm:$0xff]
        %v240 = vld [vmem:[%s181 + $0x178] sm:$0xff]
        %v241 = vld [vmem:[%s181 + $0x180] sm:$0xff]
        %v242 = vld [vmem:[%s181 + $0x188] sm:$0xff]
        %v243 = vld [vmem:[%s181 + $0x190] sm:$0xff]
        %v244 = vld [vmem:[%s181 + $0x198] sm:$0xff]
        %v245 = vld [vmem:[%s181 + $0x1a0] sm:$0xff]
        %v246 = vld [vmem:[%s181 + $0x1a8] sm:$0xff]
        %v247 = vld [vmem:[%s181 + $0x1b0] sm:$0xff]
        %v248 = vld [vmem:[%s181 + $0x1b8] sm:$0xff]
        %v249 = vld [vmem:[%s181 + $0x1c0] sm:$0xff]
        %v250 = vld [vmem:[%s181 + $0x1c8] sm:$0xff]
        %v251 = vld [vmem:[%s181 + $0x1d0] sm:$0xff]
        %v252 = vld [vmem:[%s181 + $0x1d8] sm:$0xff]
        %v253 = vld [vmem:[%s181 + $0x1e0] sm:$0xff]
        %v254 = vld [vmem:[%s181 + $0x1e8] sm:$0xff]
        %v255 = vld [vmem:[%s2] sm:$0xf]
        %257 = vset.pattern.permute.xlu0 0
        %258 = vperm.xlu0 %257, %v255
        %v259 = vpop.permute.xlu0 %258
        %vm261 = vcmask 64512
        %v263 = vsel %vm261, %v192, 0
        %265 = vmatprep.subr.mxu0 %v194
        %266 = vmatpush1.msra.mxu0 %v193
        %267 = vmatprep.subr.mxu0 0.0
        %268 = vmatpush1.msra.mxu0 0.0
        %269 = vmatprep.subr.mxu0 0.0
        %270 = vmatpush1.msra.mxu0 0.0
        %271 = vmatprep.subr.mxu0 0.0
        %272 = vmatpush1.msra.mxu0 0.0
        %273 = vmatprep.subr.mxu0 0.0
        %274 = vmatpush1.msra.mxu0 0.0
        %275 = vmatprep.subr.mxu0 0.0
        %276 = vmatpush1.msra.mxu0 0.0
        %277 = vmatprep.subr.mxu0 0.0
        %278 = vmatpush1.msra.mxu0 0.0
        %279 = vmatprep.subr.mxu0 0.0
        %280 = vmatpush1.msra.mxu0 0.0
        %281 = vmatprep.subr.mxu0 0.0
        %282 = vmatpush1.msra.mxu0 0.0
        %283 = vmatprep.subr.mxu0 0.0
        %284 = vmatpush1.msra.mxu0 0.0
        %285 = vmatprep.subr.mxu0 0.0
        %286 = vmatpush1.msra.mxu0 0.0
        %287 = vmatprep.subr.mxu0 0.0
        %288 = vmatpush1.msra.mxu0 0.0
        %289 = vmatprep.subr.mxu0 0.0
        %290 = vmatpush1.msra.mxu0 0.0
        %291 = vmatprep.subr.mxu0 0.0
        %292 = vmatpush1.msra.mxu0 0.0
        %293 = vmatprep.subr.mxu0 0.0
        %294 = vmatpush1.msra.mxu0 0.0
        %295 = vmatprep.subr.mxu0 0.0
        %296 = vmatpush1.msra.mxu0 0.0
        %297 = vmatprep.subr.mxu0 0.0
        %298 = vmatpush1.msra.mxu0 0.0
        %299 = vmatprep.subr.mxu0 0.0
        %300 = vmatpush1.msra.mxu0 0.0
        %301 = vmatprep.subr.mxu0 0.0
        %302 = vmatpush1.msra.mxu0 0.0
        %303 = vmatprep.subr.mxu0 0.0
        %304 = vmatpush1.msra.mxu0 0.0
        %305 = vmatprep.subr.mxu0 0.0
        %306 = vmatpush1.msra.mxu0 0.0
        %307 = vmatprep.subr.mxu0 0.0
        %308 = vmatpush1.msra.mxu0 0.0
        %309 = vmatprep.subr.mxu0 0.0
        %310 = vmatpush1.msra.mxu0 0.0
        %311 = vmatprep.subr.mxu0 0.0
        %312 = vmatpush1.msra.mxu0 0.0
        %313 = vmatprep.subr.mxu0 0.0
        %314 = vmatpush1.msra.mxu0 0.0
        %315 = vmatprep.subr.mxu0 0.0
        %316 = vmatpush1.msra.mxu0 0.0
        %317 = vmatprep.subr.mxu0 0.0
        %318 = vmatpush1.msra.mxu0 0.0
        %319 = vmatprep.subr.mxu0 0.0
        %320 = vmatpush1.msra.mxu0 0.0
        %321 = vmatprep.subr.mxu0 0.0
        %322 = vmatpush1.msra.mxu0 0.0
        %323 = vmatprep.subr.mxu0 0.0
        %324 = vmatpush1.msra.mxu0 0.0
        %325 = vmatprep.subr.mxu0 0.0
        %326 = vmatpush1.msra.mxu0 0.0
        %327 = vmatprep.subr.mxu0 0.0
        %328 = vmatpush1.msra.mxu0 0.0
        %329 = vmatprep.mubr.f32.mxu0 0.0
        %330 = vmatmul.mubr.f32.gmra.mrb[0].mxu0 %v263
        %v331 = vpop.f32.mrb[0].mxu0
        %v332 = vadd.f32 %v259, %v331
        %v333 = vpop.f32.mrb[0].mxu0
        %v334 = vadd.f32 %v259, %v333
        %335 = vdwg.mxu0
        %336 = vmatprep.subr.mxu0 %v196
        %337 = vmatpush1.msra.mxu0 %v195
        %338 = vmatprep.subr.mxu0 0.0
        %339 = vmatpush1.msra.mxu0 0.0
        %340 = vmatprep.subr.mxu0 0.0
        %341 = vmatpush1.msra.mxu0 0.0
        %342 = vmatprep.subr.mxu0 0.0
        %343 = vmatpush1.msra.mxu0 0.0
        %344 = vmatprep.subr.mxu0 0.0
        %345 = vmatpush1.msra.mxu0 0.0
        %346 = vmatprep.subr.mxu0 0.0
        %347 = vmatpush1.msra.mxu0 0.0
        %348 = vmatprep.subr.mxu0 0.0
        %349 = vmatpush1.msra.mxu0 0.0
        %350 = vmatprep.subr.mxu0 0.0
        %351 = vmatpush1.msra.mxu0 0.0
        %352 = vmatprep.subr.mxu0 0.0
        %353 = vmatpush1.msra.mxu0 0.0
        %354 = vmatprep.subr.mxu0 0.0
        %355 = vmatpush1.msra.mxu0 0.0
        %356 = vmatprep.subr.mxu0 0.0
        %357 = vmatpush1.msra.mxu0 0.0
        %358 = vmatprep.subr.mxu0 0.0
        %359 = vmatpush1.msra.mxu0 0.0
        %360 = vmatprep.subr.mxu0 0.0
        %361 = vmatpush1.msra.mxu0 0.0
        %362 = vmatprep.subr.mxu0 0.0
        %363 = vmatpush1.msra.mxu0 0.0
        %364 = vmatprep.subr.mxu0 0.0
        %365 = vmatpush1.msra.mxu0 0.0
        %366 = vmatprep.subr.mxu0 0.0
        %367 = vmatpush1.msra.mxu0 0.0
        %368 = vmatprep.subr.mxu0 0.0
        %369 = vmatpush1.msra.mxu0 0.0
        %370 = vmatprep.subr.mxu0 0.0
        %371 = vmatpush1.msra.mxu0 0.0
        %372 = vmatprep.subr.mxu0 0.0
        %373 = vmatpush1.msra.mxu0 0.0
        %374 = vmatprep.subr.mxu0 0.0
        %375 = vmatpush1.msra.mxu0 0.0
        %376 = vmatprep.subr.mxu0 0.0
        %377 = vmatpush1.msra.mxu0 0.0
        %378 = vmatprep.subr.mxu0 0.0
        %379 = vmatpush1.msra.mxu0 0.0
        %380 = vmatprep.subr.mxu0 0.0
        %381 = vmatpush1.msra.mxu0 0.0
        %382 = vmatprep.subr.mxu0 0.0
        %383 = vmatpush1.msra.mxu0 0.0
        %384 = vmatprep.subr.mxu0 0.0
        %385 = vmatpush1.msra.mxu0 0.0
        %386 = vmatprep.subr.mxu0 0.0
        %387 = vmatpush1.msra.mxu0 0.0
        %388 = vmatprep.subr.mxu0 0.0
        %389 = vmatpush1.msra.mxu0 0.0
        %390 = vmatprep.subr.mxu0 0.0
        %391 = vmatpush1.msra.mxu0 0.0
        %392 = vmatprep.subr.mxu0 0.0
        %393 = vmatpush1.msra.mxu0 0.0
        %394 = vmatprep.subr.mxu0 0.0
        %395 = vmatpush1.msra.mxu0 0.0
        %396 = vmatprep.subr.mxu0 0.0
        %397 = vmatpush1.msra.mxu0 0.0
        %398 = vmatprep.subr.mxu0 0.0
        %399 = vmatpush1.msra.mxu0 0.0
        %400 = vmatprep.mubr.f32.mxu0 0.0
        %401 = vmatmul.mubr.f32.gmra.mrb[0].mxu0 %v263
        %v402 = vpop.f32.mrb[0].mxu0
        %v403 = vadd.f32 %v259, %v402
        %v404 = vpop.f32.mrb[0].mxu0
        %v405 = vadd.f32 %v259, %v404
        %406 = vdwg.mxu0
        %407 = vmatprep.subr.mxu0 %v198
        %408 = vmatpush1.msra.mxu0 %v197
        %409 = vmatprep.subr.mxu0 0.0
        %410 = vmatpush1.msra.mxu0 0.0
        %411 = vmatprep.subr.mxu0 0.0
        %412 = vmatpush1.msra.mxu0 0.0
        %413 = vmatprep.subr.mxu0 0.0
        %414 = vmatpush1.msra.mxu0 0.0
        %415 = vmatprep.subr.mxu0 0.0
        %416 = vmatpush1.msra.mxu0 0.0
        %417 = vmatprep.subr.mxu0 0.0
        %418 = vmatpush1.msra.mxu0 0.0
        %419 = vmatprep.subr.mxu0 0.0
        %420 = vmatpush1.msra.mxu0 0.0
        %421 = vmatprep.subr.mxu0 0.0
        %422 = vmatpush1.msra.mxu0 0.0
        %423 = vmatprep.subr.mxu0 0.0
        %424 = vmatpush1.msra.mxu0 0.0
        %425 = vmatprep.subr.mxu0 0.0
        %426 = vmatpush1.msra.mxu0 0.0
        %427 = vmatprep.subr.mxu0 0.0
        %428 = vmatpush1.msra.mxu0 0.0
        %429 = vmatprep.subr.mxu0 0.0
        %430 = vmatpush1.msra.mxu0 0.0
        %431 = vmatprep.subr.mxu0 0.0
        %432 = vmatpush1.msra.mxu0 0.0
        %433 = vmatprep.subr.mxu0 0.0
        %434 = vmatpush1.msra.mxu0 0.0
        %435 = vmatprep.subr.mxu0 0.0
        %436 = vmatpush1.msra.mxu0 0.0
        %437 = vmatprep.subr.mxu0 0.0
        %438 = vmatpush1.msra.mxu0 0.0
        %439 = vmatprep.subr.mxu0 0.0
        %440 = vmatpush1.msra.mxu0 0.0
        %441 = vmatprep.subr.mxu0 0.0
        %442 = vmatpush1.msra.mxu0 0.0
        %443 = vmatprep.subr.mxu0 0.0
        %444 = vmatpush1.msra.mxu0 0.0
        %445 = vmatprep.subr.mxu0 0.0
        %446 = vmatpush1.msra.mxu0 0.0
        %447 = vmatprep.subr.mxu0 0.0
        %448 = vmatpush1.msra.mxu0 0.0
        %449 = vmatprep.subr.mxu0 0.0
        %450 = vmatpush1.msra.mxu0 0.0
        %451 = vmatprep.subr.mxu0 0.0
        %452 = vmatpush1.msra.mxu0 0.0
        %453 = vmatprep.subr.mxu0 0.0
        %454 = vmatpush1.msra.mxu0 0.0
        %455 = vmatprep.subr.mxu0 0.0
        %456 = vmatpush1.msra.mxu0 0.0
        %457 = vmatprep.subr.mxu0 0.0
        %458 = vmatpush1.msra.mxu0 0.0
        %459 = vmatprep.subr.mxu0 0.0
        %460 = vmatpush1.msra.mxu0 0.0
        %461 = vmatprep.subr.mxu0 0.0
        %462 = vmatpush1.msra.mxu0 0.0
        %463 = vmatprep.subr.mxu0 0.0
        %464 = vmatpush1.msra.mxu0 0.0
        %465 = vmatprep.subr.mxu0 0.0
        %466 = vmatpush1.msra.mxu0 0.0
        %467 = vmatprep.subr.mxu0 0.0
        %468 = vmatpush1.msra.mxu0 0.0
        %469 = vmatprep.subr.mxu0 0.0
        %470 = vmatpush1.msra.mxu0 0.0
        %471 = vmatprep.mubr.f32.mxu0 0.0
        %472 = vmatmul.mubr.f32.gmra.mrb[0].mxu0 %v263
        %v473 = vpop.f32.mrb[0].mxu0
        %v474 = vadd.f32 %v259, %v473
        %v475 = vpop.f32.mrb[0].mxu0
        %v476 = vadd.f32 %v259, %v475
        %477 = vdwg.mxu0
        %478 = vmatprep.subr.mxu0 %v200
        %479 = vmatpush1.msra.mxu0 %v199
        %480 = vmatprep.subr.mxu0 0.0
        %481 = vmatpush1.msra.mxu0 0.0
        %482 = vmatprep.subr.mxu0 0.0
        %483 = vmatpush1.msra.mxu0 0.0
        %484 = vmatprep.subr.mxu0 0.0
        %485 = vmatpush1.msra.mxu0 0.0
        %486 = vmatprep.subr.mxu0 0.0
        %487 = vmatpush1.msra.mxu0 0.0
        %488 = vmatprep.subr.mxu0 0.0
        %489 = vmatpush1.msra.mxu0 0.0
        %490 = vmatprep.subr.mxu0 0.0
        %491 = vmatpush1.msra.mxu0 0.0
        %492 = vmatprep.subr.mxu0 0.0
        %493 = vmatpush1.msra.mxu0 0.0
        %494 = vmatprep.subr.mxu0 0.0
        %495 = vmatpush1.msra.mxu0 0.0
        %496 = vmatprep.subr.mxu0 0.0
        %497 = vmatpush1.msra.mxu0 0.0
        %498 = vmatprep.subr.mxu0 0.0
        %499 = vmatpush1.msra.mxu0 0.0
        %500 = vmatprep.subr.mxu0 0.0
        %501 = vmatpush1.msra.mxu0 0.0
        %502 = vmatprep.subr.mxu0 0.0
        %503 = vmatpush1.msra.mxu0 0.0
        %504 = vmatprep.subr.mxu0 0.0
        %505 = vmatpush1.msra.mxu0 0.0
        %506 = vmatprep.subr.mxu0 0.0
        %507 = vmatpush1.msra.mxu0 0.0
        %508 = vmatprep.subr.mxu0 0.0
        %509 = vmatpush1.msra.mxu0 0.0
        %510 = vmatprep.subr.mxu0 0.0
        %511 = vmatpush1.msra.mxu0 0.0
        %512 = vmatprep.subr.mxu0 0.0
        %513 = vmatpush1.msra.mxu0 0.0
        %514 = vmatprep.subr.mxu0 0.0
        %515 = vmatpush1.msra.mxu0 0.0
        %516 = vmatprep.subr.mxu0 0.0
        %517 = vmatpush1.msra.mxu0 0.0
        %518 = vmatprep.subr.mxu0 0.0
        %519 = vmatpush1.msra.mxu0 0.0
        %520 = vmatprep.subr.mxu0 0.0
        %521 = vmatpush1.msra.mxu0 0.0
        %522 = vmatprep.subr.mxu0 0.0
        %523 = vmatpush1.msra.mxu0 0.0
        %524 = vmatprep.subr.mxu0 0.0
        %525 = vmatpush1.msra.mxu0 0.0
        %526 = vmatprep.subr.mxu0 0.0
        %527 = vmatpush1.msra.mxu0 0.0
        %528 = vmatprep.subr.mxu0 0.0
        %529 = vmatpush1.msra.mxu0 0.0
        %530 = vmatprep.subr.mxu0 0.0
        %531 = vmatpush1.msra.mxu0 0.0
        %532 = vmatprep.subr.mxu0 0.0
        %533 = vmatpush1.msra.mxu0 0.0
        %534 = vmatprep.subr.mxu0 0.0
        %535 = vmatpush1.msra.mxu0 0.0
        %536 = vmatprep.subr.mxu0 0.0
        %537 = vmatpush1.msra.mxu0 0.0
        %538 = vmatprep.subr.mxu0 0.0
        %539 = vmatpush1.msra.mxu0 0.0
        %540 = vmatprep.subr.mxu0 0.0
        %541 = vmatpush1.msra.mxu0 0.0
        %542 = vmatprep.mubr.f32.mxu0 0.0
        %543 = vmatmul.mubr.f32.gmra.mrb[0].mxu0 %v263
        %v544 = vpop.f32.mrb[0].mxu0
        %v545 = vadd.f32 %v259, %v544
        %v546 = vpop.f32.mrb[0].mxu0
        %v547 = vadd.f32 %v259, %v546
        %548 = vdwg.mxu0
        %549 = vmatprep.subr.mxu0 %v202
        %550 = vmatpush1.msra.mxu0 %v201
        %551 = vmatprep.subr.mxu0 0.0
        %552 = vmatpush1.msra.mxu0 0.0
        %553 = vmatprep.subr.mxu0 0.0
        %554 = vmatpush1.msra.mxu0 0.0
        %555 = vmatprep.subr.mxu0 0.0
        %556 = vmatpush1.msra.mxu0 0.0
        %557 = vmatprep.subr.mxu0 0.0
        %558 = vmatpush1.msra.mxu0 0.0
        %559 = vmatprep.subr.mxu0 0.0
        %560 = vmatpush1.msra.mxu0 0.0
        %561 = vmatprep.subr.mxu0 0.0
        %562 = vmatpush1.msra.mxu0 0.0
        %563 = vmatprep.subr.mxu0 0.0
        %564 = vmatpush1.msra.mxu0 0.0
        %565 = vmatprep.subr.mxu0 0.0
        %566 = vmatpush1.msra.mxu0 0.0
        %567 = vmatprep.subr.mxu0 0.0
        %568 = vmatpush1.msra.mxu0 0.0
        %569 = vmatprep.subr.mxu0 0.0
        %570 = vmatpush1.msra.mxu0 0.0
        %571 = vmatprep.subr.mxu0 0.0
        %572 = vmatpush1.msra.mxu0 0.0
        %573 = vmatprep.subr.mxu0 0.0
        %574 = vmatpush1.msra.mxu0 0.0
        %575 = vmatprep.subr.mxu0 0.0
        %576 = vmatpush1.msra.mxu0 0.0
        %577 = vmatprep.subr.mxu0 0.0
        %578 = vmatpush1.msra.mxu0 0.0
        %579 = vmatprep.subr.mxu0 0.0
        %580 = vmatpush1.msra.mxu0 0.0
        %581 = vmatprep.subr.mxu0 0.0
        %582 = vmatpush1.msra.mxu0 0.0
        %583 = vmatprep.subr.mxu0 0.0
        %584 = vmatpush1.msra.mxu0 0.0
        %585 = vmatprep.subr.mxu0 0.0
        %586 = vmatpush1.msra.mxu0 0.0
        %587 = vmatprep.subr.mxu0 0.0
        %588 = vmatpush1.msra.mxu0 0.0
        %589 = vmatprep.subr.mxu0 0.0
        %590 = vmatpush1.msra.mxu0 0.0
        %591 = vmatprep.subr.mxu0 0.0
        %592 = vmatpush1.msra.mxu0 0.0
        %593 = vmatprep.subr.mxu0 0.0
        %594 = vmatpush1.msra.mxu0 0.0
        %595 = vmatprep.subr.mxu0 0.0
        %596 = vmatpush1.msra.mxu0 0.0
        %597 = vmatprep.subr.mxu0 0.0
        %598 = vmatpush1.msra.mxu0 0.0
        %599 = vmatprep.subr.mxu0 0.0
        %600 = vmatpush1.msra.mxu0 0.0
        %601 = vmatprep.subr.mxu0 0.0
        %602 = vmatpush1.msra.mxu0 0.0
        %603 = vmatprep.subr.mxu0 0.0
        %604 = vmatpush1.msra.mxu0 0.0
        %605 = vmatprep.subr.mxu0 0.0
        %606 = vmatpush1.msra.mxu0 0.0
        %607 = vmatprep.subr.mxu0 0.0
        %608 = vmatpush1.msra.mxu0 0.0
        %609 = vmatprep.subr.mxu0 0.0
        %610 = vmatpush1.msra.mxu0 0.0
        %611 = vmatprep.subr.mxu0 0.0
        %612 = vmatpush1.msra.mxu0 0.0
        %613 = vmatprep.mubr.f32.mxu0 0.0
        %614 = vmatmul.mubr.f32.gmra.mrb[0].mxu0 %v263
        %v615 = vpop.f32.mrb[0].mxu0
        %v616 = vadd.f32 %v259, %v615
        %v617 = vpop.f32.mrb[0].mxu0
        %v618 = vadd.f32 %v259, %v617
        %619 = vdwg.mxu0
        %620 = vmatprep.subr.mxu0 %v204
        %621 = vmatpush1.msra.mxu0 %v203
        %622 = vmatprep.subr.mxu0 0.0
        %623 = vmatpush1.msra.mxu0 0.0
        %624 = vmatprep.subr.mxu0 0.0
        %625 = vmatpush1.msra.mxu0 0.0
        %626 = vmatprep.subr.mxu0 0.0
        %627 = vmatpush1.msra.mxu0 0.0
        %628 = vmatprep.subr.mxu0 0.0
        %629 = vmatpush1.msra.mxu0 0.0
        %630 = vmatprep.subr.mxu0 0.0
        %631 = vmatpush1.msra.mxu0 0.0
        %632 = vmatprep.subr.mxu0 0.0
        %633 = vmatpush1.msra.mxu0 0.0
        %634 = vmatprep.subr.mxu0 0.0
        %635 = vmatpush1.msra.mxu0 0.0
        %636 = vmatprep.subr.mxu0 0.0
        %637 = vmatpush1.msra.mxu0 0.0
        %638 = vmatprep.subr.mxu0 0.0
        %639 = vmatpush1.msra.mxu0 0.0
        %640 = vmatprep.subr.mxu0 0.0
        %641 = vmatpush1.msra.mxu0 0.0
        %642 = vmatprep.subr.mxu0 0.0
        %643 = vmatpush1.msra.mxu0 0.0
        %644 = vmatprep.subr.mxu0 0.0
        %645 = vmatpush1.msra.mxu0 0.0
        %646 = vmatprep.subr.mxu0 0.0
        %647 = vmatpush1.msra.mxu0 0.0
        %648 = vmatprep.subr.mxu0 0.0
        %649 = vmatpush1.msra.mxu0 0.0
        %650 = vmatprep.subr.mxu0 0.0
        %651 = vmatpush1.msra.mxu0 0.0
        %652 = vmatprep.subr.mxu0 0.0
        %653 = vmatpush1.msra.mxu0 0.0
        %654 = vmatprep.subr.mxu0 0.0
        %655 = vmatpush1.msra.mxu0 0.0
        %656 = vmatprep.subr.mxu0 0.0
        %657 = vmatpush1.msra.mxu0 0.0
        %658 = vmatprep.subr.mxu0 0.0
        %659 = vmatpush1.msra.mxu0 0.0
        %660 = vmatprep.subr.mxu0 0.0
        %661 = vmatpush1.msra.mxu0 0.0
        %662 = vmatprep.subr.mxu0 0.0
        %663 = vmatpush1.msra.mxu0 0.0
        %664 = vmatprep.subr.mxu0 0.0
        %665 = vmatpush1.msra.mxu0 0.0
        %666 = vmatprep.subr.mxu0 0.0
        %667 = vmatpush1.msra.mxu0 0.0
        %668 = vmatprep.subr.mxu0 0.0
        %669 = vmatpush1.msra.mxu0 0.0
        %670 = vmatprep.subr.mxu0 0.0
        %671 = vmatpush1.msra.mxu0 0.0
        %672 = vmatprep.subr.mxu0 0.0
        %673 = vmatpush1.msra.mxu0 0.0
        %674 = vmatprep.subr.mxu0 0.0
        %675 = vmatpush1.msra.mxu0 0.0
        %676 = vmatprep.subr.mxu0 0.0
        %677 = vmatpush1.msra.mxu0 0.0
        %678 = vmatprep.subr.mxu0 0.0
        %679 = vmatpush1.msra.mxu0 0.0
        %680 = vmatprep.subr.mxu0 0.0
        %681 = vmatpush1.msra.mxu0 0.0
        %682 = vmatprep.subr.mxu0 0.0
        %683 = vmatpush1.msra.mxu0 0.0
        %684 = vmatprep.mubr.f32.mxu0 0.0
        %685 = vmatmul.mubr.f32.gmra.mrb[0].mxu0 %v263
        %v686 = vpop.f32.mrb[0].mxu0
        %v687 = vadd.f32 %v259, %v686
        %v688 = vpop.f32.mrb[0].mxu0
        %v689 = vadd.f32 %v259, %v688
        %690 = vdwg.mxu0
        %691 = vmatprep.subr.mxu0 %v206
        %692 = vmatpush1.msra.mxu0 %v205
        %693 = vmatprep.subr.mxu0 0.0
        %694 = vmatpush1.msra.mxu0 0.0
        %695 = vmatprep.subr.mxu0 0.0
        %696 = vmatpush1.msra.mxu0 0.0
        %697 = vmatprep.subr.mxu0 0.0
        %698 = vmatpush1.msra.mxu0 0.0
        %699 = vmatprep.subr.mxu0 0.0
        %700 = vmatpush1.msra.mxu0 0.0
        %701 = vmatprep.subr.mxu0 0.0
        %702 = vmatpush1.msra.mxu0 0.0
        %703 = vmatprep.subr.mxu0 0.0
        %704 = vmatpush1.msra.mxu0 0.0
        %705 = vmatprep.subr.mxu0 0.0
        %706 = vmatpush1.msra.mxu0 0.0
        %707 = vmatprep.subr.mxu0 0.0
        %708 = vmatpush1.msra.mxu0 0.0
        %709 = vmatprep.subr.mxu0 0.0
        %710 = vmatpush1.msra.mxu0 0.0
        %711 = vmatprep.subr.mxu0 0.0
        %712 = vmatpush1.msra.mxu0 0.0
        %713 = vmatprep.subr.mxu0 0.0
        %714 = vmatpush1.msra.mxu0 0.0
        %715 = vmatprep.subr.mxu0 0.0
        %716 = vmatpush1.msra.mxu0 0.0
        %717 = vmatprep.subr.mxu0 0.0
        %718 = vmatpush1.msra.mxu0 0.0
        %719 = vmatprep.subr.mxu0 0.0
        %720 = vmatpush1.msra.mxu0 0.0
        %721 = vmatprep.subr.mxu0 0.0
        %722 = vmatpush1.msra.mxu0 0.0
        %723 = vmatprep.subr.mxu0 0.0
        %724 = vmatpush1.msra.mxu0 0.0
        %725 = vmatprep.subr.mxu0 0.0
        %726 = vmatpush1.msra.mxu0 0.0
        %727 = vmatprep.subr.mxu0 0.0
        %728 = vmatpush1.msra.mxu0 0.0
        %729 = vmatprep.subr.mxu0 0.0
        %730 = vmatpush1.msra.mxu0 0.0
        %731 = vmatprep.subr.mxu0 0.0
        %732 = vmatpush1.msra.mxu0 0.0
        %733 = vmatprep.subr.mxu0 0.0
        %734 = vmatpush1.msra.mxu0 0.0
        %735 = vmatprep.subr.mxu0 0.0
        %736 = vmatpush1.msra.mxu0 0.0
        %737 = vmatprep.subr.mxu0 0.0
        %738 = vmatpush1.msra.mxu0 0.0
        %739 = vmatprep.subr.mxu0 0.0
        %740 = vmatpush1.msra.mxu0 0.0
        %741 = vmatprep.subr.mxu0 0.0
        %742 = vmatpush1.msra.mxu0 0.0
        %743 = vmatprep.subr.mxu0 0.0
        %744 = vmatpush1.msra.mxu0 0.0
        %745 = vmatprep.subr.mxu0 0.0
        %746 = vmatpush1.msra.mxu0 0.0
        %747 = vmatprep.subr.mxu0 0.0
        %748 = vmatpush1.msra.mxu0 0.0
        %749 = vmatprep.subr.mxu0 0.0
        %750 = vmatpush1.msra.mxu0 0.0
        %751 = vmatprep.subr.mxu0 0.0
        %752 = vmatpush1.msra.mxu0 0.0
        %753 = vmatprep.subr.mxu0 0.0
        %754 = vmatpush1.msra.mxu0 0.0
        %755 = vmatprep.mubr.f32.mxu0 0.0
        %756 = vmatmul.mubr.f32.gmra.mrb[0].mxu0 %v263
        %v757 = vpop.f32.mrb[0].mxu0
        %v758 = vadd.f32 %v259, %v757
        %v759 = vpop.f32.mrb[0].mxu0
        %v760 = vadd.f32 %v259, %v759
        %761 = vdwg.mxu0
        %762 = vmatprep.subr.mxu0 %v208
        %763 = vmatpush1.msra.mxu0 %v207
        %764 = vmatprep.subr.mxu0 0.0
        %765 = vmatpush1.msra.mxu0 0.0
        %766 = vmatprep.subr.mxu0 0.0
        %767 = vmatpush1.msra.mxu0 0.0
        %768 = vmatprep.subr.mxu0 0.0
        %769 = vmatpush1.msra.mxu0 0.0
        %770 = vmatprep.subr.mxu0 0.0
        %771 = vmatpush1.msra.mxu0 0.0
        %772 = vmatprep.subr.mxu0 0.0
        %773 = vmatpush1.msra.mxu0 0.0
        %774 = vmatprep.subr.mxu0 0.0
        %775 = vmatpush1.msra.mxu0 0.0
        %776 = vmatprep.subr.mxu0 0.0
        %777 = vmatpush1.msra.mxu0 0.0
        %778 = vmatprep.subr.mxu0 0.0
        %779 = vmatpush1.msra.mxu0 0.0
        %780 = vmatprep.subr.mxu0 0.0
        %781 = vmatpush1.msra.mxu0 0.0
        %782 = vmatprep.subr.mxu0 0.0
        %783 = vmatpush1.msra.mxu0 0.0
        %784 = vmatprep.subr.mxu0 0.0
        %785 = vmatpush1.msra.mxu0 0.0
        %786 = vmatprep.subr.mxu0 0.0
        %787 = vmatpush1.msra.mxu0 0.0
        %788 = vmatprep.subr.mxu0 0.0
        %789 = vmatpush1.msra.mxu0 0.0
        %790 = vmatprep.subr.mxu0 0.0
        %791 = vmatpush1.msra.mxu0 0.0
        %792 = vmatprep.subr.mxu0 0.0
        %793 = vmatpush1.msra.mxu0 0.0
        %794 = vmatprep.subr.mxu0 0.0
        %795 = vmatpush1.msra.mxu0 0.0
        %796 = vmatprep.subr.mxu0 0.0
        %797 = vmatpush1.msra.mxu0 0.0
        %798 = vmatprep.subr.mxu0 0.0
        %799 = vmatpush1.msra.mxu0 0.0
        %800 = vmatprep.subr.mxu0 0.0
        %801 = vmatpush1.msra.mxu0 0.0
        %802 = vmatprep.subr.mxu0 0.0
        %803 = vmatpush1.msra.mxu0 0.0
        %804 = vmatprep.subr.mxu0 0.0
        %805 = vmatpush1.msra.mxu0 0.0
        %806 = vmatprep.subr.mxu0 0.0
        %807 = vmatpush1.msra.mxu0 0.0
        %808 = vmatprep.subr.mxu0 0.0
        %809 = vmatpush1.msra.mxu0 0.0
        %810 = vmatprep.subr.mxu0 0.0
        %811 = vmatpush1.msra.mxu0 0.0
        %812 = vmatprep.subr.mxu0 0.0
        %813 = vmatpush1.msra.mxu0 0.0
        %814 = vmatprep.subr.mxu0 0.0
        %815 = vmatpush1.msra.mxu0 0.0
        %816 = vmatprep.subr.mxu0 0.0
        %817 = vmatpush1.msra.mxu0 0.0
        %818 = vmatprep.subr.mxu0 0.0
        %819 = vmatpush1.msra.mxu0 0.0
        %820 = vmatprep.subr.mxu0 0.0
        %821 = vmatpush1.msra.mxu0 0.0
        %822 = vmatprep.subr.mxu0 0.0
        %823 = vmatpush1.msra.mxu0 0.0
        %824 = vmatprep.subr.mxu0 0.0
        %825 = vmatpush1.msra.mxu0 0.0
        %826 = vmatprep.mubr.f32.mxu0 0.0
        %827 = vmatmul.mubr.f32.gmra.mrb[0].mxu0 %v263
        %v828 = vpop.f32.mrb[0].mxu0
        %v829 = vadd.f32 %v259, %v828
        %v830 = vpop.f32.mrb[0].mxu0
        %v831 = vadd.f32 %v259, %v830
        %832 = vdwg.mxu0
        %833 = vmatprep.subr.mxu0 %v210
        %834 = vmatpush1.msra.mxu0 %v209
        %835 = vmatprep.subr.mxu0 0.0
        %836 = vmatpush1.msra.mxu0 0.0
        %837 = vmatprep.subr.mxu0 0.0
        %838 = vmatpush1.msra.mxu0 0.0
        %839 = vmatprep.subr.mxu0 0.0
        %840 = vmatpush1.msra.mxu0 0.0
        %841 = vmatprep.subr.mxu0 0.0
        %842 = vmatpush1.msra.mxu0 0.0
        %843 = vmatprep.subr.mxu0 0.0
        %844 = vmatpush1.msra.mxu0 0.0
        %845 = vmatprep.subr.mxu0 0.0
        %846 = vmatpush1.msra.mxu0 0.0
        %847 = vmatprep.subr.mxu0 0.0
        %848 = vmatpush1.msra.mxu0 0.0
        %849 = vmatprep.subr.mxu0 0.0
        %850 = vmatpush1.msra.mxu0 0.0
        %851 = vmatprep.subr.mxu0 0.0
        %852 = vmatpush1.msra.mxu0 0.0
        %853 = vmatprep.subr.mxu0 0.0
        %854 = vmatpush1.msra.mxu0 0.0
        %855 = vmatprep.subr.mxu0 0.0
        %856 = vmatpush1.msra.mxu0 0.0
        %857 = vmatprep.subr.mxu0 0.0
        %858 = vmatpush1.msra.mxu0 0.0
        %859 = vmatprep.subr.mxu0 0.0
        %860 = vmatpush1.msra.mxu0 0.0
        %861 = vmatprep.subr.mxu0 0.0
        %862 = vmatpush1.msra.mxu0 0.0
        %863 = vmatprep.subr.mxu0 0.0
        %864 = vmatpush1.msra.mxu0 0.0
        %865 = vmatprep.subr.mxu0 0.0
        %866 = vmatpush1.msra.mxu0 0.0
        %867 = vmatprep.subr.mxu0 0.0
        %868 = vmatpush1.msra.mxu0 0.0
        %869 = vmatprep.subr.mxu0 0.0
        %870 = vmatpush1.msra.mxu0 0.0
        %871 = vmatprep.subr.mxu0 0.0
        %872 = vmatpush1.msra.mxu0 0.0
        %873 = vmatprep.subr.mxu0 0.0
        %874 = vmatpush1.msra.mxu0 0.0
        %875 = vmatprep.subr.mxu0 0.0
        %876 = vmatpush1.msra.mxu0 0.0
        %877 = vmatprep.subr.mxu0 0.0
        %878 = vmatpush1.msra.mxu0 0.0
        %879 = vmatprep.subr.mxu0 0.0
        %880 = vmatpush1.msra.mxu0 0.0
        %881 = vmatprep.subr.mxu0 0.0
        %882 = vmatpush1.msra.mxu0 0.0
        %883 = vmatprep.subr.mxu0 0.0
        %884 = vmatpush1.msra.mxu0 0.0
        %885 = vmatprep.subr.mxu0 0.0
        %886 = vmatpush1.msra.mxu0 0.0
        %887 = vmatprep.subr.mxu0 0.0
        %888 = vmatpush1.msra.mxu0 0.0
        %889 = vmatprep.subr.mxu0 0.0
        %890 = vmatpush1.msra.mxu0 0.0
        %891 = vmatprep.subr.mxu0 0.0
        %892 = vmatpush1.msra.mxu0 0.0
        %893 = vmatprep.subr.mxu0 0.0
        %894 = vmatpush1.msra.mxu0 0.0
        %895 = vmatprep.subr.mxu0 0.0
        %896 = vmatpush1.msra.mxu0 0.0
        %897 = vmatprep.mubr.f32.mxu0 0.0
        %898 = vmatmul.mubr.f32.gmra.mrb[0].mxu0 %v263
        %v899 = vpop.f32.mrb[0].mxu0
        %v900 = vadd.f32 %v259, %v899
        %v901 = vpop.f32.mrb[0].mxu0
        %v902 = vadd.f32 %v259, %v901
        %903 = vdwg.mxu0
        %904 = vmatprep.subr.mxu0 %v212
        %905 = vmatpush1.msra.mxu0 %v211
        %906 = vmatprep.subr.mxu0 0.0
        %907 = vmatpush1.msra.mxu0 0.0
        %908 = vmatprep.subr.mxu0 0.0
        %909 = vmatpush1.msra.mxu0 0.0
        %910 = vmatprep.subr.mxu0 0.0
        %911 = vmatpush1.msra.mxu0 0.0
        %912 = vmatprep.subr.mxu0 0.0
        %913 = vmatpush1.msra.mxu0 0.0
        %914 = vmatprep.subr.mxu0 0.0
        %915 = vmatpush1.msra.mxu0 0.0
        %916 = vmatprep.subr.mxu0 0.0
        %917 = vmatpush1.msra.mxu0 0.0
        %918 = vmatprep.subr.mxu0 0.0
        %919 = vmatpush1.msra.mxu0 0.0
        %920 = vmatprep.subr.mxu0 0.0
        %921 = vmatpush1.msra.mxu0 0.0
        %922 = vmatprep.subr.mxu0 0.0
        %923 = vmatpush1.msra.mxu0 0.0
        %924 = vmatprep.subr.mxu0 0.0
        %925 = vmatpush1.msra.mxu0 0.0
        %926 = vmatprep.subr.mxu0 0.0
        %927 = vmatpush1.msra.mxu0 0.0
        %928 = vmatprep.subr.mxu0 0.0
        %929 = vmatpush1.msra.mxu0 0.0
        %930 = vmatprep.subr.mxu0 0.0
        %931 = vmatpush1.msra.mxu0 0.0
        %932 = vmatprep.subr.mxu0 0.0
        %933 = vmatpush1.msra.mxu0 0.0
        %934 = vmatprep.subr.mxu0 0.0
        %935 = vmatpush1.msra.mxu0 0.0
        %936 = vmatprep.subr.mxu0 0.0
        %937 = vmatpush1.msra.mxu0 0.0
        %938 = vmatprep.subr.mxu0 0.0
        %939 = vmatpush1.msra.mxu0 0.0
        %940 = vmatprep.subr.mxu0 0.0
        %941 = vmatpush1.msra.mxu0 0.0
        %942 = vmatprep.subr.mxu0 0.0
        %943 = vmatpush1.msra.mxu0 0.0
        %944 = vmatprep.subr.mxu0 0.0
        %945 = vmatpush1.msra.mxu0 0.0
        %946 = vmatprep.subr.mxu0 0.0
        %947 = vmatpush1.msra.mxu0 0.0
        %948 = vmatprep.subr.mxu0 0.0
        %949 = vmatpush1.msra.mxu0 0.0
        %950 = vmatprep.subr.mxu0 0.0
        %951 = vmatpush1.msra.mxu0 0.0
        %952 = vmatprep.subr.mxu0 0.0
        %953 = vmatpush1.msra.mxu0 0.0
        %954 = vmatprep.subr.mxu0 0.0
        %955 = vmatpush1.msra.mxu0 0.0
        %956 = vmatprep.subr.mxu0 0.0
        %957 = vmatpush1.msra.mxu0 0.0
        %958 = vmatprep.subr.mxu0 0.0
        %959 = vmatpush1.msra.mxu0 0.0
        %960 = vmatprep.subr.mxu0 0.0
        %961 = vmatpush1.msra.mxu0 0.0
        %962 = vmatprep.subr.mxu0 0.0
        %963 = vmatpush1.msra.mxu0 0.0
        %964 = vmatprep.subr.mxu0 0.0
        %965 = vmatpush1.msra.mxu0 0.0
        %966 = vmatprep.subr.mxu0 0.0
        %967 = vmatpush1.msra.mxu0 0.0
        %968 = vmatprep.mubr.f32.mxu0 0.0
        %969 = vmatmul.mubr.f32.gmra.mrb[0].mxu0 %v263
        %v970 = vpop.f32.mrb[0].mxu0
        %v971 = vadd.f32 %v259, %v970
        %v972 = vpop.f32.mrb[0].mxu0
        %v973 = vadd.f32 %v259, %v972
        %974 = vdwg.mxu0
        %975 = vmatprep.subr.mxu0 %v214
        %976 = vmatpush1.msra.mxu0 %v213
        %977 = vmatprep.subr.mxu0 0.0
        %978 = vmatpush1.msra.mxu0 0.0
        %979 = vmatprep.subr.mxu0 0.0
        %980 = vmatpush1.msra.mxu0 0.0
        %981 = vmatprep.subr.mxu0 0.0
        %982 = vmatpush1.msra.mxu0 0.0
        %983 = vmatprep.subr.mxu0 0.0
        %984 = vmatpush1.msra.mxu0 0.0
        %985 = vmatprep.subr.mxu0 0.0
        %986 = vmatpush1.msra.mxu0 0.0
        %987 = vmatprep.subr.mxu0 0.0
        %988 = vmatpush1.msra.mxu0 0.0
        %989 = vmatprep.subr.mxu0 0.0
        %990 = vmatpush1.msra.mxu0 0.0
        %991 = vmatprep.subr.mxu0 0.0
        %992 = vmatpush1.msra.mxu0 0.0
        %993 = vmatprep.subr.mxu0 0.0
        %994 = vmatpush1.msra.mxu0 0.0
        %995 = vmatprep.subr.mxu0 0.0
        %996 = vmatpush1.msra.mxu0 0.0
        %997 = vmatprep.subr.mxu0 0.0
        %998 = vmatpush1.msra.mxu0 0.0
        %999 = vmatprep.subr.mxu0 0.0
        %1000 = vmatpush1.msra.mxu0 0.0
        %1001 = vmatprep.subr.mxu0 0.0
        %1002 = vmatpush1.msra.mxu0 0.0
        %1003 = vmatprep.subr.mxu0 0.0
        %1004 = vmatpush1.msra.mxu0 0.0
        %1005 = vmatprep.subr.mxu0 0.0
        %1006 = vmatpush1.msra.mxu0 0.0
        %1007 = vmatprep.subr.mxu0 0.0
        %1008 = vmatpush1.msra.mxu0 0.0
        %1009 = vmatprep.subr.mxu0 0.0
        %1010 = vmatpush1.msra.mxu0 0.0
        %1011 = vmatprep.subr.mxu0 0.0
        %1012 = vmatpush1.msra.mxu0 0.0
        %1013 = vmatprep.subr.mxu0 0.0
        %1014 = vmatpush1.msra.mxu0 0.0
        %1015 = vmatprep.subr.mxu0 0.0
        %1016 = vmatpush1.msra.mxu0 0.0
        %1017 = vmatprep.subr.mxu0 0.0
        %1018 = vmatpush1.msra.mxu0 0.0
        %1019 = vmatprep.subr.mxu0 0.0
        %1020 = vmatpush1.msra.mxu0 0.0
        %1021 = vmatprep.subr.mxu0 0.0
        %1022 = vmatpush1.msra.mxu0 0.0
        %1023 = vmatprep.subr.mxu0 0.0
        %1024 = vmatpush1.msra.mxu0 0.0
        %1025 = vmatprep.subr.mxu0 0.0
        %1026 = vmatpush1.msra.mxu0 0.0
        %1027 = vmatprep.subr.mxu0 0.0
        %1028 = vmatpush1.msra.mxu0 0.0
        %1029 = vmatprep.subr.mxu0 0.0
        %1030 = vmatpush1.msra.mxu0 0.0
        %1031 = vmatprep.subr.mxu0 0.0
        %1032 = vmatpush1.msra.mxu0 0.0
        %1033 = vmatprep.subr.mxu0 0.0
        %1034 = vmatpush1.msra.mxu0 0.0
        %1035 = vmatprep.subr.mxu0 0.0
        %1036 = vmatpush1.msra.mxu0 0.0
        %1037 = vmatprep.subr.mxu0 0.0
        %1038 = vmatpush1.msra.mxu0 0.0
        %1039 = vmatprep.mubr.f32.mxu0 0.0
        %1040 = vmatmul.mubr.f32.gmra.mrb[0].mxu0 %v263
        %v1041 = vpop.f32.mrb[0].mxu0
        %v1042 = vadd.f32 %v259, %v1041
        %v1043 = vpop.f32.mrb[0].mxu0
        %v1044 = vadd.f32 %v259, %v1043
        %1045 = vdwg.mxu0
        %1046 = vmatprep.subr.mxu0 %v216
        %1047 = vmatpush1.msra.mxu0 %v215
        %1048 = vmatprep.subr.mxu0 0.0
        %1049 = vmatpush1.msra.mxu0 0.0
        %1050 = vmatprep.subr.mxu0 0.0
        %1051 = vmatpush1.msra.mxu0 0.0
        %1052 = vmatprep.subr.mxu0 0.0
        %1053 = vmatpush1.msra.mxu0 0.0
        %1054 = vmatprep.subr.mxu0 0.0
        %1055 = vmatpush1.msra.mxu0 0.0
        %1056 = vmatprep.subr.mxu0 0.0
        %1057 = vmatpush1.msra.mxu0 0.0
        %1058 = vmatprep.subr.mxu0 0.0
        %1059 = vmatpush1.msra.mxu0 0.0
        %1060 = vmatprep.subr.mxu0 0.0
        %1061 = vmatpush1.msra.mxu0 0.0
        %1062 = vmatprep.subr.mxu0 0.0
        %1063 = vmatpush1.msra.mxu0 0.0
        %1064 = vmatprep.subr.mxu0 0.0
        %1065 = vmatpush1.msra.mxu0 0.0
        %1066 = vmatprep.subr.mxu0 0.0
        %1067 = vmatpush1.msra.mxu0 0.0
        %1068 = vmatprep.subr.mxu0 0.0
        %1069 = vmatpush1.msra.mxu0 0.0
        %1070 = vmatprep.subr.mxu0 0.0
        %1071 = vmatpush1.msra.mxu0 0.0
        %1072 = vmatprep.subr.mxu0 0.0
        %1073 = vmatpush1.msra.mxu0 0.0
        %1074 = vmatprep.subr.mxu0 0.0
        %1075 = vmatpush1.msra.mxu0 0.0
        %1076 = vmatprep.subr.mxu0 0.0
        %1077 = vmatpush1.msra.mxu0 0.0
        %1078 = vmatprep.subr.mxu0 0.0
        %1079 = vmatpush1.msra.mxu0 0.0
        %1080 = vmatprep.subr.mxu0 0.0
        %1081 = vmatpush1.msra.mxu0 0.0
        %1082 = vmatprep.subr.mxu0 0.0
        %1083 = vmatpush1.msra.mxu0 0.0
        %1084 = vmatprep.subr.mxu0 0.0
        %1085 = vmatpush1.msra.mxu0 0.0
        %1086 = vmatprep.subr.mxu0 0.0
        %1087 = vmatpush1.msra.mxu0 0.0
        %1088 = vmatprep.subr.mxu0 0.0
        %1089 = vmatpush1.msra.mxu0 0.0
        %1090 = vmatprep.subr.mxu0 0.0
        %1091 = vmatpush1.msra.mxu0 0.0
        %1092 = vmatprep.subr.mxu0 0.0
        %1093 = vmatpush1.msra.mxu0 0.0
        %1094 = vmatprep.subr.mxu0 0.0
        %1095 = vmatpush1.msra.mxu0 0.0
        %1096 = vmatprep.subr.mxu0 0.0
        %1097 = vmatpush1.msra.mxu0 0.0
        %1098 = vmatprep.subr.mxu0 0.0
        %1099 = vmatpush1.msra.mxu0 0.0
        %1100 = vmatprep.subr.mxu0 0.0
        %1101 = vmatpush1.msra.mxu0 0.0
        %1102 = vmatprep.subr.mxu0 0.0
        %1103 = vmatpush1.msra.mxu0 0.0
        %1104 = vmatprep.subr.mxu0 0.0
        %1105 = vmatpush1.msra.mxu0 0.0
        %1106 = vmatprep.subr.mxu0 0.0
        %1107 = vmatpush1.msra.mxu0 0.0
        %1108 = vmatprep.subr.mxu0 0.0
        %1109 = vmatpush1.msra.mxu0 0.0
        %1110 = vmatprep.mubr.f32.mxu0 0.0
        %1111 = vmatmul.mubr.f32.gmra.mrb[0].mxu0 %v263
        %v1112 = vpop.f32.mrb[0].mxu0
        %v1113 = vadd.f32 %v259, %v1112
        %v1114 = vpop.f32.mrb[0].mxu0
        %v1115 = vadd.f32 %v259, %v1114
        %1116 = vdwg.mxu0
        %1117 = vmatprep.subr.mxu0 %v218
        %1118 = vmatpush1.msra.mxu0 %v217
        %1119 = vmatprep.subr.mxu0 0.0
        %1120 = vmatpush1.msra.mxu0 0.0
        %1121 = vmatprep.subr.mxu0 0.0
        %1122 = vmatpush1.msra.mxu0 0.0
        %1123 = vmatprep.subr.mxu0 0.0
        %1124 = vmatpush1.msra.mxu0 0.0
        %1125 = vmatprep.subr.mxu0 0.0
        %1126 = vmatpush1.msra.mxu0 0.0
        %1127 = vmatprep.subr.mxu0 0.0
        %1128 = vmatpush1.msra.mxu0 0.0
        %1129 = vmatprep.subr.mxu0 0.0
        %1130 = vmatpush1.msra.mxu0 0.0
        %1131 = vmatprep.subr.mxu0 0.0
        %1132 = vmatpush1.msra.mxu0 0.0
        %1133 = vmatprep.subr.mxu0 0.0
        %1134 = vmatpush1.msra.mxu0 0.0
        %1135 = vmatprep.subr.mxu0 0.0
        %1136 = vmatpush1.msra.mxu0 0.0
        %1137 = vmatprep.subr.mxu0 0.0
        %1138 = vmatpush1.msra.mxu0 0.0
        %1139 = vmatprep.subr.mxu0 0.0
        %1140 = vmatpush1.msra.mxu0 0.0
        %1141 = vmatprep.subr.mxu0 0.0
        %1142 = vmatpush1.msra.mxu0 0.0
        %1143 = vmatprep.subr.mxu0 0.0
        %1144 = vmatpush1.msra.mxu0 0.0
        %1145 = vmatprep.subr.mxu0 0.0
        %1146 = vmatpush1.msra.mxu0 0.0
        %1147 = vmatprep.subr.mxu0 0.0
        %1148 = vmatpush1.msra.mxu0 0.0
        %1149 = vmatprep.subr.mxu0 0.0
        %1150 = vmatpush1.msra.mxu0 0.0
        %1151 = vmatprep.subr.mxu0 0.0
        %1152 = vmatpush1.msra.mxu0 0.0
        %1153 = vmatprep.subr.mxu0 0.0
        %1154 = vmatpush1.msra.mxu0 0.0
        %1155 = vmatprep.subr.mxu0 0.0
        %1156 = vmatpush1.msra.mxu0 0.0
        %1157 = vmatprep.subr.mxu0 0.0
        %1158 = vmatpush1.msra.mxu0 0.0
        %1159 = vmatprep.subr.mxu0 0.0
        %1160 = vmatpush1.msra.mxu0 0.0
        %1161 = vmatprep.subr.mxu0 0.0
        %1162 = vmatpush1.msra.mxu0 0.0
        %1163 = vmatprep.subr.mxu0 0.0
        %1164 = vmatpush1.msra.mxu0 0.0
        %1165 = vmatprep.subr.mxu0 0.0
        %1166 = vmatpush1.msra.mxu0 0.0
        %1167 = vmatprep.subr.mxu0 0.0
        %1168 = vmatpush1.msra.mxu0 0.0
        %1169 = vmatprep.subr.mxu0 0.0
        %1170 = vmatpush1.msra.mxu0 0.0
        %1171 = vmatprep.subr.mxu0 0.0
        %1172 = vmatpush1.msra.mxu0 0.0
        %1173 = vmatprep.subr.mxu0 0.0
        %1174 = vmatpush1.msra.mxu0 0.0
        %1175 = vmatprep.subr.mxu0 0.0
        %1176 = vmatpush1.msra.mxu0 0.0
        %1177 = vmatprep.subr.mxu0 0.0
        %1178 = vmatpush1.msra.mxu0 0.0
        %1179 = vmatprep.subr.mxu0 0.0
        %1180 = vmatpush1.msra.mxu0 0.0
        %1181 = vmatprep.mubr.f32.mxu0 0.0
        %1182 = vmatmul.mubr.f32.gmra.mrb[0].mxu0 %v263
        %v1183 = vpop.f32.mrb[0].mxu0
        %v1184 = vadd.f32 %v259, %v1183
        %v1185 = vpop.f32.mrb[0].mxu0
        %v1186 = vadd.f32 %v259, %v1185
        %1187 = vdwg.mxu0
        %1188 = vmatprep.subr.mxu0 %v220
        %1189 = vmatpush1.msra.mxu0 %v219
        %1190 = vmatprep.subr.mxu0 0.0
        %1191 = vmatpush1.msra.mxu0 0.0
        %1192 = vmatprep.subr.mxu0 0.0
        %1193 = vmatpush1.msra.mxu0 0.0
        %1194 = vmatprep.subr.mxu0 0.0
        %1195 = vmatpush1.msra.mxu0 0.0
        %1196 = vmatprep.subr.mxu0 0.0
        %1197 = vmatpush1.msra.mxu0 0.0
        %1198 = vmatprep.subr.mxu0 0.0
        %1199 = vmatpush1.msra.mxu0 0.0
        %1200 = vmatprep.subr.mxu0 0.0
        %1201 = vmatpush1.msra.mxu0 0.0
        %1202 = vmatprep.subr.mxu0 0.0
        %1203 = vmatpush1.msra.mxu0 0.0
        %1204 = vmatprep.subr.mxu0 0.0
        %1205 = vmatpush1.msra.mxu0 0.0
        %1206 = vmatprep.subr.mxu0 0.0
        %1207 = vmatpush1.msra.mxu0 0.0
        %1208 = vmatprep.subr.mxu0 0.0
        %1209 = vmatpush1.msra.mxu0 0.0
        %1210 = vmatprep.subr.mxu0 0.0
        %1211 = vmatpush1.msra.mxu0 0.0
        %1212 = vmatprep.subr.mxu0 0.0
        %1213 = vmatpush1.msra.mxu0 0.0
        %1214 = vmatprep.subr.mxu0 0.0
        %1215 = vmatpush1.msra.mxu0 0.0
        %1216 = vmatprep.subr.mxu0 0.0
        %1217 = vmatpush1.msra.mxu0 0.0
        %1218 = vmatprep.subr.mxu0 0.0
        %1219 = vmatpush1.msra.mxu0 0.0
        %1220 = vmatprep.subr.mxu0 0.0
        %1221 = vmatpush1.msra.mxu0 0.0
        %1222 = vmatprep.subr.mxu0 0.0
        %1223 = vmatpush1.msra.mxu0 0.0
        %1224 = vmatprep.subr.mxu0 0.0
        %1225 = vmatpush1.msra.mxu0 0.0
        %1226 = vmatprep.subr.mxu0 0.0
        %1227 = vmatpush1.msra.mxu0 0.0
        %1228 = vmatprep.subr.mxu0 0.0
        %1229 = vmatpush1.msra.mxu0 0.0
        %1230 = vmatprep.subr.mxu0 0.0
        %1231 = vmatpush1.msra.mxu0 0.0
        %1232 = vmatprep.subr.mxu0 0.0
        %1233 = vmatpush1.msra.mxu0 0.0
        %1234 = vmatprep.subr.mxu0 0.0
        %1235 = vmatpush1.msra.mxu0 0.0
        %1236 = vmatprep.subr.mxu0 0.0
        %1237 = vmatpush1.msra.mxu0 0.0
        %1238 = vmatprep.subr.mxu0 0.0
        %1239 = vmatpush1.msra.mxu0 0.0
        %1240 = vmatprep.subr.mxu0 0.0
        %1241 = vmatpush1.msra.mxu0 0.0
        %1242 = vmatprep.subr.mxu0 0.0
        %1243 = vmatpush1.msra.mxu0 0.0
        %1244 = vmatprep.subr.mxu0 0.0
        %1245 = vmatpush1.msra.mxu0 0.0
        %1246 = vmatprep.subr.mxu0 0.0
        %1247 = vmatpush1.msra.mxu0 0.0
        %1248 = vmatprep.subr.mxu0 0.0
        %1249 = vmatpush1.msra.mxu0 0.0
        %1250 = vmatprep.subr.mxu0 0.0
        %1251 = vmatpush1.msra.mxu0 0.0
        %1252 = vmatprep.mubr.f32.mxu0 0.0
        %1253 = vmatmul.mubr.f32.gmra.mrb[0].mxu0 %v263
        %v1254 = vpop.f32.mrb[0].mxu0
        %v1255 = vadd.f32 %v259, %v1254
        %v1256 = vpop.f32.mrb[0].mxu0
        %v1257 = vadd.f32 %v259, %v1256
        %1258 = vdwg.mxu0
        %1259 = vmatprep.subr.mxu0 %v222
        %1260 = vmatpush1.msra.mxu0 %v221
        %1261 = vmatprep.subr.mxu0 0.0
        %1262 = vmatpush1.msra.mxu0 0.0
        %1263 = vmatprep.subr.mxu0 0.0
        %1264 = vmatpush1.msra.mxu0 0.0
        %1265 = vmatprep.subr.mxu0 0.0
        %1266 = vmatpush1.msra.mxu0 0.0
        %1267 = vmatprep.subr.mxu0 0.0
        %1268 = vmatpush1.msra.mxu0 0.0
        %1269 = vmatprep.subr.mxu0 0.0
        %1270 = vmatpush1.msra.mxu0 0.0
        %1271 = vmatprep.subr.mxu0 0.0
        %1272 = vmatpush1.msra.mxu0 0.0
        %1273 = vmatprep.subr.mxu0 0.0
        %1274 = vmatpush1.msra.mxu0 0.0
        %1275 = vmatprep.subr.mxu0 0.0
        %1276 = vmatpush1.msra.mxu0 0.0
        %1277 = vmatprep.subr.mxu0 0.0
        %1278 = vmatpush1.msra.mxu0 0.0
        %1279 = vmatprep.subr.mxu0 0.0
        %1280 = vmatpush1.msra.mxu0 0.0
        %1281 = vmatprep.subr.mxu0 0.0
        %1282 = vmatpush1.msra.mxu0 0.0
        %1283 = vmatprep.subr.mxu0 0.0
        %1284 = vmatpush1.msra.mxu0 0.0
        %1285 = vmatprep.subr.mxu0 0.0
        %1286 = vmatpush1.msra.mxu0 0.0
        %1287 = vmatprep.subr.mxu0 0.0
        %1288 = vmatpush1.msra.mxu0 0.0
        %1289 = vmatprep.subr.mxu0 0.0
        %1290 = vmatpush1.msra.mxu0 0.0
        %1291 = vmatprep.subr.mxu0 0.0
        %1292 = vmatpush1.msra.mxu0 0.0
        %1293 = vmatprep.subr.mxu0 0.0
        %1294 = vmatpush1.msra.mxu0 0.0
        %1295 = vmatprep.subr.mxu0 0.0
        %1296 = vmatpush1.msra.mxu0 0.0
        %1297 = vmatprep.subr.mxu0 0.0
        %1298 = vmatpush1.msra.mxu0 0.0
        %1299 = vmatprep.subr.mxu0 0.0
        %1300 = vmatpush1.msra.mxu0 0.0
        %1301 = vmatprep.subr.mxu0 0.0
        %1302 = vmatpush1.msra.mxu0 0.0
        %1303 = vmatprep.subr.mxu0 0.0
        %1304 = vmatpush1.msra.mxu0 0.0
        %1305 = vmatprep.subr.mxu0 0.0
        %1306 = vmatpush1.msra.mxu0 0.0
        %1307 = vmatprep.subr.mxu0 0.0
        %1308 = vmatpush1.msra.mxu0 0.0
        %1309 = vmatprep.subr.mxu0 0.0
        %1310 = vmatpush1.msra.mxu0 0.0
        %1311 = vmatprep.subr.mxu0 0.0
        %1312 = vmatpush1.msra.mxu0 0.0
        %1313 = vmatprep.subr.mxu0 0.0
        %1314 = vmatpush1.msra.mxu0 0.0
        %1315 = vmatprep.subr.mxu0 0.0
        %1316 = vmatpush1.msra.mxu0 0.0
        %1317 = vmatprep.subr.mxu0 0.0
        %1318 = vmatpush1.msra.mxu0 0.0
        %1319 = vmatprep.subr.mxu0 0.0
        %1320 = vmatpush1.msra.mxu0 0.0
        %1321 = vmatprep.subr.mxu0 0.0
        %1322 = vmatpush1.msra.mxu0 0.0
        %1323 = vmatprep.mubr.f32.mxu0 0.0
        %1324 = vmatmul.mubr.f32.gmra.mrb[0].mxu0 %v263
        %v1325 = vpop.f32.mrb[0].mxu0
        %v1326 = vadd.f32 %v259, %v1325
        %v1327 = vpop.f32.mrb[0].mxu0
        %v1328 = vadd.f32 %v259, %v1327
        %1329 = vdwg.mxu0
        %1330 = vmatprep.subr.mxu0 %v224
        %1331 = vmatpush1.msra.mxu0 %v223
        %1332 = vmatprep.subr.mxu0 0.0
        %1333 = vmatpush1.msra.mxu0 0.0
        %1334 = vmatprep.subr.mxu0 0.0
        %1335 = vmatpush1.msra.mxu0 0.0
        %1336 = vmatprep.subr.mxu0 0.0
        %1337 = vmatpush1.msra.mxu0 0.0
        %1338 = vmatprep.subr.mxu0 0.0
        %1339 = vmatpush1.msra.mxu0 0.0
        %1340 = vmatprep.subr.mxu0 0.0
        %1341 = vmatpush1.msra.mxu0 0.0
        %1342 = vmatprep.subr.mxu0 0.0
        %1343 = vmatpush1.msra.mxu0 0.0
        %1344 = vmatprep.subr.mxu0 0.0
        %1345 = vmatpush1.msra.mxu0 0.0
        %1346 = vmatprep.subr.mxu0 0.0
        %1347 = vmatpush1.msra.mxu0 0.0
        %1348 = vmatprep.subr.mxu0 0.0
        %1349 = vmatpush1.msra.mxu0 0.0
        %1350 = vmatprep.subr.mxu0 0.0
        %1351 = vmatpush1.msra.mxu0 0.0
        %1352 = vmatprep.subr.mxu0 0.0
        %1353 = vmatpush1.msra.mxu0 0.0
        %1354 = vmatprep.subr.mxu0 0.0
        %1355 = vmatpush1.msra.mxu0 0.0
        %1356 = vmatprep.subr.mxu0 0.0
        %1357 = vmatpush1.msra.mxu0 0.0
        %1358 = vmatprep.subr.mxu0 0.0
        %1359 = vmatpush1.msra.mxu0 0.0
        %1360 = vmatprep.subr.mxu0 0.0
        %1361 = vmatpush1.msra.mxu0 0.0
        %1362 = vmatprep.subr.mxu0 0.0
        %1363 = vmatpush1.msra.mxu0 0.0
        %1364 = vmatprep.subr.mxu0 0.0
        %1365 = vmatpush1.msra.mxu0 0.0
        %1366 = vmatprep.subr.mxu0 0.0
        %1367 = vmatpush1.msra.mxu0 0.0
        %1368 = vmatprep.subr.mxu0 0.0
        %1369 = vmatpush1.msra.mxu0 0.0
        %1370 = vmatprep.subr.mxu0 0.0
        %1371 = vmatpush1.msra.mxu0 0.0
        %1372 = vmatprep.subr.mxu0 0.0
        %1373 = vmatpush1.msra.mxu0 0.0
        %1374 = vmatprep.subr.mxu0 0.0
        %1375 = vmatpush1.msra.mxu0 0.0
        %1376 = vmatprep.subr.mxu0 0.0
        %1377 = vmatpush1.msra.mxu0 0.0
        %1378 = vmatprep.subr.mxu0 0.0
        %1379 = vmatpush1.msra.mxu0 0.0
        %1380 = vmatprep.subr.mxu0 0.0
        %1381 = vmatpush1.msra.mxu0 0.0
        %1382 = vmatprep.subr.mxu0 0.0
        %1383 = vmatpush1.msra.mxu0 0.0
        %1384 = vmatprep.subr.mxu0 0.0
        %1385 = vmatpush1.msra.mxu0 0.0
        %1386 = vmatprep.subr.mxu0 0.0
        %1387 = vmatpush1.msra.mxu0 0.0
        %1388 = vmatprep.subr.mxu0 0.0
        %1389 = vmatpush1.msra.mxu0 0.0
        %1390 = vmatprep.subr.mxu0 0.0
        %1391 = vmatpush1.msra.mxu0 0.0
        %1392 = vmatprep.subr.mxu0 0.0
        %1393 = vmatpush1.msra.mxu0 0.0
        %1394 = vmatprep.mubr.f32.mxu0 0.0
        %1395 = vmatmul.mubr.f32.gmra.mrb[0].mxu0 %v263
        %v1396 = vpop.f32.mrb[0].mxu0
        %v1397 = vadd.f32 %v259, %v1396
        %v1398 = vpop.f32.mrb[0].mxu0
        %v1399 = vadd.f32 %v259, %v1398
        %1400 = vdwg.mxu0
        %1401 = vmatprep.subr.mxu0 %v226
        %1402 = vmatpush1.msra.mxu0 %v225
        %1403 = vmatprep.subr.mxu0 0.0
        %1404 = vmatpush1.msra.mxu0 0.0
        %1405 = vmatprep.subr.mxu0 0.0
        %1406 = vmatpush1.msra.mxu0 0.0
        %1407 = vmatprep.subr.mxu0 0.0
        %1408 = vmatpush1.msra.mxu0 0.0
        %1409 = vmatprep.subr.mxu0 0.0
        %1410 = vmatpush1.msra.mxu0 0.0
        %1411 = vmatprep.subr.mxu0 0.0
        %1412 = vmatpush1.msra.mxu0 0.0
        %1413 = vmatprep.subr.mxu0 0.0
        %1414 = vmatpush1.msra.mxu0 0.0
        %1415 = vmatprep.subr.mxu0 0.0
        %1416 = vmatpush1.msra.mxu0 0.0
        %1417 = vmatprep.subr.mxu0 0.0
        %1418 = vmatpush1.msra.mxu0 0.0
        %1419 = vmatprep.subr.mxu0 0.0
        %1420 = vmatpush1.msra.mxu0 0.0
        %1421 = vmatprep.subr.mxu0 0.0
        %1422 = vmatpush1.msra.mxu0 0.0
        %1423 = vmatprep.subr.mxu0 0.0
        %1424 = vmatpush1.msra.mxu0 0.0
        %1425 = vmatprep.subr.mxu0 0.0
        %1426 = vmatpush1.msra.mxu0 0.0
        %1427 = vmatprep.subr.mxu0 0.0
        %1428 = vmatpush1.msra.mxu0 0.0
        %1429 = vmatprep.subr.mxu0 0.0
        %1430 = vmatpush1.msra.mxu0 0.0
        %1431 = vmatprep.subr.mxu0 0.0
        %1432 = vmatpush1.msra.mxu0 0.0
        %1433 = vmatprep.subr.mxu0 0.0
        %1434 = vmatpush1.msra.mxu0 0.0
        %1435 = vmatprep.subr.mxu0 0.0
        %1436 = vmatpush1.msra.mxu0 0.0
        %1437 = vmatprep.subr.mxu0 0.0
        %1438 = vmatpush1.msra.mxu0 0.0
        %1439 = vmatprep.subr.mxu0 0.0
        %1440 = vmatpush1.msra.mxu0 0.0
        %1441 = vmatprep.subr.mxu0 0.0
        %1442 = vmatpush1.msra.mxu0 0.0
        %1443 = vmatprep.subr.mxu0 0.0
        %1444 = vmatpush1.msra.mxu0 0.0
        %1445 = vmatprep.subr.mxu0 0.0
        %1446 = vmatpush1.msra.mxu0 0.0
        %1447 = vmatprep.subr.mxu0 0.0
        %1448 = vmatpush1.msra.mxu0 0.0
        %1449 = vmatprep.subr.mxu0 0.0
        %1450 = vmatpush1.msra.mxu0 0.0
        %1451 = vmatprep.subr.mxu0 0.0
        %1452 = vmatpush1.msra.mxu0 0.0
        %1453 = vmatprep.subr.mxu0 0.0
        %1454 = vmatpush1.msra.mxu0 0.0
        %1455 = vmatprep.subr.mxu0 0.0
        %1456 = vmatpush1.msra.mxu0 0.0
        %1457 = vmatprep.subr.mxu0 0.0
        %1458 = vmatpush1.msra.mxu0 0.0
        %1459 = vmatprep.subr.mxu0 0.0
        %1460 = vmatpush1.msra.mxu0 0.0
        %1461 = vmatprep.subr.mxu0 0.0
        %1462 = vmatpush1.msra.mxu0 0.0
        %1463 = vmatprep.subr.mxu0 0.0
        %1464 = vmatpush1.msra.mxu0 0.0
        %1465 = vmatprep.mubr.f32.mxu0 0.0
        %1466 = vmatmul.mubr.f32.gmra.mrb[0].mxu0 %v263
        %v1467 = vpop.f32.mrb[0].mxu0
        %v1468 = vadd.f32 %v259, %v1467
        %v1469 = vpop.f32.mrb[0].mxu0
        %v1470 = vadd.f32 %v259, %v1469
        %1471 = vdwg.mxu0
        %1472 = vmatprep.subr.mxu0 %v228
        %1473 = vmatpush1.msra.mxu0 %v227
        %1474 = vmatprep.subr.mxu0 0.0
        %1475 = vmatpush1.msra.mxu0 0.0
        %1476 = vmatprep.subr.mxu0 0.0
        %1477 = vmatpush1.msra.mxu0 0.0
        %1478 = vmatprep.subr.mxu0 0.0
        %1479 = vmatpush1.msra.mxu0 0.0
        %1480 = vmatprep.subr.mxu0 0.0
        %1481 = vmatpush1.msra.mxu0 0.0
        %1482 = vmatprep.subr.mxu0 0.0
        %1483 = vmatpush1.msra.mxu0 0.0
        %1484 = vmatprep.subr.mxu0 0.0
        %1485 = vmatpush1.msra.mxu0 0.0
        %1486 = vmatprep.subr.mxu0 0.0
        %1487 = vmatpush1.msra.mxu0 0.0
        %1488 = vmatprep.subr.mxu0 0.0
        %1489 = vmatpush1.msra.mxu0 0.0
        %1490 = vmatprep.subr.mxu0 0.0
        %1491 = vmatpush1.msra.mxu0 0.0
        %1492 = vmatprep.subr.mxu0 0.0
        %1493 = vmatpush1.msra.mxu0 0.0
        %1494 = vmatprep.subr.mxu0 0.0
        %1495 = vmatpush1.msra.mxu0 0.0
        %1496 = vmatprep.subr.mxu0 0.0
        %1497 = vmatpush1.msra.mxu0 0.0
        %1498 = vmatprep.subr.mxu0 0.0
        %1499 = vmatpush1.msra.mxu0 0.0
        %1500 = vmatprep.subr.mxu0 0.0
        %1501 = vmatpush1.msra.mxu0 0.0
        %1502 = vmatprep.subr.mxu0 0.0
        %1503 = vmatpush1.msra.mxu0 0.0
        %1504 = vmatprep.subr.mxu0 0.0
        %1505 = vmatpush1.msra.mxu0 0.0
        %1506 = vmatprep.subr.mxu0 0.0
        %1507 = vmatpush1.msra.mxu0 0.0
        %1508 = vmatprep.subr.mxu0 0.0
        %1509 = vmatpush1.msra.mxu0 0.0
        %1510 = vmatprep.subr.mxu0 0.0
        %1511 = vmatpush1.msra.mxu0 0.0
        %1512 = vmatprep.subr.mxu0 0.0
        %1513 = vmatpush1.msra.mxu0 0.0
        %1514 = vmatprep.subr.mxu0 0.0
        %1515 = vmatpush1.msra.mxu0 0.0
        %1516 = vmatprep.subr.mxu0 0.0
        %1517 = vmatpush1.msra.mxu0 0.0
        %1518 = vmatprep.subr.mxu0 0.0
        %1519 = vmatpush1.msra.mxu0 0.0
        %1520 = vmatprep.subr.mxu0 0.0
        %1521 = vmatpush1.msra.mxu0 0.0
        %1522 = vmatprep.subr.mxu0 0.0
        %1523 = vmatpush1.msra.mxu0 0.0
        %1524 = vmatprep.subr.mxu0 0.0
        %1525 = vmatpush1.msra.mxu0 0.0
        %1526 = vmatprep.subr.mxu0 0.0
        %1527 = vmatpush1.msra.mxu0 0.0
        %1528 = vmatprep.subr.mxu0 0.0
        %1529 = vmatpush1.msra.mxu0 0.0
        %1530 = vmatprep.subr.mxu0 0.0
        %1531 = vmatpush1.msra.mxu0 0.0
        %1532 = vmatprep.subr.mxu0 0.0
        %1533 = vmatpush1.msra.mxu0 0.0
        %1534 = vmatprep.subr.mxu0 0.0
        %1535 = vmatpush1.msra.mxu0 0.0
        %1536 = vmatprep.mubr.f32.mxu0 0.0
        %1537 = vmatmul.mubr.f32.gmra.mrb[0].mxu0 %v263
        %v1538 = vpop.f32.mrb[0].mxu0
        %v1539 = vadd.f32 %v259, %v1538
        %v1540 = vpop.f32.mrb[0].mxu0
        %v1541 = vadd.f32 %v259, %v1540
        %1542 = vdwg.mxu0
        %1543 = vmatprep.subr.mxu0 %v230
        %1544 = vmatpush1.msra.mxu0 %v229
        %1545 = vmatprep.subr.mxu0 0.0
        %1546 = vmatpush1.msra.mxu0 0.0
        %1547 = vmatprep.subr.mxu0 0.0
        %1548 = vmatpush1.msra.mxu0 0.0
        %1549 = vmatprep.subr.mxu0 0.0
        %1550 = vmatpush1.msra.mxu0 0.0
        %1551 = vmatprep.subr.mxu0 0.0
        %1552 = vmatpush1.msra.mxu0 0.0
        %1553 = vmatprep.subr.mxu0 0.0
        %1554 = vmatpush1.msra.mxu0 0.0
        %1555 = vmatprep.subr.mxu0 0.0
        %1556 = vmatpush1.msra.mxu0 0.0
        %1557 = vmatprep.subr.mxu0 0.0
        %1558 = vmatpush1.msra.mxu0 0.0
        %1559 = vmatprep.subr.mxu0 0.0
        %1560 = vmatpush1.msra.mxu0 0.0
        %1561 = vmatprep.subr.mxu0 0.0
        %1562 = vmatpush1.msra.mxu0 0.0
        %1563 = vmatprep.subr.mxu0 0.0
        %1564 = vmatpush1.msra.mxu0 0.0
        %1565 = vmatprep.subr.mxu0 0.0
        %1566 = vmatpush1.msra.mxu0 0.0
        %1567 = vmatprep.subr.mxu0 0.0
        %1568 = vmatpush1.msra.mxu0 0.0
        %1569 = vmatprep.subr.mxu0 0.0
        %1570 = vmatpush1.msra.mxu0 0.0
        %1571 = vmatprep.subr.mxu0 0.0
        %1572 = vmatpush1.msra.mxu0 0.0
        %1573 = vmatprep.subr.mxu0 0.0
        %1574 = vmatpush1.msra.mxu0 0.0
        %1575 = vmatprep.subr.mxu0 0.0
        %1576 = vmatpush1.msra.mxu0 0.0
        %1577 = vmatprep.subr.mxu0 0.0
        %1578 = vmatpush1.msra.mxu0 0.0
        %1579 = vmatprep.subr.mxu0 0.0
        %1580 = vmatpush1.msra.mxu0 0.0
        %1581 = vmatprep.subr.mxu0 0.0
        %1582 = vmatpush1.msra.mxu0 0.0
        %1583 = vmatprep.subr.mxu0 0.0
        %1584 = vmatpush1.msra.mxu0 0.0
        %1585 = vmatprep.subr.mxu0 0.0
        %1586 = vmatpush1.msra.mxu0 0.0
        %1587 = vmatprep.subr.mxu0 0.0
        %1588 = vmatpush1.msra.mxu0 0.0
        %1589 = vmatprep.subr.mxu0 0.0
        %1590 = vmatpush1.msra.mxu0 0.0
        %1591 = vmatprep.subr.mxu0 0.0
        %1592 = vmatpush1.msra.mxu0 0.0
        %1593 = vmatprep.subr.mxu0 0.0
        %1594 = vmatpush1.msra.mxu0 0.0
        %1595 = vmatprep.subr.mxu0 0.0
        %1596 = vmatpush1.msra.mxu0 0.0
        %1597 = vmatprep.subr.mxu0 0.0
        %1598 = vmatpush1.msra.mxu0 0.0
        %1599 = vmatprep.subr.mxu0 0.0
        %1600 = vmatpush1.msra.mxu0 0.0
        %1601 = vmatprep.subr.mxu0 0.0
        %1602 = vmatpush1.msra.mxu0 0.0
        %1603 = vmatprep.subr.mxu0 0.0
        %1604 = vmatpush1.msra.mxu0 0.0
        %1605 = vmatprep.subr.mxu0 0.0
        %1606 = vmatpush1.msra.mxu0 0.0
        %1607 = vmatprep.mubr.f32.mxu0 0.0
        %1608 = vmatmul.mubr.f32.gmra.mrb[0].mxu0 %v263
        %v1609 = vpop.f32.mrb[0].mxu0
        %v1610 = vadd.f32 %v259, %v1609
        %v1611 = vpop.f32.mrb[0].mxu0
        %v1612 = vadd.f32 %v259, %v1611
        %1613 = vdwg.mxu0
        %1614 = vmatprep.subr.mxu0 %v232
        %1615 = vmatpush1.msra.mxu0 %v231
        %1616 = vmatprep.subr.mxu0 0.0
        %1617 = vmatpush1.msra.mxu0 0.0
        %1618 = vmatprep.subr.mxu0 0.0
        %1619 = vmatpush1.msra.mxu0 0.0
        %1620 = vmatprep.subr.mxu0 0.0
        %1621 = vmatpush1.msra.mxu0 0.0
        %1622 = vmatprep.subr.mxu0 0.0
        %1623 = vmatpush1.msra.mxu0 0.0
        %1624 = vmatprep.subr.mxu0 0.0
        %1625 = vmatpush1.msra.mxu0 0.0
        %1626 = vmatprep.subr.mxu0 0.0
        %1627 = vmatpush1.msra.mxu0 0.0
        %1628 = vmatprep.subr.mxu0 0.0
        %1629 = vmatpush1.msra.mxu0 0.0
        %1630 = vmatprep.subr.mxu0 0.0
        %1631 = vmatpush1.msra.mxu0 0.0
        %1632 = vmatprep.subr.mxu0 0.0
        %1633 = vmatpush1.msra.mxu0 0.0
        %1634 = vmatprep.subr.mxu0 0.0
        %1635 = vmatpush1.msra.mxu0 0.0
        %1636 = vmatprep.subr.mxu0 0.0
        %1637 = vmatpush1.msra.mxu0 0.0
        %1638 = vmatprep.subr.mxu0 0.0
        %1639 = vmatpush1.msra.mxu0 0.0
        %1640 = vmatprep.subr.mxu0 0.0
        %1641 = vmatpush1.msra.mxu0 0.0
        %1642 = vmatprep.subr.mxu0 0.0
        %1643 = vmatpush1.msra.mxu0 0.0
        %1644 = vmatprep.subr.mxu0 0.0
        %1645 = vmatpush1.msra.mxu0 0.0
        %1646 = vmatprep.subr.mxu0 0.0
        %1647 = vmatpush1.msra.mxu0 0.0
        %1648 = vmatprep.subr.mxu0 0.0
        %1649 = vmatpush1.msra.mxu0 0.0
        %1650 = vmatprep.subr.mxu0 0.0
        %1651 = vmatpush1.msra.mxu0 0.0
        %1652 = vmatprep.subr.mxu0 0.0
        %1653 = vmatpush1.msra.mxu0 0.0
        %1654 = vmatprep.subr.mxu0 0.0
        %1655 = vmatpush1.msra.mxu0 0.0
        %1656 = vmatprep.subr.mxu0 0.0
        %1657 = vmatpush1.msra.mxu0 0.0
        %1658 = vmatprep.subr.mxu0 0.0
        %1659 = vmatpush1.msra.mxu0 0.0
        %1660 = vmatprep.subr.mxu0 0.0
        %1661 = vmatpush1.msra.mxu0 0.0
        %1662 = vmatprep.subr.mxu0 0.0
        %1663 = vmatpush1.msra.mxu0 0.0
        %1664 = vmatprep.subr.mxu0 0.0
        %1665 = vmatpush1.msra.mxu0 0.0
        %1666 = vmatprep.subr.mxu0 0.0
        %1667 = vmatpush1.msra.mxu0 0.0
        %1668 = vmatprep.subr.mxu0 0.0
        %1669 = vmatpush1.msra.mxu0 0.0
        %1670 = vmatprep.subr.mxu0 0.0
        %1671 = vmatpush1.msra.mxu0 0.0
        %1672 = vmatprep.subr.mxu0 0.0
        %1673 = vmatpush1.msra.mxu0 0.0
        %1674 = vmatprep.subr.mxu0 0.0
        %1675 = vmatpush1.msra.mxu0 0.0
        %1676 = vmatprep.subr.mxu0 0.0
        %1677 = vmatpush1.msra.mxu0 0.0
        %1678 = vmatprep.mubr.f32.mxu0 0.0
        %1679 = vmatmul.mubr.f32.gmra.mrb[0].mxu0 %v263
        %v1680 = vpop.f32.mrb[0].mxu0
        %v1681 = vadd.f32 %v259, %v1680
        %v1682 = vpop.f32.mrb[0].mxu0
        %v1683 = vadd.f32 %v259, %v1682
        %1684 = vdwg.mxu0
        %1685 = vmatprep.subr.mxu0 %v234
        %1686 = vmatpush1.msra.mxu0 %v233
        %1687 = vmatprep.subr.mxu0 0.0
        %1688 = vmatpush1.msra.mxu0 0.0
        %1689 = vmatprep.subr.mxu0 0.0
        %1690 = vmatpush1.msra.mxu0 0.0
        %1691 = vmatprep.subr.mxu0 0.0
        %1692 = vmatpush1.msra.mxu0 0.0
        %1693 = vmatprep.subr.mxu0 0.0
        %1694 = vmatpush1.msra.mxu0 0.0
        %1695 = vmatprep.subr.mxu0 0.0
        %1696 = vmatpush1.msra.mxu0 0.0
        %1697 = vmatprep.subr.mxu0 0.0
        %1698 = vmatpush1.msra.mxu0 0.0
        %1699 = vmatprep.subr.mxu0 0.0
        %1700 = vmatpush1.msra.mxu0 0.0
        %1701 = vmatprep.subr.mxu0 0.0
        %1702 = vmatpush1.msra.mxu0 0.0
        %1703 = vmatprep.subr.mxu0 0.0
        %1704 = vmatpush1.msra.mxu0 0.0
        %1705 = vmatprep.subr.mxu0 0.0
        %1706 = vmatpush1.msra.mxu0 0.0
        %1707 = vmatprep.subr.mxu0 0.0
        %1708 = vmatpush1.msra.mxu0 0.0
        %1709 = vmatprep.subr.mxu0 0.0
        %1710 = vmatpush1.msra.mxu0 0.0
        %1711 = vmatprep.subr.mxu0 0.0
        %1712 = vmatpush1.msra.mxu0 0.0
        %1713 = vmatprep.subr.mxu0 0.0
        %1714 = vmatpush1.msra.mxu0 0.0
        %1715 = vmatprep.subr.mxu0 0.0
        %1716 = vmatpush1.msra.mxu0 0.0
        %1717 = vmatprep.subr.mxu0 0.0
        %1718 = vmatpush1.msra.mxu0 0.0
        %1719 = vmatprep.subr.mxu0 0.0
        %1720 = vmatpush1.msra.mxu0 0.0
        %1721 = vmatprep.subr.mxu0 0.0
        %1722 = vmatpush1.msra.mxu0 0.0
        %1723 = vmatprep.subr.mxu0 0.0
        %1724 = vmatpush1.msra.mxu0 0.0
        %1725 = vmatprep.subr.mxu0 0.0
        %1726 = vmatpush1.msra.mxu0 0.0
        %1727 = vmatprep.subr.mxu0 0.0
        %1728 = vmatpush1.msra.mxu0 0.0
        %1729 = vmatprep.subr.mxu0 0.0
        %1730 = vmatpush1.msra.mxu0 0.0
        %1731 = vmatprep.subr.mxu0 0.0
        %1732 = vmatpush1.msra.mxu0 0.0
        %1733 = vmatprep.subr.mxu0 0.0
        %1734 = vmatpush1.msra.mxu0 0.0
        %1735 = vmatprep.subr.mxu0 0.0
        %1736 = vmatpush1.msra.mxu0 0.0
        %1737 = vmatprep.subr.mxu0 0.0
        %1738 = vmatpush1.msra.mxu0 0.0
        %1739 = vmatprep.subr.mxu0 0.0
        %1740 = vmatpush1.msra.mxu0 0.0
        %1741 = vmatprep.subr.mxu0 0.0
        %1742 = vmatpush1.msra.mxu0 0.0
        %1743 = vmatprep.subr.mxu0 0.0
        %1744 = vmatpush1.msra.mxu0 0.0
        %1745 = vmatprep.subr.mxu0 0.0
        %1746 = vmatpush1.msra.mxu0 0.0
        %1747 = vmatprep.subr.mxu0 0.0
        %1748 = vmatpush1.msra.mxu0 0.0
        %1749 = vmatprep.mubr.f32.mxu0 0.0
        %1750 = vmatmul.mubr.f32.gmra.mrb[0].mxu0 %v263
        %v1751 = vpop.f32.mrb[0].mxu0
        %v1752 = vadd.f32 %v259, %v1751
        %v1753 = vpop.f32.mrb[0].mxu0
        %v1754 = vadd.f32 %v259, %v1753
        %1755 = vdwg.mxu0
        %1756 = vmatprep.subr.mxu0 %v236
        %1757 = vmatpush1.msra.mxu0 %v235
        %1758 = vmatprep.subr.mxu0 0.0
        %1759 = vmatpush1.msra.mxu0 0.0
        %1760 = vmatprep.subr.mxu0 0.0
        %1761 = vmatpush1.msra.mxu0 0.0
        %1762 = vmatprep.subr.mxu0 0.0
        %1763 = vmatpush1.msra.mxu0 0.0
        %1764 = vmatprep.subr.mxu0 0.0
        %1765 = vmatpush1.msra.mxu0 0.0
        %1766 = vmatprep.subr.mxu0 0.0
        %1767 = vmatpush1.msra.mxu0 0.0
        %1768 = vmatprep.subr.mxu0 0.0
        %1769 = vmatpush1.msra.mxu0 0.0
        %1770 = vmatprep.subr.mxu0 0.0
        %1771 = vmatpush1.msra.mxu0 0.0
        %1772 = vmatprep.subr.mxu0 0.0
        %1773 = vmatpush1.msra.mxu0 0.0
        %1774 = vmatprep.subr.mxu0 0.0
        %1775 = vmatpush1.msra.mxu0 0.0
        %1776 = vmatprep.subr.mxu0 0.0
        %1777 = vmatpush1.msra.mxu0 0.0
        %1778 = vmatprep.subr.mxu0 0.0
        %1779 = vmatpush1.msra.mxu0 0.0
        %1780 = vmatprep.subr.mxu0 0.0
        %1781 = vmatpush1.msra.mxu0 0.0
        %1782 = vmatprep.subr.mxu0 0.0
        %1783 = vmatpush1.msra.mxu0 0.0
        %1784 = vmatprep.subr.mxu0 0.0
        %1785 = vmatpush1.msra.mxu0 0.0
        %1786 = vmatprep.subr.mxu0 0.0
        %1787 = vmatpush1.msra.mxu0 0.0
        %1788 = vmatprep.subr.mxu0 0.0
        %1789 = vmatpush1.msra.mxu0 0.0
        %1790 = vmatprep.subr.mxu0 0.0
        %1791 = vmatpush1.msra.mxu0 0.0
        %1792 = vmatprep.subr.mxu0 0.0
        %1793 = vmatpush1.msra.mxu0 0.0
        %1794 = vmatprep.subr.mxu0 0.0
        %1795 = vmatpush1.msra.mxu0 0.0
        %1796 = vmatprep.subr.mxu0 0.0
        %1797 = vmatpush1.msra.mxu0 0.0
        %1798 = vmatprep.subr.mxu0 0.0
        %1799 = vmatpush1.msra.mxu0 0.0
        %1800 = vmatprep.subr.mxu0 0.0
        %1801 = vmatpush1.msra.mxu0 0.0
        %1802 = vmatprep.subr.mxu0 0.0
        %1803 = vmatpush1.msra.mxu0 0.0
        %1804 = vmatprep.subr.mxu0 0.0
        %1805 = vmatpush1.msra.mxu0 0.0
        %1806 = vmatprep.subr.mxu0 0.0
        %1807 = vmatpush1.msra.mxu0 0.0
        %1808 = vmatprep.subr.mxu0 0.0
        %1809 = vmatpush1.msra.mxu0 0.0
        %1810 = vmatprep.subr.mxu0 0.0
        %1811 = vmatpush1.msra.mxu0 0.0
        %1812 = vmatprep.subr.mxu0 0.0
        %1813 = vmatpush1.msra.mxu0 0.0
        %1814 = vmatprep.subr.mxu0 0.0
        %1815 = vmatpush1.msra.mxu0 0.0
        %1816 = vmatprep.subr.mxu0 0.0
        %1817 = vmatpush1.msra.mxu0 0.0
        %1818 = vmatprep.subr.mxu0 0.0
        %1819 = vmatpush1.msra.mxu0 0.0
        %1820 = vmatprep.mubr.f32.mxu0 0.0
        %1821 = vmatmul.mubr.f32.gmra.mrb[0].mxu0 %v263
        %v1822 = vpop.f32.mrb[0].mxu0
        %v1823 = vadd.f32 %v259, %v1822
        %v1824 = vpop.f32.mrb[0].mxu0
        %v1825 = vadd.f32 %v259, %v1824
        %1826 = vdwg.mxu0
        %1827 = vmatprep.subr.mxu0 %v238
        %1828 = vmatpush1.msra.mxu0 %v237
        %1829 = vmatprep.subr.mxu0 0.0
        %1830 = vmatpush1.msra.mxu0 0.0
        %1831 = vmatprep.subr.mxu0 0.0
        %1832 = vmatpush1.msra.mxu0 0.0
        %1833 = vmatprep.subr.mxu0 0.0
        %1834 = vmatpush1.msra.mxu0 0.0
        %1835 = vmatprep.subr.mxu0 0.0
        %1836 = vmatpush1.msra.mxu0 0.0
        %1837 = vmatprep.subr.mxu0 0.0
        %1838 = vmatpush1.msra.mxu0 0.0
        %1839 = vmatprep.subr.mxu0 0.0
        %1840 = vmatpush1.msra.mxu0 0.0
        %1841 = vmatprep.subr.mxu0 0.0
        %1842 = vmatpush1.msra.mxu0 0.0
        %1843 = vmatprep.subr.mxu0 0.0
        %1844 = vmatpush1.msra.mxu0 0.0
        %1845 = vmatprep.subr.mxu0 0.0
        %1846 = vmatpush1.msra.mxu0 0.0
        %1847 = vmatprep.subr.mxu0 0.0
        %1848 = vmatpush1.msra.mxu0 0.0
        %1849 = vmatprep.subr.mxu0 0.0
        %1850 = vmatpush1.msra.mxu0 0.0
        %1851 = vmatprep.subr.mxu0 0.0
        %1852 = vmatpush1.msra.mxu0 0.0
        %1853 = vmatprep.subr.mxu0 0.0
        %1854 = vmatpush1.msra.mxu0 0.0
        %1855 = vmatprep.subr.mxu0 0.0
        %1856 = vmatpush1.msra.mxu0 0.0
        %1857 = vmatprep.subr.mxu0 0.0
        %1858 = vmatpush1.msra.mxu0 0.0
        %1859 = vmatprep.subr.mxu0 0.0
        %1860 = vmatpush1.msra.mxu0 0.0
        %1861 = vmatprep.subr.mxu0 0.0
        %1862 = vmatpush1.msra.mxu0 0.0
        %1863 = vmatprep.subr.mxu0 0.0
        %1864 = vmatpush1.msra.mxu0 0.0
        %1865 = vmatprep.subr.mxu0 0.0
        %1866 = vmatpush1.msra.mxu0 0.0
        %1867 = vmatprep.subr.mxu0 0.0
        %1868 = vmatpush1.msra.mxu0 0.0
        %1869 = vmatprep.subr.mxu0 0.0
        %1870 = vmatpush1.msra.mxu0 0.0
        %1871 = vmatprep.subr.mxu0 0.0
        %1872 = vmatpush1.msra.mxu0 0.0
        %1873 = vmatprep.subr.mxu0 0.0
        %1874 = vmatpush1.msra.mxu0 0.0
        %1875 = vmatprep.subr.mxu0 0.0
        %1876 = vmatpush1.msra.mxu0 0.0
        %1877 = vmatprep.subr.mxu0 0.0
        %1878 = vmatpush1.msra.mxu0 0.0
        %1879 = vmatprep.subr.mxu0 0.0
        %1880 = vmatpush1.msra.mxu0 0.0
        %1881 = vmatprep.subr.mxu0 0.0
        %1882 = vmatpush1.msra.mxu0 0.0
        %1883 = vmatprep.subr.mxu0 0.0
        %1884 = vmatpush1.msra.mxu0 0.0
        %1885 = vmatprep.subr.mxu0 0.0
        %1886 = vmatpush1.msra.mxu0 0.0
        %1887 = vmatprep.subr.mxu0 0.0
        %1888 = vmatpush1.msra.mxu0 0.0
        %1889 = vmatprep.subr.mxu0 0.0
        %1890 = vmatpush1.msra.mxu0 0.0
        %1891 = vmatprep.mubr.f32.mxu0 0.0
        %1892 = vmatmul.mubr.f32.gmra.mrb[0].mxu0 %v263
        %v1893 = vpop.f32.mrb[0].mxu0
        %v1894 = vadd.f32 %v259, %v1893
        %v1895 = vpop.f32.mrb[0].mxu0
        %v1896 = vadd.f32 %v259, %v1895
        %1897 = vdwg.mxu0
        %1898 = vmatprep.subr.mxu0 %v240
        %1899 = vmatpush1.msra.mxu0 %v239
        %1900 = vmatprep.subr.mxu0 0.0
        %1901 = vmatpush1.msra.mxu0 0.0
        %1902 = vmatprep.subr.mxu0 0.0
        %1903 = vmatpush1.msra.mxu0 0.0
        %1904 = vmatprep.subr.mxu0 0.0
        %1905 = vmatpush1.msra.mxu0 0.0
        %1906 = vmatprep.subr.mxu0 0.0
        %1907 = vmatpush1.msra.mxu0 0.0
        %1908 = vmatprep.subr.mxu0 0.0
        %1909 = vmatpush1.msra.mxu0 0.0
        %1910 = vmatprep.subr.mxu0 0.0
        %1911 = vmatpush1.msra.mxu0 0.0
        %1912 = vmatprep.subr.mxu0 0.0
        %1913 = vmatpush1.msra.mxu0 0.0
        %1914 = vmatprep.subr.mxu0 0.0
        %1915 = vmatpush1.msra.mxu0 0.0
        %1916 = vmatprep.subr.mxu0 0.0
        %1917 = vmatpush1.msra.mxu0 0.0
        %1918 = vmatprep.subr.mxu0 0.0
        %1919 = vmatpush1.msra.mxu0 0.0
        %1920 = vmatprep.subr.mxu0 0.0
        %1921 = vmatpush1.msra.mxu0 0.0
        %1922 = vmatprep.subr.mxu0 0.0
        %1923 = vmatpush1.msra.mxu0 0.0
        %1924 = vmatprep.subr.mxu0 0.0
        %1925 = vmatpush1.msra.mxu0 0.0
        %1926 = vmatprep.subr.mxu0 0.0
        %1927 = vmatpush1.msra.mxu0 0.0
        %1928 = vmatprep.subr.mxu0 0.0
        %1929 = vmatpush1.msra.mxu0 0.0
        %1930 = vmatprep.subr.mxu0 0.0
        %1931 = vmatpush1.msra.mxu0 0.0
        %1932 = vmatprep.subr.mxu0 0.0
        %1933 = vmatpush1.msra.mxu0 0.0
        %1934 = vmatprep.subr.mxu0 0.0
        %1935 = vmatpush1.msra.mxu0 0.0
        %1936 = vmatprep.subr.mxu0 0.0
        %1937 = vmatpush1.msra.mxu0 0.0
        %1938 = vmatprep.subr.mxu0 0.0
        %1939 = vmatpush1.msra.mxu0 0.0
        %1940 = vmatprep.subr.mxu0 0.0
        %1941 = vmatpush1.msra.mxu0 0.0
        %1942 = vmatprep.subr.mxu0 0.0
        %1943 = vmatpush1.msra.mxu0 0.0
        %1944 = vmatprep.subr.mxu0 0.0
        %1945 = vmatpush1.msra.mxu0 0.0
        %1946 = vmatprep.subr.mxu0 0.0
        %1947 = vmatpush1.msra.mxu0 0.0
        %1948 = vmatprep.subr.mxu0 0.0
        %1949 = vmatpush1.msra.mxu0 0.0
        %1950 = vmatprep.subr.mxu0 0.0
        %1951 = vmatpush1.msra.mxu0 0.0
        %1952 = vmatprep.subr.mxu0 0.0
        %1953 = vmatpush1.msra.mxu0 0.0
        %1954 = vmatprep.subr.mxu0 0.0
        %1955 = vmatpush1.msra.mxu0 0.0
        %1956 = vmatprep.subr.mxu0 0.0
        %1957 = vmatpush1.msra.mxu0 0.0
        %1958 = vmatprep.subr.mxu0 0.0
        %1959 = vmatpush1.msra.mxu0 0.0
        %1960 = vmatprep.subr.mxu0 0.0
        %1961 = vmatpush1.msra.mxu0 0.0
        %1962 = vmatprep.mubr.f32.mxu0 0.0
        %1963 = vmatmul.mubr.f32.gmra.mrb[0].mxu0 %v263
        %v1964 = vpop.f32.mrb[0].mxu0
        %v1965 = vadd.f32 %v259, %v1964
        %v1966 = vpop.f32.mrb[0].mxu0
        %v1967 = vadd.f32 %v259, %v1966
        %1968 = vdwg.mxu0
        %1969 = vmatprep.subr.mxu0 %v242
        %1970 = vmatpush1.msra.mxu0 %v241
        %1971 = vmatprep.subr.mxu0 0.0
        %1972 = vmatpush1.msra.mxu0 0.0
        %1973 = vmatprep.subr.mxu0 0.0
        %1974 = vmatpush1.msra.mxu0 0.0
        %1975 = vmatprep.subr.mxu0 0.0
        %1976 = vmatpush1.msra.mxu0 0.0
        %1977 = vmatprep.subr.mxu0 0.0
        %1978 = vmatpush1.msra.mxu0 0.0
        %1979 = vmatprep.subr.mxu0 0.0
        %1980 = vmatpush1.msra.mxu0 0.0
        %1981 = vmatprep.subr.mxu0 0.0
        %1982 = vmatpush1.msra.mxu0 0.0
        %1983 = vmatprep.subr.mxu0 0.0
        %1984 = vmatpush1.msra.mxu0 0.0
        %1985 = vmatprep.subr.mxu0 0.0
        %1986 = vmatpush1.msra.mxu0 0.0
        %1987 = vmatprep.subr.mxu0 0.0
        %1988 = vmatpush1.msra.mxu0 0.0
        %1989 = vmatprep.subr.mxu0 0.0
        %1990 = vmatpush1.msra.mxu0 0.0
        %1991 = vmatprep.subr.mxu0 0.0
        %1992 = vmatpush1.msra.mxu0 0.0
        %1993 = vmatprep.subr.mxu0 0.0
        %1994 = vmatpush1.msra.mxu0 0.0
        %1995 = vmatprep.subr.mxu0 0.0
        %1996 = vmatpush1.msra.mxu0 0.0
        %1997 = vmatprep.subr.mxu0 0.0
        %1998 = vmatpush1.msra.mxu0 0.0
        %1999 = vmatprep.subr.mxu0 0.0
        %2000 = vmatpush1.msra.mxu0 0.0
        %2001 = vmatprep.subr.mxu0 0.0
        %2002 = vmatpush1.msra.mxu0 0.0
        %2003 = vmatprep.subr.mxu0 0.0
        %2004 = vmatpush1.msra.mxu0 0.0
        %2005 = vmatprep.subr.mxu0 0.0
        %2006 = vmatpush1.msra.mxu0 0.0
        %2007 = vmatprep.subr.mxu0 0.0
        %2008 = vmatpush1.msra.mxu0 0.0
        %2009 = vmatprep.subr.mxu0 0.0
        %2010 = vmatpush1.msra.mxu0 0.0
        %2011 = vmatprep.subr.mxu0 0.0
        %2012 = vmatpush1.msra.mxu0 0.0
        %2013 = vmatprep.subr.mxu0 0.0
        %2014 = vmatpush1.msra.mxu0 0.0
        %2015 = vmatprep.subr.mxu0 0.0
        %2016 = vmatpush1.msra.mxu0 0.0
        %2017 = vmatprep.subr.mxu0 0.0
        %2018 = vmatpush1.msra.mxu0 0.0
        %2019 = vmatprep.subr.mxu0 0.0
        %2020 = vmatpush1.msra.mxu0 0.0
        %2021 = vmatprep.subr.mxu0 0.0
        %2022 = vmatpush1.msra.mxu0 0.0
        %2023 = vmatprep.subr.mxu0 0.0
        %2024 = vmatpush1.msra.mxu0 0.0
        %2025 = vmatprep.subr.mxu0 0.0
        %2026 = vmatpush1.msra.mxu0 0.0
        %2027 = vmatprep.subr.mxu0 0.0
        %2028 = vmatpush1.msra.mxu0 0.0
        %2029 = vmatprep.subr.mxu0 0.0
        %2030 = vmatpush1.msra.mxu0 0.0
        %2031 = vmatprep.subr.mxu0 0.0
        %2032 = vmatpush1.msra.mxu0 0.0
        %2033 = vmatprep.mubr.f32.mxu0 0.0
        %2034 = vmatmul.mubr.f32.gmra.mrb[0].mxu0 %v263
        %v2035 = vpop.f32.mrb[0].mxu0
        %v2036 = vadd.f32 %v259, %v2035
        %v2037 = vpop.f32.mrb[0].mxu0
        %v2038 = vadd.f32 %v259, %v2037
        %2039 = vdwg.mxu0
        %2040 = vmatprep.subr.mxu0 %v244
        %2041 = vmatpush1.msra.mxu0 %v243
        %2042 = vmatprep.subr.mxu0 0.0
        %2043 = vmatpush1.msra.mxu0 0.0
        %2044 = vmatprep.subr.mxu0 0.0
        %2045 = vmatpush1.msra.mxu0 0.0
        %2046 = vmatprep.subr.mxu0 0.0
        %2047 = vmatpush1.msra.mxu0 0.0
        %2048 = vmatprep.subr.mxu0 0.0
        %2049 = vmatpush1.msra.mxu0 0.0
        %2050 = vmatprep.subr.mxu0 0.0
        %2051 = vmatpush1.msra.mxu0 0.0
        %2052 = vmatprep.subr.mxu0 0.0
        %2053 = vmatpush1.msra.mxu0 0.0
        %2054 = vmatprep.subr.mxu0 0.0
        %2055 = vmatpush1.msra.mxu0 0.0
        %2056 = vmatprep.subr.mxu0 0.0
        %2057 = vmatpush1.msra.mxu0 0.0
        %2058 = vmatprep.subr.mxu0 0.0
        %2059 = vmatpush1.msra.mxu0 0.0
        %2060 = vmatprep.subr.mxu0 0.0
        %2061 = vmatpush1.msra.mxu0 0.0
        %2062 = vmatprep.subr.mxu0 0.0
        %2063 = vmatpush1.msra.mxu0 0.0
        %2064 = vmatprep.subr.mxu0 0.0
        %2065 = vmatpush1.msra.mxu0 0.0
        %2066 = vmatprep.subr.mxu0 0.0
        %2067 = vmatpush1.msra.mxu0 0.0
        %2068 = vmatprep.subr.mxu0 0.0
        %2069 = vmatpush1.msra.mxu0 0.0
        %2070 = vmatprep.subr.mxu0 0.0
        %2071 = vmatpush1.msra.mxu0 0.0
        %2072 = vmatprep.subr.mxu0 0.0
        %2073 = vmatpush1.msra.mxu0 0.0
        %2074 = vmatprep.subr.mxu0 0.0
        %2075 = vmatpush1.msra.mxu0 0.0
        %2076 = vmatprep.subr.mxu0 0.0
        %2077 = vmatpush1.msra.mxu0 0.0
        %2078 = vmatprep.subr.mxu0 0.0
        %2079 = vmatpush1.msra.mxu0 0.0
        %2080 = vmatprep.subr.mxu0 0.0
        %2081 = vmatpush1.msra.mxu0 0.0
        %2082 = vmatprep.subr.mxu0 0.0
        %2083 = vmatpush1.msra.mxu0 0.0
        %2084 = vmatprep.subr.mxu0 0.0
        %2085 = vmatpush1.msra.mxu0 0.0
        %2086 = vmatprep.subr.mxu0 0.0
        %2087 = vmatpush1.msra.mxu0 0.0
        %2088 = vmatprep.subr.mxu0 0.0
        %2089 = vmatpush1.msra.mxu0 0.0
        %2090 = vmatprep.subr.mxu0 0.0
        %2091 = vmatpush1.msra.mxu0 0.0
        %2092 = vmatprep.subr.mxu0 0.0
        %2093 = vmatpush1.msra.mxu0 0.0
        %2094 = vmatprep.subr.mxu0 0.0
        %2095 = vmatpush1.msra.mxu0 0.0
        %2096 = vmatprep.subr.mxu0 0.0
        %2097 = vmatpush1.msra.mxu0 0.0
        %2098 = vmatprep.subr.mxu0 0.0
        %2099 = vmatpush1.msra.mxu0 0.0
        %2100 = vmatprep.subr.mxu0 0.0
        %2101 = vmatpush1.msra.mxu0 0.0
        %2102 = vmatprep.subr.mxu0 0.0
        %2103 = vmatpush1.msra.mxu0 0.0
        %2104 = vmatprep.mubr.f32.mxu0 0.0
        %2105 = vmatmul.mubr.f32.gmra.mrb[0].mxu0 %v263
        %v2106 = vpop.f32.mrb[0].mxu0
        %v2107 = vadd.f32 %v259, %v2106
        %v2108 = vpop.f32.mrb[0].mxu0
        %v2109 = vadd.f32 %v259, %v2108
        %2110 = vdwg.mxu0
        %2111 = vmatprep.subr.mxu0 %v246
        %2112 = vmatpush1.msra.mxu0 %v245
        %2113 = vmatprep.subr.mxu0 0.0
        %2114 = vmatpush1.msra.mxu0 0.0
        %2115 = vmatprep.subr.mxu0 0.0
        %2116 = vmatpush1.msra.mxu0 0.0
        %2117 = vmatprep.subr.mxu0 0.0
        %2118 = vmatpush1.msra.mxu0 0.0
        %2119 = vmatprep.subr.mxu0 0.0
        %2120 = vmatpush1.msra.mxu0 0.0
        %2121 = vmatprep.subr.mxu0 0.0
        %2122 = vmatpush1.msra.mxu0 0.0
        %2123 = vmatprep.subr.mxu0 0.0
        %2124 = vmatpush1.msra.mxu0 0.0
        %2125 = vmatprep.subr.mxu0 0.0
        %2126 = vmatpush1.msra.mxu0 0.0
        %2127 = vmatprep.subr.mxu0 0.0
        %2128 = vmatpush1.msra.mxu0 0.0
        %2129 = vmatprep.subr.mxu0 0.0
        %2130 = vmatpush1.msra.mxu0 0.0
        %2131 = vmatprep.subr.mxu0 0.0
        %2132 = vmatpush1.msra.mxu0 0.0
        %2133 = vmatprep.subr.mxu0 0.0
        %2134 = vmatpush1.msra.mxu0 0.0
        %2135 = vmatprep.subr.mxu0 0.0
        %2136 = vmatpush1.msra.mxu0 0.0
        %2137 = vmatprep.subr.mxu0 0.0
        %2138 = vmatpush1.msra.mxu0 0.0
        %2139 = vmatprep.subr.mxu0 0.0
        %2140 = vmatpush1.msra.mxu0 0.0
        %2141 = vmatprep.subr.mxu0 0.0
        %2142 = vmatpush1.msra.mxu0 0.0
        %2143 = vmatprep.subr.mxu0 0.0
        %2144 = vmatpush1.msra.mxu0 0.0
        %2145 = vmatprep.subr.mxu0 0.0
        %2146 = vmatpush1.msra.mxu0 0.0
        %2147 = vmatprep.subr.mxu0 0.0
        %2148 = vmatpush1.msra.mxu0 0.0
        %2149 = vmatprep.subr.mxu0 0.0
        %2150 = vmatpush1.msra.mxu0 0.0
        %2151 = vmatprep.subr.mxu0 0.0
        %2152 = vmatpush1.msra.mxu0 0.0
        %2153 = vmatprep.subr.mxu0 0.0
        %2154 = vmatpush1.msra.mxu0 0.0
        %2155 = vmatprep.subr.mxu0 0.0
        %2156 = vmatpush1.msra.mxu0 0.0
        %2157 = vmatprep.subr.mxu0 0.0
        %2158 = vmatpush1.msra.mxu0 0.0
        %2159 = vmatprep.subr.mxu0 0.0
        %2160 = vmatpush1.msra.mxu0 0.0
        %2161 = vmatprep.subr.mxu0 0.0
        %2162 = vmatpush1.msra.mxu0 0.0
        %2163 = vmatprep.subr.mxu0 0.0
        %2164 = vmatpush1.msra.mxu0 0.0
        %2165 = vmatprep.subr.mxu0 0.0
        %2166 = vmatpush1.msra.mxu0 0.0
        %2167 = vmatprep.subr.mxu0 0.0
        %2168 = vmatpush1.msra.mxu0 0.0
        %2169 = vmatprep.subr.mxu0 0.0
        %2170 = vmatpush1.msra.mxu0 0.0
        %2171 = vmatprep.subr.mxu0 0.0
        %2172 = vmatpush1.msra.mxu0 0.0
        %2173 = vmatprep.subr.mxu0 0.0
        %2174 = vmatpush1.msra.mxu0 0.0
        %2175 = vmatprep.mubr.f32.mxu0 0.0
        %2176 = vmatmul.mubr.f32.gmra.mrb[0].mxu0 %v263
        %v2177 = vpop.f32.mrb[0].mxu0
        %v2178 = vadd.f32 %v259, %v2177
        %v2179 = vpop.f32.mrb[0].mxu0
        %v2180 = vadd.f32 %v259, %v2179
        %2181 = vdwg.mxu0
        %2182 = vmatprep.subr.mxu0 %v248
        %2183 = vmatpush1.msra.mxu0 %v247
        %2184 = vmatprep.subr.mxu0 0.0
        %2185 = vmatpush1.msra.mxu0 0.0
        %2186 = vmatprep.subr.mxu0 0.0
        %2187 = vmatpush1.msra.mxu0 0.0
        %2188 = vmatprep.subr.mxu0 0.0
        %2189 = vmatpush1.msra.mxu0 0.0
        %2190 = vmatprep.subr.mxu0 0.0
        %2191 = vmatpush1.msra.mxu0 0.0
        %2192 = vmatprep.subr.mxu0 0.0
        %2193 = vmatpush1.msra.mxu0 0.0
        %2194 = vmatprep.subr.mxu0 0.0
        %2195 = vmatpush1.msra.mxu0 0.0
        %2196 = vmatprep.subr.mxu0 0.0
        %2197 = vmatpush1.msra.mxu0 0.0
        %2198 = vmatprep.subr.mxu0 0.0
        %2199 = vmatpush1.msra.mxu0 0.0
        %2200 = vmatprep.subr.mxu0 0.0
        %2201 = vmatpush1.msra.mxu0 0.0
        %2202 = vmatprep.subr.mxu0 0.0
        %2203 = vmatpush1.msra.mxu0 0.0
        %2204 = vmatprep.subr.mxu0 0.0
        %2205 = vmatpush1.msra.mxu0 0.0
        %2206 = vmatprep.subr.mxu0 0.0
        %2207 = vmatpush1.msra.mxu0 0.0
        %2208 = vmatprep.subr.mxu0 0.0
        %2209 = vmatpush1.msra.mxu0 0.0
        %2210 = vmatprep.subr.mxu0 0.0
        %2211 = vmatpush1.msra.mxu0 0.0
        %2212 = vmatprep.subr.mxu0 0.0
        %2213 = vmatpush1.msra.mxu0 0.0
        %2214 = vmatprep.subr.mxu0 0.0
        %2215 = vmatpush1.msra.mxu0 0.0
        %2216 = vmatprep.subr.mxu0 0.0
        %2217 = vmatpush1.msra.mxu0 0.0
        %2218 = vmatprep.subr.mxu0 0.0
        %2219 = vmatpush1.msra.mxu0 0.0
        %2220 = vmatprep.subr.mxu0 0.0
        %2221 = vmatpush1.msra.mxu0 0.0
        %2222 = vmatprep.subr.mxu0 0.0
        %2223 = vmatpush1.msra.mxu0 0.0
        %2224 = vmatprep.subr.mxu0 0.0
        %2225 = vmatpush1.msra.mxu0 0.0
        %2226 = vmatprep.subr.mxu0 0.0
        %2227 = vmatpush1.msra.mxu0 0.0
        %2228 = vmatprep.subr.mxu0 0.0
        %2229 = vmatpush1.msra.mxu0 0.0
        %2230 = vmatprep.subr.mxu0 0.0
        %2231 = vmatpush1.msra.mxu0 0.0
        %2232 = vmatprep.subr.mxu0 0.0
        %2233 = vmatpush1.msra.mxu0 0.0
        %2234 = vmatprep.subr.mxu0 0.0
        %2235 = vmatpush1.msra.mxu0 0.0
        %2236 = vmatprep.subr.mxu0 0.0
        %2237 = vmatpush1.msra.mxu0 0.0
        %2238 = vmatprep.subr.mxu0 0.0
        %2239 = vmatpush1.msra.mxu0 0.0
        %2240 = vmatprep.subr.mxu0 0.0
        %2241 = vmatpush1.msra.mxu0 0.0
        %2242 = vmatprep.subr.mxu0 0.0
        %2243 = vmatpush1.msra.mxu0 0.0
        %2244 = vmatprep.subr.mxu0 0.0
        %2245 = vmatpush1.msra.mxu0 0.0
        %2246 = vmatprep.mubr.f32.mxu0 0.0
        %2247 = vmatmul.mubr.f32.gmra.mrb[0].mxu0 %v263
        %v2248 = vpop.f32.mrb[0].mxu0
        %v2249 = vadd.f32 %v259, %v2248
        %v2250 = vpop.f32.mrb[0].mxu0
        %v2251 = vadd.f32 %v259, %v2250
        %2252 = vdwg.mxu0
        %2253 = vmatprep.subr.mxu0 %v250
        %2254 = vmatpush1.msra.mxu0 %v249
        %2255 = vmatprep.subr.mxu0 0.0
        %2256 = vmatpush1.msra.mxu0 0.0
        %2257 = vmatprep.subr.mxu0 0.0
        %2258 = vmatpush1.msra.mxu0 0.0
        %2259 = vmatprep.subr.mxu0 0.0
        %2260 = vmatpush1.msra.mxu0 0.0
        %2261 = vmatprep.subr.mxu0 0.0
        %2262 = vmatpush1.msra.mxu0 0.0
        %2263 = vmatprep.subr.mxu0 0.0
        %2264 = vmatpush1.msra.mxu0 0.0
        %2265 = vmatprep.subr.mxu0 0.0
        %2266 = vmatpush1.msra.mxu0 0.0
        %2267 = vmatprep.subr.mxu0 0.0
        %2268 = vmatpush1.msra.mxu0 0.0
        %2269 = vmatprep.subr.mxu0 0.0
        %2270 = vmatpush1.msra.mxu0 0.0
        %2271 = vmatprep.subr.mxu0 0.0
        %2272 = vmatpush1.msra.mxu0 0.0
        %2273 = vmatprep.subr.mxu0 0.0
        %2274 = vmatpush1.msra.mxu0 0.0
        %2275 = vmatprep.subr.mxu0 0.0
        %2276 = vmatpush1.msra.mxu0 0.0
        %2277 = vmatprep.subr.mxu0 0.0
        %2278 = vmatpush1.msra.mxu0 0.0
        %2279 = vmatprep.subr.mxu0 0.0
        %2280 = vmatpush1.msra.mxu0 0.0
        %2281 = vmatprep.subr.mxu0 0.0
        %2282 = vmatpush1.msra.mxu0 0.0
        %2283 = vmatprep.subr.mxu0 0.0
        %2284 = vmatpush1.msra.mxu0 0.0
        %2285 = vmatprep.subr.mxu0 0.0
        %2286 = vmatpush1.msra.mxu0 0.0
        %2287 = vmatprep.subr.mxu0 0.0
        %2288 = vmatpush1.msra.mxu0 0.0
        %2289 = vmatprep.subr.mxu0 0.0
        %2290 = vmatpush1.msra.mxu0 0.0
        %2291 = vmatprep.subr.mxu0 0.0
        %2292 = vmatpush1.msra.mxu0 0.0
        %2293 = vmatprep.subr.mxu0 0.0
        %2294 = vmatpush1.msra.mxu0 0.0
        %2295 = vmatprep.subr.mxu0 0.0
        %2296 = vmatpush1.msra.mxu0 0.0
        %2297 = vmatprep.subr.mxu0 0.0
        %2298 = vmatpush1.msra.mxu0 0.0
        %2299 = vmatprep.subr.mxu0 0.0
        %2300 = vmatpush1.msra.mxu0 0.0
        %2301 = vmatprep.subr.mxu0 0.0
        %2302 = vmatpush1.msra.mxu0 0.0
        %2303 = vmatprep.subr.mxu0 0.0
        %2304 = vmatpush1.msra.mxu0 0.0
        %2305 = vmatprep.subr.mxu0 0.0
        %2306 = vmatpush1.msra.mxu0 0.0
        %2307 = vmatprep.subr.mxu0 0.0
        %2308 = vmatpush1.msra.mxu0 0.0
        %2309 = vmatprep.subr.mxu0 0.0
        %2310 = vmatpush1.msra.mxu0 0.0
        %2311 = vmatprep.subr.mxu0 0.0
        %2312 = vmatpush1.msra.mxu0 0.0
        %2313 = vmatprep.subr.mxu0 0.0
        %2314 = vmatpush1.msra.mxu0 0.0
        %2315 = vmatprep.subr.mxu0 0.0
        %2316 = vmatpush1.msra.mxu0 0.0
        %2317 = vmatprep.mubr.f32.mxu0 0.0
        %2318 = vmatmul.mubr.f32.gmra.mrb[0].mxu0 %v263
        %v2319 = vpop.f32.mrb[0].mxu0
        %v2320 = vadd.f32 %v259, %v2319
        %v2321 = vpop.f32.mrb[0].mxu0
        %v2322 = vadd.f32 %v259, %v2321
        %2323 = vdwg.mxu0
        %2324 = vmatprep.subr.mxu0 %v252
        %2325 = vmatpush1.msra.mxu0 %v251
        %2326 = vmatprep.subr.mxu0 0.0
        %2327 = vmatpush1.msra.mxu0 0.0
        %2328 = vmatprep.subr.mxu0 0.0
        %2329 = vmatpush1.msra.mxu0 0.0
        %2330 = vmatprep.subr.mxu0 0.0
        %2331 = vmatpush1.msra.mxu0 0.0
        %2332 = vmatprep.subr.mxu0 0.0
        %2333 = vmatpush1.msra.mxu0 0.0
        %2334 = vmatprep.subr.mxu0 0.0
        %2335 = vmatpush1.msra.mxu0 0.0
        %2336 = vmatprep.subr.mxu0 0.0
        %2337 = vmatpush1.msra.mxu0 0.0
        %2338 = vmatprep.subr.mxu0 0.0
        %2339 = vmatpush1.msra.mxu0 0.0
        %2340 = vmatprep.subr.mxu0 0.0
        %2341 = vmatpush1.msra.mxu0 0.0
        %2342 = vmatprep.subr.mxu0 0.0
        %2343 = vmatpush1.msra.mxu0 0.0
        %2344 = vmatprep.subr.mxu0 0.0
        %2345 = vmatpush1.msra.mxu0 0.0
        %2346 = vmatprep.subr.mxu0 0.0
        %2347 = vmatpush1.msra.mxu0 0.0
        %2348 = vmatprep.subr.mxu0 0.0
        %2349 = vmatpush1.msra.mxu0 0.0
        %2350 = vmatprep.subr.mxu0 0.0
        %2351 = vmatpush1.msra.mxu0 0.0
        %2352 = vmatprep.subr.mxu0 0.0
        %2353 = vmatpush1.msra.mxu0 0.0
        %2354 = vmatprep.subr.mxu0 0.0
        %2355 = vmatpush1.msra.mxu0 0.0
        %2356 = vmatprep.subr.mxu0 0.0
        %2357 = vmatpush1.msra.mxu0 0.0
        %2358 = vmatprep.subr.mxu0 0.0
        %2359 = vmatpush1.msra.mxu0 0.0
        %2360 = vmatprep.subr.mxu0 0.0
        %2361 = vmatpush1.msra.mxu0 0.0
        %2362 = vmatprep.subr.mxu0 0.0
        %2363 = vmatpush1.msra.mxu0 0.0
        %2364 = vmatprep.subr.mxu0 0.0
        %2365 = vmatpush1.msra.mxu0 0.0
        %2366 = vmatprep.subr.mxu0 0.0
        %2367 = vmatpush1.msra.mxu0 0.0
        %2368 = vmatprep.subr.mxu0 0.0
        %2369 = vmatpush1.msra.mxu0 0.0
        %2370 = vmatprep.subr.mxu0 0.0
        %2371 = vmatpush1.msra.mxu0 0.0
        %2372 = vmatprep.subr.mxu0 0.0
        %2373 = vmatpush1.msra.mxu0 0.0
        %2374 = vmatprep.subr.mxu0 0.0
        %2375 = vmatpush1.msra.mxu0 0.0
        %2376 = vmatprep.subr.mxu0 0.0
        %2377 = vmatpush1.msra.mxu0 0.0
        %2378 = vmatprep.subr.mxu0 0.0
        %2379 = vmatpush1.msra.mxu0 0.0
        %2380 = vmatprep.subr.mxu0 0.0
        %2381 = vmatpush1.msra.mxu0 0.0
        %2382 = vmatprep.subr.mxu0 0.0
        %2383 = vmatpush1.msra.mxu0 0.0
        %2384 = vmatprep.subr.mxu0 0.0
        %2385 = vmatpush1.msra.mxu0 0.0
        %2386 = vmatprep.subr.mxu0 0.0
        %2387 = vmatpush1.msra.mxu0 0.0
        %2388 = vmatprep.mubr.f32.mxu0 0.0
        %2389 = vmatmul.mubr.f32.gmra.mrb[0].mxu0 %v263
        %v2390 = vpop.f32.mrb[0].mxu0
        %v2391 = vadd.f32 %v259, %v2390
        %v2392 = vpop.f32.mrb[0].mxu0
        %v2393 = vadd.f32 %v259, %v2392
        %2394 = vdwg.mxu0
        %2395 = vmatprep.subr.mxu0 %v254
        %2396 = vmatpush1.msra.mxu0 %v253
        %2397 = vmatprep.subr.mxu0 0.0
        %2398 = vmatpush1.msra.mxu0 0.0
        %2399 = vmatprep.subr.mxu0 0.0
        %2400 = vmatpush1.msra.mxu0 0.0
        %2401 = vmatprep.subr.mxu0 0.0
        %2402 = vmatpush1.msra.mxu0 0.0
        %2403 = vmatprep.subr.mxu0 0.0
        %2404 = vmatpush1.msra.mxu0 0.0
        %2405 = vmatprep.subr.mxu0 0.0
        %2406 = vmatpush1.msra.mxu0 0.0
        %2407 = vmatprep.subr.mxu0 0.0
        %2408 = vmatpush1.msra.mxu0 0.0
        %2409 = vmatprep.subr.mxu0 0.0
        %2410 = vmatpush1.msra.mxu0 0.0
        %2411 = vmatprep.subr.mxu0 0.0
        %2412 = vmatpush1.msra.mxu0 0.0
        %2413 = vmatprep.subr.mxu0 0.0
        %2414 = vmatpush1.msra.mxu0 0.0
        %2415 = vmatprep.subr.mxu0 0.0
        %2416 = vmatpush1.msra.mxu0 0.0
        %2417 = vmatprep.subr.mxu0 0.0
        %2418 = vmatpush1.msra.mxu0 0.0
        %2419 = vmatprep.subr.mxu0 0.0
        %2420 = vmatpush1.msra.mxu0 0.0
        %2421 = vmatprep.subr.mxu0 0.0
        %2422 = vmatpush1.msra.mxu0 0.0
        %2423 = vmatprep.subr.mxu0 0.0
        %2424 = vmatpush1.msra.mxu0 0.0
        %2425 = vmatprep.subr.mxu0 0.0
        %2426 = vmatpush1.msra.mxu0 0.0
        %2427 = vmatprep.subr.mxu0 0.0
        %2428 = vmatpush1.msra.mxu0 0.0
        %2429 = vmatprep.subr.mxu0 0.0
        %2430 = vmatpush1.msra.mxu0 0.0
        %2431 = vmatprep.subr.mxu0 0.0
        %2432 = vmatpush1.msra.mxu0 0.0
        %2433 = vmatprep.subr.mxu0 0.0
        %2434 = vmatpush1.msra.mxu0 0.0
        %2435 = vmatprep.subr.mxu0 0.0
        %2436 = vmatpush1.msra.mxu0 0.0
        %2437 = vmatprep.subr.mxu0 0.0
        %2438 = vmatpush1.msra.mxu0 0.0
        %2439 = vmatprep.subr.mxu0 0.0
        %2440 = vmatpush1.msra.mxu0 0.0
        %2441 = vmatprep.subr.mxu0 0.0
        %2442 = vmatpush1.msra.mxu0 0.0
        %2443 = vmatprep.subr.mxu0 0.0
        %2444 = vmatpush1.msra.mxu0 0.0
        %2445 = vmatprep.subr.mxu0 0.0
        %2446 = vmatpush1.msra.mxu0 0.0
        %2447 = vmatprep.subr.mxu0 0.0
        %2448 = vmatpush1.msra.mxu0 0.0
        %2449 = vmatprep.subr.mxu0 0.0
        %2450 = vmatpush1.msra.mxu0 0.0
        %2451 = vmatprep.subr.mxu0 0.0
        %2452 = vmatpush1.msra.mxu0 0.0
        %2453 = vmatprep.subr.mxu0 0.0
        %2454 = vmatpush1.msra.mxu0 0.0
        %2455 = vmatprep.subr.mxu0 0.0
        %2456 = vmatpush1.msra.mxu0 0.0
        %2457 = vmatprep.subr.mxu0 0.0
        %2458 = vmatpush1.msra.mxu0 0.0
        %2459 = vmatprep.mubr.f32.mxu0 0.0
        %2460 = vmatmul.mubr.f32.gmra.mrb[0].mxu0 %v263
        %v2461 = vpop.f32.mrb[0].mxu0
        %v2462 = vadd.f32 %v259, %v2461
        %v2463 = vpop.f32.mrb[0].mxu0
        %v2464 = vadd.f32 %v259, %v2463
        %2465 = vdwg.mxu0
        %v2466 = vmax.f32 %v332, 0.0
        %v2467 = vmax.f32 %v334, 0.0
        %v2468 = vmax.f32 %v403, 0.0
        %v2469 = vmax.f32 %v405, 0.0
        %v2470 = vmax.f32 %v474, 0.0
        %v2471 = vmax.f32 %v476, 0.0
        %v2472 = vmax.f32 %v545, 0.0
        %v2473 = vmax.f32 %v547, 0.0
        %v2474 = vmax.f32 %v616, 0.0
        %v2475 = vmax.f32 %v618, 0.0
        %v2476 = vmax.f32 %v687, 0.0
        %v2477 = vmax.f32 %v689, 0.0
        %v2478 = vmax.f32 %v758, 0.0
        %v2479 = vmax.f32 %v760, 0.0
        %v2480 = vmax.f32 %v829, 0.0
        %v2481 = vmax.f32 %v831, 0.0
        %v2482 = vmax.f32 %v900, 0.0
        %v2483 = vmax.f32 %v902, 0.0
        %v2484 = vmax.f32 %v971, 0.0
        %v2485 = vmax.f32 %v973, 0.0
        %v2486 = vmax.f32 %v1042, 0.0
        %v2487 = vmax.f32 %v1044, 0.0
        %v2488 = vmax.f32 %v1113, 0.0
        %v2489 = vmax.f32 %v1115, 0.0
        %v2490 = vmax.f32 %v1184, 0.0
        %v2491 = vmax.f32 %v1186, 0.0
        %v2492 = vmax.f32 %v1255, 0.0
        %v2493 = vmax.f32 %v1257, 0.0
        %v2494 = vmax.f32 %v1326, 0.0
        %v2495 = vmax.f32 %v1328, 0.0
        %v2496 = vmax.f32 %v1397, 0.0
        %v2497 = vmax.f32 %v1399, 0.0
        %v2498 = vmax.f32 %v1468, 0.0
        %v2499 = vmax.f32 %v1470, 0.0
        %v2500 = vmax.f32 %v1539, 0.0
        %v2501 = vmax.f32 %v1541, 0.0
        %v2502 = vmax.f32 %v1610, 0.0
        %v2503 = vmax.f32 %v1612, 0.0
        %v2504 = vmax.f32 %v1681, 0.0
        %v2505 = vmax.f32 %v1683, 0.0
        %v2506 = vmax.f32 %v1752, 0.0
        %v2507 = vmax.f32 %v1754, 0.0
        %v2508 = vmax.f32 %v1823, 0.0
        %v2509 = vmax.f32 %v1825, 0.0
        %v2510 = vmax.f32 %v1894, 0.0
        %v2511 = vmax.f32 %v1896, 0.0
        %v2512 = vmax.f32 %v1965, 0.0
        %v2513 = vmax.f32 %v1967, 0.0
        %v2514 = vmax.f32 %v2036, 0.0
        %v2515 = vmax.f32 %v2038, 0.0
        %v2516 = vmax.f32 %v2107, 0.0
        %v2517 = vmax.f32 %v2109, 0.0
        %v2518 = vmax.f32 %v2178, 0.0
        %v2519 = vmax.f32 %v2180, 0.0
        %v2520 = vmax.f32 %v2249, 0.0
        %v2521 = vmax.f32 %v2251, 0.0
        %v2522 = vmax.f32 %v2320, 0.0
        %v2523 = vmax.f32 %v2322, 0.0
        %v2524 = vmax.f32 %v2391, 0.0
        %v2525 = vmax.f32 %v2393, 0.0
        %v2526 = vmax.f32 %v2462, 0.0
        %v2527 = vmax.f32 %v2464, 0.0
        %v2590 = vcombine.low %v2466, %v2467
        %v2591 = vcombine.low %v2468, %v2469
        %v2592 = vcombine.low %v2470, %v2471
        %v2593 = vcombine.low %v2472, %v2473
        %v2594 = vcombine.low %v2474, %v2475
        %v2595 = vcombine.low %v2476, %v2477
        %v2596 = vcombine.low %v2478, %v2479
        %v2597 = vcombine.low %v2480, %v2481
        %v2598 = vcombine.low %v2482, %v2483
        %v2599 = vcombine.low %v2484, %v2485
        %v2600 = vcombine.low %v2486, %v2487
        %v2601 = vcombine.low %v2488, %v2489
        %v2602 = vcombine.low %v2490, %v2491
        %v2603 = vcombine.low %v2492, %v2493
        %v2604 = vcombine.low %v2494, %v2495
        %v2605 = vcombine.low %v2496, %v2497
        %v2606 = vcombine.low %v2498, %v2499
        %v2607 = vcombine.low %v2500, %v2501
        %v2608 = vcombine.low %v2502, %v2503
        %v2609 = vcombine.low %v2504, %v2505
        %v2610 = vcombine.low %v2506, %v2507
        %v2611 = vcombine.low %v2508, %v2509
        %v2612 = vcombine.low %v2510, %v2511
        %v2613 = vcombine.low %v2512, %v2513
        %v2614 = vcombine.low %v2514, %v2515
        %v2615 = vcombine.low %v2516, %v2517
        %v2616 = vcombine.low %v2518, %v2519
        %v2617 = vcombine.low %v2520, %v2521
        %v2618 = vcombine.low %v2522, %v2523
        %v2619 = vcombine.low %v2524, %v2525
        %v2620 = vcombine.low %v2526, %v2527
        %2652 = vst [vmem:[%s172] sm:$0xff] %v2590
        %2653 = vst [vmem:[%s172 + $0x8] sm:$0xff] %v2591
        %2654 = vst [vmem:[%s172 + $0x10] sm:$0xff] %v2592
        %2655 = vst [vmem:[%s172 + $0x18] sm:$0xff] %v2593
        %2656 = vst [vmem:[%s172 + $0x20] sm:$0xff] %v2594
        %2657 = vst [vmem:[%s172 + $0x28] sm:$0xff] %v2595
        %2658 = vst [vmem:[%s172 + $0x30] sm:$0xff] %v2596
        %2659 = vst [vmem:[%s172 + $0x38] sm:$0xff] %v2597
        %2660 = vst [vmem:[%s172 + $0x40] sm:$0xff] %v2598
        %2661 = vst [vmem:[%s172 + $0x48] sm:$0xff] %v2599
        %2662 = vst [vmem:[%s172 + $0x50] sm:$0xff] %v2600
        %2663 = vst [vmem:[%s172 + $0x58] sm:$0xff] %v2601
        %2664 = vst [vmem:[%s172 + $0x60] sm:$0xff] %v2602
        %2665 = vst [vmem:[%s172 + $0x68] sm:$0xff] %v2603
        %2666 = vst [vmem:[%s172 + $0x70] sm:$0xff] %v2604
        %2667 = vst [vmem:[%s172 + $0x78] sm:$0xff] %v2605
        %2668 = vst [vmem:[%s172 + $0x80] sm:$0xff] %v2606
        %2669 = vst [vmem:[%s172 + $0x88] sm:$0xff] %v2607
        %2670 = vst [vmem:[%s172 + $0x90] sm:$0xff] %v2608
        %2671 = vst [vmem:[%s172 + $0x98] sm:$0xff] %v2609
        %2672 = vst [vmem:[%s172 + $0xa0] sm:$0xff] %v2610
        %2673 = vst [vmem:[%s172 + $0xa8] sm:$0xff] %v2611
        %2674 = vst [vmem:[%s172 + $0xb0] sm:$0xff] %v2612
        %2675 = vst [vmem:[%s172 + $0xb8] sm:$0xff] %v2613
        %2676 = vst [vmem:[%s172 + $0xc0] sm:$0xff] %v2614
        %2677 = vst [vmem:[%s172 + $0xc8] sm:$0xff] %v2615
        %2678 = vst [vmem:[%s172 + $0xd0] sm:$0xff] %v2616
        %2679 = vst [vmem:[%s172 + $0xd8] sm:$0xff] %v2617
        %2680 = vst [vmem:[%s172 + $0xe0] sm:$0xff] %v2618
        %2681 = vst [vmem:[%s172 + $0xe8] sm:$0xff] %v2619
        %2682 = vst [vmem:[%s172 + $0xf0] sm:$0xff] %v2620
        %s2683 = sand.u32 %s90, 1
        %s2684 = sand.u32 %s90, 1
        %s2685 = smul.addr %s2684, 248
        %s2686 = scalar_lea.vmem [#allocation2], %s2685
        // Predicated region
        $region33: #{critic_forward.2} parent=31 // pred_check
          %p2687 = pneg %p100
        $region34: #{critic_forward.2} parent=31 // pred_check_branch
          %2689 = sbr.rel (%p2687) target = $region36
        $region35: #{critic_forward.2} parent=31 // pred_region
          %s2690 = smul.u32 62, %s14
          %s2691 = ssub.s32 245, %s2690
          %p2692 = scmp.lt.s32.totalorder %s2691, 62
          %s2693 = scalar_select %p2692, %s2691, 62
          %s2694 = smul.u32 64, %s2693
          %p2695 = scmp.ne.s32.totalorder 0, %s2694
          %s2696 = smul.addr %s2690, 4
          %s2697 = scalar_lea.vmem %s3, %s2696
          %s2698 = smul.u32 %s2693, 4
          // Predicated region
          $region37: #{critic_forward.2} parent=35 // pred_check
            %p2699 = pneg %p2695
          $region38: #{critic_forward.2} parent=35 // pred_check_branch
            %2701 = sbr.rel (%p2699) target = $region40
          $region39: #{critic_forward.2} parent=35 // pred_region
            %p2702 = scmp.lt.u32.totalorder %s2698, 8
            %p2703 = pneg %p2702
            // Predicated region
            $region41: #{critic_forward.2} parent=39 // pred_check
              _
            $region42: #{critic_forward.2} parent=39 // pred_check_branch
              %2705 = sbr.rel (%p2702) target = $region44
            $region43: #{critic_forward.2} parent=39 // pred_region
              %s2720 = sand.u32 %s2698, 7
              %p2721 = scmp.eq.s32.totalorder %s2720, 0
              // Predicated region
              $region56: #{critic_forward.2} parent=43 // pred_check
                %p2722 = pneg %p2721
              $region57: #{critic_forward.2} parent=43 // pred_check_branch
                %2724 = sbr.rel (%p2722) target = $region59
              $region58: #{critic_forward.2} parent=43 // pred_region
                %s2725 = sshrl.u32 %s2698, 3
                %s2726 = sshrl.u32 %s2725, 6
                // While loop
                $region60: #{critic_forward.2} parent=58 // loop_pre_header
                  _
                $region61: #{critic_forward.2} parent=58 // loop_header
                  %s2730 = sphi 0, %s2732
                  %p2731 = scmp.ge.s32.totalorder %s2730, %s2726
                  %s2735 = sphi 0, %s2868
                  %s2736 = sphi %s2686, %s2871
                  %s2737 = sphi %s2697, %s2872
                $region62: #{critic_forward.2} parent=58 // loop_header_branch
                  %2734 = sbr.rel (%p2731) target = $region66
                $region63: #{critic_forward.2} parent=58 // loop_body
                  %v2738 = vld [vmem:[%s2736] sm:$0xff]
                  %2739 = vst [vmem:[%s2737] sm:$0xff] %v2738
                  %v2740 = vld [vmem:[%s2736 + $0x8] sm:$0xff]
                  %2741 = vst [vmem:[%s2737 + $0x8] sm:$0xff] %v2740
                  %v2742 = vld [vmem:[%s2736 + $0x10] sm:$0xff]
                  %2743 = vst [vmem:[%s2737 + $0x10] sm:$0xff] %v2742
                  %v2744 = vld [vmem:[%s2736 + $0x18] sm:$0xff]
                  %2745 = vst [vmem:[%s2737 + $0x18] sm:$0xff] %v2744
                  %v2746 = vld [vmem:[%s2736 + $0x20] sm:$0xff]
                  %2747 = vst [vmem:[%s2737 + $0x20] sm:$0xff] %v2746
                  %v2748 = vld [vmem:[%s2736 + $0x28] sm:$0xff]
                  %2749 = vst [vmem:[%s2737 + $0x28] sm:$0xff] %v2748
                  %v2750 = vld [vmem:[%s2736 + $0x30] sm:$0xff]
                  %2751 = vst [vmem:[%s2737 + $0x30] sm:$0xff] %v2750
                  %v2752 = vld [vmem:[%s2736 + $0x38] sm:$0xff]
                  %2753 = vst [vmem:[%s2737 + $0x38] sm:$0xff] %v2752
                  %v2754 = vld [vmem:[%s2736 + $0x40] sm:$0xff]
                  %2755 = vst [vmem:[%s2737 + $0x40] sm:$0xff] %v2754
                  %v2756 = vld [vmem:[%s2736 + $0x48] sm:$0xff]
                  %2757 = vst [vmem:[%s2737 + $0x48] sm:$0xff] %v2756
                  %v2758 = vld [vmem:[%s2736 + $0x50] sm:$0xff]
                  %2759 = vst [vmem:[%s2737 + $0x50] sm:$0xff] %v2758
                  %v2760 = vld [vmem:[%s2736 + $0x58] sm:$0xff]
                  %2761 = vst [vmem:[%s2737 + $0x58] sm:$0xff] %v2760
                  %v2762 = vld [vmem:[%s2736 + $0x60] sm:$0xff]
                  %2763 = vst [vmem:[%s2737 + $0x60] sm:$0xff] %v2762
                  %v2764 = vld [vmem:[%s2736 + $0x68] sm:$0xff]
                  %2765 = vst [vmem:[%s2737 + $0x68] sm:$0xff] %v2764
                  %v2766 = vld [vmem:[%s2736 + $0x70] sm:$0xff]
                  %2767 = vst [vmem:[%s2737 + $0x70] sm:$0xff] %v2766
                  %v2768 = vld [vmem:[%s2736 + $0x78] sm:$0xff]
                  %2769 = vst [vmem:[%s2737 + $0x78] sm:$0xff] %v2768
                  %v2770 = vld [vmem:[%s2736 + $0x80] sm:$0xff]
                  %2771 = vst [vmem:[%s2737 + $0x80] sm:$0xff] %v2770
                  %v2772 = vld [vmem:[%s2736 + $0x88] sm:$0xff]
                  %2773 = vst [vmem:[%s2737 + $0x88] sm:$0xff] %v2772
                  %v2774 = vld [vmem:[%s2736 + $0x90] sm:$0xff]
                  %2775 = vst [vmem:[%s2737 + $0x90] sm:$0xff] %v2774
                  %v2776 = vld [vmem:[%s2736 + $0x98] sm:$0xff]
                  %2777 = vst [vmem:[%s2737 + $0x98] sm:$0xff] %v2776
                  %v2778 = vld [vmem:[%s2736 + $0xa0] sm:$0xff]
                  %2779 = vst [vmem:[%s2737 + $0xa0] sm:$0xff] %v2778
                  %v2780 = vld [vmem:[%s2736 + $0xa8] sm:$0xff]
                  %2781 = vst [vmem:[%s2737 + $0xa8] sm:$0xff] %v2780
                  %v2782 = vld [vmem:[%s2736 + $0xb0] sm:$0xff]
                  %2783 = vst [vmem:[%s2737 + $0xb0] sm:$0xff] %v2782
                  %v2784 = vld [vmem:[%s2736 + $0xb8] sm:$0xff]
                  %2785 = vst [vmem:[%s2737 + $0xb8] sm:$0xff] %v2784
                  %v2786 = vld [vmem:[%s2736 + $0xc0] sm:$0xff]
                  %2787 = vst [vmem:[%s2737 + $0xc0] sm:$0xff] %v2786
                  %v2788 = vld [vmem:[%s2736 + $0xc8] sm:$0xff]
                  %2789 = vst [vmem:[%s2737 + $0xc8] sm:$0xff] %v2788
                  %v2790 = vld [vmem:[%s2736 + $0xd0] sm:$0xff]
                  %2791 = vst [vmem:[%s2737 + $0xd0] sm:$0xff] %v2790
                  %v2792 = vld [vmem:[%s2736 + $0xd8] sm:$0xff]
                  %2793 = vst [vmem:[%s2737 + $0xd8] sm:$0xff] %v2792
                  %v2794 = vld [vmem:[%s2736 + $0xe0] sm:$0xff]
                  %2795 = vst [vmem:[%s2737 + $0xe0] sm:$0xff] %v2794
                  %v2796 = vld [vmem:[%s2736 + $0xe8] sm:$0xff]
                  %2797 = vst [vmem:[%s2737 + $0xe8] sm:$0xff] %v2796
                  %v2798 = vld [vmem:[%s2736 + $0xf0] sm:$0xff]
                  %2799 = vst [vmem:[%s2737 + $0xf0] sm:$0xff] %v2798
                  %v2800 = vld [vmem:[%s2736 + $0xf8] sm:$0xff]
                  %2801 = vst [vmem:[%s2737 + $0xf8] sm:$0xff] %v2800
                  %v2802 = vld [vmem:[%s2736 + $0x100] sm:$0xff]
                  %2803 = vst [vmem:[%s2737 + $0x100] sm:$0xff] %v2802
                  %v2804 = vld [vmem:[%s2736 + $0x108] sm:$0xff]
                  %2805 = vst [vmem:[%s2737 + $0x108] sm:$0xff] %v2804
                  %v2806 = vld [vmem:[%s2736 + $0x110] sm:$0xff]
                  %2807 = vst [vmem:[%s2737 + $0x110] sm:$0xff] %v2806
                  %v2808 = vld [vmem:[%s2736 + $0x118] sm:$0xff]
                  %2809 = vst [vmem:[%s2737 + $0x118] sm:$0xff] %v2808
                  %v2810 = vld [vmem:[%s2736 + $0x120] sm:$0xff]
                  %2811 = vst [vmem:[%s2737 + $0x120] sm:$0xff] %v2810
                  %v2812 = vld [vmem:[%s2736 + $0x128] sm:$0xff]
                  %2813 = vst [vmem:[%s2737 + $0x128] sm:$0xff] %v2812
                  %v2814 = vld [vmem:[%s2736 + $0x130] sm:$0xff]
                  %2815 = vst [vmem:[%s2737 + $0x130] sm:$0xff] %v2814
                  %v2816 = vld [vmem:[%s2736 + $0x138] sm:$0xff]
                  %2817 = vst [vmem:[%s2737 + $0x138] sm:$0xff] %v2816
                  %v2818 = vld [vmem:[%s2736 + $0x140] sm:$0xff]
                  %2819 = vst [vmem:[%s2737 + $0x140] sm:$0xff] %v2818
                  %v2820 = vld [vmem:[%s2736 + $0x148] sm:$0xff]
                  %2821 = vst [vmem:[%s2737 + $0x148] sm:$0xff] %v2820
                  %v2822 = vld [vmem:[%s2736 + $0x150] sm:$0xff]
                  %2823 = vst [vmem:[%s2737 + $0x150] sm:$0xff] %v2822
                  %v2824 = vld [vmem:[%s2736 + $0x158] sm:$0xff]
                  %2825 = vst [vmem:[%s2737 + $0x158] sm:$0xff] %v2824
                  %v2826 = vld [vmem:[%s2736 + $0x160] sm:$0xff]
                  %2827 = vst [vmem:[%s2737 + $0x160] sm:$0xff] %v2826
                  %v2828 = vld [vmem:[%s2736 + $0x168] sm:$0xff]
                  %2829 = vst [vmem:[%s2737 + $0x168] sm:$0xff] %v2828
                  %v2830 = vld [vmem:[%s2736 + $0x170] sm:$0xff]
                  %2831 = vst [vmem:[%s2737 + $0x170] sm:$0xff] %v2830
                  %v2832 = vld [vmem:[%s2736 + $0x178] sm:$0xff]
                  %2833 = vst [vmem:[%s2737 + $0x178] sm:$0xff] %v2832
                  %v2834 = vld [vmem:[%s2736 + $0x180] sm:$0xff]
                  %2835 = vst [vmem:[%s2737 + $0x180] sm:$0xff] %v2834
                  %v2836 = vld [vmem:[%s2736 + $0x188] sm:$0xff]
                  %2837 = vst [vmem:[%s2737 + $0x188] sm:$0xff] %v2836
                  %v2838 = vld [vmem:[%s2736 + $0x190] sm:$0xff]
                  %2839 = vst [vmem:[%s2737 + $0x190] sm:$0xff] %v2838
                  %v2840 = vld [vmem:[%s2736 + $0x198] sm:$0xff]
                  %2841 = vst [vmem:[%s2737 + $0x198] sm:$0xff] %v2840
                  %v2842 = vld [vmem:[%s2736 + $0x1a0] sm:$0xff]
                  %2843 = vst [vmem:[%s2737 + $0x1a0] sm:$0xff] %v2842
                  %v2844 = vld [vmem:[%s2736 + $0x1a8] sm:$0xff]
                  %2845 = vst [vmem:[%s2737 + $0x1a8] sm:$0xff] %v2844
                  %v2846 = vld [vmem:[%s2736 + $0x1b0] sm:$0xff]
                  %2847 = vst [vmem:[%s2737 + $0x1b0] sm:$0xff] %v2846
                  %v2848 = vld [vmem:[%s2736 + $0x1b8] sm:$0xff]
                  %2849 = vst [vmem:[%s2737 + $0x1b8] sm:$0xff] %v2848
                  %v2850 = vld [vmem:[%s2736 + $0x1c0] sm:$0xff]
                  %2851 = vst [vmem:[%s2737 + $0x1c0] sm:$0xff] %v2850
                  %v2852 = vld [vmem:[%s2736 + $0x1c8] sm:$0xff]
                  %2853 = vst [vmem:[%s2737 + $0x1c8] sm:$0xff] %v2852
                  %v2854 = vld [vmem:[%s2736 + $0x1d0] sm:$0xff]
                  %2855 = vst [vmem:[%s2737 + $0x1d0] sm:$0xff] %v2854
                  %v2856 = vld [vmem:[%s2736 + $0x1d8] sm:$0xff]
                  %2857 = vst [vmem:[%s2737 + $0x1d8] sm:$0xff] %v2856
                  %v2858 = vld [vmem:[%s2736 + $0x1e0] sm:$0xff]
                  %2859 = vst [vmem:[%s2737 + $0x1e0] sm:$0xff] %v2858
                  %v2860 = vld [vmem:[%s2736 + $0x1e8] sm:$0xff]
                  %2861 = vst [vmem:[%s2737 + $0x1e8] sm:$0xff] %v2860
                  %v2862 = vld [vmem:[%s2736 + $0x1f0] sm:$0xff]
                  %2863 = vst [vmem:[%s2737 + $0x1f0] sm:$0xff] %v2862
                  %v2864 = vld [vmem:[%s2736 + $0x1f8] sm:$0xff]
                  %2865 = vst [vmem:[%s2737 + $0x1f8] sm:$0xff] %v2864
                  %s2866 = sadd.s32 1, %s2735
                  %p2867 = scmp.ge.s32.totalorder %s2866, %s2726
                  %s2868 = scalar_select %p2867, 0, %s2866
                  %s2869 = smul.u32 %s2868, 512
                  %s2870 = smul.u32 %s2868, 512
                  %s2871 = scalar_lea.vmem %s2686, %s2869 [#allocation2]
                  %s2872 = scalar_lea.vmem %s2697, %s2870
                $region64: #{critic_forward.2} parent=58 // loop_footer
                  %s2732 = sadd.s32 %s2730, 1
                $region65: #{critic_forward.2} parent=58 // loop_footer_branch
                  %2729 = sbr.rel target = $region61
                $region66: #{critic_forward.2} parent=58 // loop_exit
                  _
                %s2873 = sshrl.u32 %s2725, 6
                %s2874 = sand.u32 %s2725, 63
                %s2875 = smul.u32 %s2873, 64
                %s2876 = smul.u32 128, %s2875
                %s2877 = sshra.s32 %s2876, 4
                %s2878 = scalar_lea.vmem %s2686, %s2877 [#allocation2]
                %s2879 = smul.u32 128, %s2875
                %s2880 = sshra.s32 %s2879, 4
                %s2881 = scalar_lea.vmem %s2697, %s2880
                // While loop
                $region67: #{critic_forward.2} parent=58 // loop_pre_header
                  _
                $region68: #{critic_forward.2} parent=58 // loop_header
                  %s2885 = sphi 0, %s2887
                  %p2886 = scmp.ge.s32.totalorder %s2885, %s2874
                  %s2890 = sphi 0, %s2897
                  %s2891 = sphi %s2878, %s2900
                  %s2892 = sphi %s2881, %s2901
                $region69: #{critic_forward.2} parent=58 // loop_header_branch
                  %2889 = sbr.rel (%p2886) target = $region73
                $region70: #{critic_forward.2} parent=58 // loop_body
                  %v2893 = vld [vmem:[%s2891] sm:$0xff]
                  %2894 = vst [vmem:[%s2892] sm:$0xff] %v2893
                  %s2895 = sadd.s32 1, %s2890
                  %p2896 = scmp.ge.s32.totalorder %s2895, %s2874
                  %s2897 = scalar_select %p2896, 0, %s2895
                  %s2898 = smul.u32 %s2897, 8
                  %s2899 = smul.u32 %s2897, 8
                  %s2900 = scalar_lea.vmem %s2878, %s2898 [#allocation2]
                  %s2901 = scalar_lea.vmem %s2881, %s2899
                $region71: #{critic_forward.2} parent=58 // loop_footer
                  %s2887 = sadd.s32 %s2885, 1
                $region72: #{critic_forward.2} parent=58 // loop_footer_branch
                  %2884 = sbr.rel target = $region68
                $region73: #{critic_forward.2} parent=58 // loop_exit
                  _
              $region59: #{critic_forward.2} parent=43 // pred_fallthru
                _
              %p2902 = pneg %p2721
              // Predicated region
              $region74: #{critic_forward.2} parent=43 // pred_check
                _
              $region75: #{critic_forward.2} parent=43 // pred_check_branch
                %2904 = sbr.rel (%p2721) target = $region77
              $region76: #{critic_forward.2} parent=43 // pred_region
                %s2905 = sand.u32 %s2698, 7
                %s2906 = ssub.s32 %s2698, %s2905
                %s2907 = scalar_lea.vmem %s2686, %s2906 [#allocation2]
                %s2908 = ssub.s32 %s2698, %s2905
                %s2909 = scalar_lea.vmem %s2697, %s2908
                %s2910 = sshrl.u32 %s2698, 3
                %s2911 = sshrl.u32 %s2910, 6
                // While loop
                $region78: #{critic_forward.2} parent=76 // loop_pre_header
                  _
                $region79: #{critic_forward.2} parent=76 // loop_header
                  %s2915 = sphi 0, %s2917
                  %p2916 = scmp.ge.s32.totalorder %s2915, %s2911
                  %s2920 = sphi 0, %s3053
                  %s2921 = sphi %s2686, %s3056
                  %s2922 = sphi %s2697, %s3057
                $region80: #{critic_forward.2} parent=76 // loop_header_branch
                  %2919 = sbr.rel (%p2916) target = $region84
                $region81: #{critic_forward.2} parent=76 // loop_body
                  %v2923 = vld [vmem:[%s2921] sm:$0xff]
                  %2924 = vst [vmem:[%s2922] sm:$0xff] %v2923
                  %v2925 = vld [vmem:[%s2921 + $0x8] sm:$0xff]
                  %2926 = vst [vmem:[%s2922 + $0x8] sm:$0xff] %v2925
                  %v2927 = vld [vmem:[%s2921 + $0x10] sm:$0xff]
                  %2928 = vst [vmem:[%s2922 + $0x10] sm:$0xff] %v2927
                  %v2929 = vld [vmem:[%s2921 + $0x18] sm:$0xff]
                  %2930 = vst [vmem:[%s2922 + $0x18] sm:$0xff] %v2929
                  %v2931 = vld [vmem:[%s2921 + $0x20] sm:$0xff]
                  %2932 = vst [vmem:[%s2922 + $0x20] sm:$0xff] %v2931
                  %v2933 = vld [vmem:[%s2921 + $0x28] sm:$0xff]
                  %2934 = vst [vmem:[%s2922 + $0x28] sm:$0xff] %v2933
                  %v2935 = vld [vmem:[%s2921 + $0x30] sm:$0xff]
                  %2936 = vst [vmem:[%s2922 + $0x30] sm:$0xff] %v2935
                  %v2937 = vld [vmem:[%s2921 + $0x38] sm:$0xff]
                  %2938 = vst [vmem:[%s2922 + $0x38] sm:$0xff] %v2937
                  %v2939 = vld [vmem:[%s2921 + $0x40] sm:$0xff]
                  %2940 = vst [vmem:[%s2922 + $0x40] sm:$0xff] %v2939
                  %v2941 = vld [vmem:[%s2921 + $0x48] sm:$0xff]
                  %2942 = vst [vmem:[%s2922 + $0x48] sm:$0xff] %v2941
                  %v2943 = vld [vmem:[%s2921 + $0x50] sm:$0xff]
                  %2944 = vst [vmem:[%s2922 + $0x50] sm:$0xff] %v2943
                  %v2945 = vld [vmem:[%s2921 + $0x58] sm:$0xff]
                  %2946 = vst [vmem:[%s2922 + $0x58] sm:$0xff] %v2945
                  %v2947 = vld [vmem:[%s2921 + $0x60] sm:$0xff]
                  %2948 = vst [vmem:[%s2922 + $0x60] sm:$0xff] %v2947
                  %v2949 = vld [vmem:[%s2921 + $0x68] sm:$0xff]
                  %2950 = vst [vmem:[%s2922 + $0x68] sm:$0xff] %v2949
                  %v2951 = vld [vmem:[%s2921 + $0x70] sm:$0xff]
                  %2952 = vst [vmem:[%s2922 + $0x70] sm:$0xff] %v2951
                  %v2953 = vld [vmem:[%s2921 + $0x78] sm:$0xff]
                  %2954 = vst [vmem:[%s2922 + $0x78] sm:$0xff] %v2953
                  %v2955 = vld [vmem:[%s2921 + $0x80] sm:$0xff]
                  %2956 = vst [vmem:[%s2922 + $0x80] sm:$0xff] %v2955
                  %v2957 = vld [vmem:[%s2921 + $0x88] sm:$0xff]
                  %2958 = vst [vmem:[%s2922 + $0x88] sm:$0xff] %v2957
                  %v2959 = vld [vmem:[%s2921 + $0x90] sm:$0xff]
                  %2960 = vst [vmem:[%s2922 + $0x90] sm:$0xff] %v2959
                  %v2961 = vld [vmem:[%s2921 + $0x98] sm:$0xff]
                  %2962 = vst [vmem:[%s2922 + $0x98] sm:$0xff] %v2961
                  %v2963 = vld [vmem:[%s2921 + $0xa0] sm:$0xff]
                  %2964 = vst [vmem:[%s2922 + $0xa0] sm:$0xff] %v2963
                  %v2965 = vld [vmem:[%s2921 + $0xa8] sm:$0xff]
                  %2966 = vst [vmem:[%s2922 + $0xa8] sm:$0xff] %v2965
                  %v2967 = vld [vmem:[%s2921 + $0xb0] sm:$0xff]
                  %2968 = vst [vmem:[%s2922 + $0xb0] sm:$0xff] %v2967
                  %v2969 = vld [vmem:[%s2921 + $0xb8] sm:$0xff]
                  %2970 = vst [vmem:[%s2922 + $0xb8] sm:$0xff] %v2969
                  %v2971 = vld [vmem:[%s2921 + $0xc0] sm:$0xff]
                  %2972 = vst [vmem:[%s2922 + $0xc0] sm:$0xff] %v2971
                  %v2973 = vld [vmem:[%s2921 + $0xc8] sm:$0xff]
                  %2974 = vst [vmem:[%s2922 + $0xc8] sm:$0xff] %v2973
                  %v2975 = vld [vmem:[%s2921 + $0xd0] sm:$0xff]
                  %2976 = vst [vmem:[%s2922 + $0xd0] sm:$0xff] %v2975
                  %v2977 = vld [vmem:[%s2921 + $0xd8] sm:$0xff]
                  %2978 = vst [vmem:[%s2922 + $0xd8] sm:$0xff] %v2977
                  %v2979 = vld [vmem:[%s2921 + $0xe0] sm:$0xff]
                  %2980 = vst [vmem:[%s2922 + $0xe0] sm:$0xff] %v2979
                  %v2981 = vld [vmem:[%s2921 + $0xe8] sm:$0xff]
                  %2982 = vst [vmem:[%s2922 + $0xe8] sm:$0xff] %v2981
                  %v2983 = vld [vmem:[%s2921 + $0xf0] sm:$0xff]
                  %2984 = vst [vmem:[%s2922 + $0xf0] sm:$0xff] %v2983
                  %v2985 = vld [vmem:[%s2921 + $0xf8] sm:$0xff]
                  %2986 = vst [vmem:[%s2922 + $0xf8] sm:$0xff] %v2985
                  %v2987 = vld [vmem:[%s2921 + $0x100] sm:$0xff]
                  %2988 = vst [vmem:[%s2922 + $0x100] sm:$0xff] %v2987
                  %v2989 = vld [vmem:[%s2921 + $0x108] sm:$0xff]
                  %2990 = vst [vmem:[%s2922 + $0x108] sm:$0xff] %v2989
                  %v2991 = vld [vmem:[%s2921 + $0x110] sm:$0xff]
                  %2992 = vst [vmem:[%s2922 + $0x110] sm:$0xff] %v2991
                  %v2993 = vld [vmem:[%s2921 + $0x118] sm:$0xff]
                  %2994 = vst [vmem:[%s2922 + $0x118] sm:$0xff] %v2993
                  %v2995 = vld [vmem:[%s2921 + $0x120] sm:$0xff]
                  %2996 = vst [vmem:[%s2922 + $0x120] sm:$0xff] %v2995
                  %v2997 = vld [vmem:[%s2921 + $0x128] sm:$0xff]
                  %2998 = vst [vmem:[%s2922 + $0x128] sm:$0xff] %v2997
                  %v2999 = vld [vmem:[%s2921 + $0x130] sm:$0xff]
                  %3000 = vst [vmem:[%s2922 + $0x130] sm:$0xff] %v2999
                  %v3001 = vld [vmem:[%s2921 + $0x138] sm:$0xff]
                  %3002 = vst [vmem:[%s2922 + $0x138] sm:$0xff] %v3001
                  %v3003 = vld [vmem:[%s2921 + $0x140] sm:$0xff]
                  %3004 = vst [vmem:[%s2922 + $0x140] sm:$0xff] %v3003
                  %v3005 = vld [vmem:[%s2921 + $0x148] sm:$0xff]
                  %3006 = vst [vmem:[%s2922 + $0x148] sm:$0xff] %v3005
                  %v3007 = vld [vmem:[%s2921 + $0x150] sm:$0xff]
                  %3008 = vst [vmem:[%s2922 + $0x150] sm:$0xff] %v3007
                  %v3009 = vld [vmem:[%s2921 + $0x158] sm:$0xff]
                  %3010 = vst [vmem:[%s2922 + $0x158] sm:$0xff] %v3009
                  %v3011 = vld [vmem:[%s2921 + $0x160] sm:$0xff]
                  %3012 = vst [vmem:[%s2922 + $0x160] sm:$0xff] %v3011
                  %v3013 = vld [vmem:[%s2921 + $0x168] sm:$0xff]
                  %3014 = vst [vmem:[%s2922 + $0x168] sm:$0xff] %v3013
                  %v3015 = vld [vmem:[%s2921 + $0x170] sm:$0xff]
                  %3016 = vst [vmem:[%s2922 + $0x170] sm:$0xff] %v3015
                  %v3017 = vld [vmem:[%s2921 + $0x178] sm:$0xff]
                  %3018 = vst [vmem:[%s2922 + $0x178] sm:$0xff] %v3017
                  %v3019 = vld [vmem:[%s2921 + $0x180] sm:$0xff]
                  %3020 = vst [vmem:[%s2922 + $0x180] sm:$0xff] %v3019
                  %v3021 = vld [vmem:[%s2921 + $0x188] sm:$0xff]
                  %3022 = vst [vmem:[%s2922 + $0x188] sm:$0xff] %v3021
                  %v3023 = vld [vmem:[%s2921 + $0x190] sm:$0xff]
                  %3024 = vst [vmem:[%s2922 + $0x190] sm:$0xff] %v3023
                  %v3025 = vld [vmem:[%s2921 + $0x198] sm:$0xff]
                  %3026 = vst [vmem:[%s2922 + $0x198] sm:$0xff] %v3025
                  %v3027 = vld [vmem:[%s2921 + $0x1a0] sm:$0xff]
                  %3028 = vst [vmem:[%s2922 + $0x1a0] sm:$0xff] %v3027
                  %v3029 = vld [vmem:[%s2921 + $0x1a8] sm:$0xff]
                  %3030 = vst [vmem:[%s2922 + $0x1a8] sm:$0xff] %v3029
                  %v3031 = vld [vmem:[%s2921 + $0x1b0] sm:$0xff]
                  %3032 = vst [vmem:[%s2922 + $0x1b0] sm:$0xff] %v3031
                  %v3033 = vld [vmem:[%s2921 + $0x1b8] sm:$0xff]
                  %3034 = vst [vmem:[%s2922 + $0x1b8] sm:$0xff] %v3033
                  %v3035 = vld [vmem:[%s2921 + $0x1c0] sm:$0xff]
                  %3036 = vst [vmem:[%s2922 + $0x1c0] sm:$0xff] %v3035
                  %v3037 = vld [vmem:[%s2921 + $0x1c8] sm:$0xff]
                  %3038 = vst [vmem:[%s2922 + $0x1c8] sm:$0xff] %v3037
                  %v3039 = vld [vmem:[%s2921 + $0x1d0] sm:$0xff]
                  %3040 = vst [vmem:[%s2922 + $0x1d0] sm:$0xff] %v3039
                  %v3041 = vld [vmem:[%s2921 + $0x1d8] sm:$0xff]
                  %3042 = vst [vmem:[%s2922 + $0x1d8] sm:$0xff] %v3041
                  %v3043 = vld [vmem:[%s2921 + $0x1e0] sm:$0xff]
                  %3044 = vst [vmem:[%s2922 + $0x1e0] sm:$0xff] %v3043
                  %v3045 = vld [vmem:[%s2921 + $0x1e8] sm:$0xff]
                  %3046 = vst [vmem:[%s2922 + $0x1e8] sm:$0xff] %v3045
                  %v3047 = vld [vmem:[%s2921 + $0x1f0] sm:$0xff]
                  %3048 = vst [vmem:[%s2922 + $0x1f0] sm:$0xff] %v3047
                  %v3049 = vld [vmem:[%s2921 + $0x1f8] sm:$0xff]
                  %3050 = vst [vmem:[%s2922 + $0x1f8] sm:$0xff] %v3049
                  %s3051 = sadd.s32 1, %s2920
                  %p3052 = scmp.ge.s32.totalorder %s3051, %s2911
                  %s3053 = scalar_select %p3052, 0, %s3051
                  %s3054 = smul.u32 %s3053, 512
                  %s3055 = smul.u32 %s3053, 512
                  %s3056 = scalar_lea.vmem %s2686, %s3054 [#allocation2]
                  %s3057 = scalar_lea.vmem %s2697, %s3055
                $region82: #{critic_forward.2} parent=76 // loop_footer
                  %s2917 = sadd.s32 %s2915, 1
                $region83: #{critic_forward.2} parent=76 // loop_footer_branch
                  %2914 = sbr.rel target = $region79
                $region84: #{critic_forward.2} parent=76 // loop_exit
                  _
                %s3058 = sshrl.u32 %s2910, 6
                %s3059 = sand.u32 %s2910, 63
                %s3060 = smul.u32 %s3058, 64
                %s3061 = smul.u32 128, %s3060
                %s3062 = sshra.s32 %s3061, 4
                %s3063 = scalar_lea.vmem %s2686, %s3062 [#allocation2]
                %s3064 = smul.u32 128, %s3060
                %s3065 = sshra.s32 %s3064, 4
                %s3066 = scalar_lea.vmem %s2697, %s3065
                // While loop
                $region85: #{critic_forward.2} parent=76 // loop_pre_header
                  _
                $region86: #{critic_forward.2} parent=76 // loop_header
                  %s3070 = sphi 0, %s3072
                  %p3071 = scmp.ge.s32.totalorder %s3070, %s3059
                  %s3075 = sphi 0, %s3082
                  %s3076 = sphi %s3063, %s3085
                  %s3077 = sphi %s3066, %s3086
                $region87: #{critic_forward.2} parent=76 // loop_header_branch
                  %3074 = sbr.rel (%p3071) target = $region91
                $region88: #{critic_forward.2} parent=76 // loop_body
                  %v3078 = vld [vmem:[%s3076] sm:$0xff]
                  %3079 = vst [vmem:[%s3077] sm:$0xff] %v3078
                  %s3080 = sadd.s32 1, %s3075
                  %p3081 = scmp.ge.s32.totalorder %s3080, %s3059
                  %s3082 = scalar_select %p3081, 0, %s3080
                  %s3083 = smul.u32 %s3082, 8
                  %s3084 = smul.u32 %s3082, 8
                  %s3085 = scalar_lea.vmem %s3063, %s3083 [#allocation2]
                  %s3086 = scalar_lea.vmem %s3066, %s3084
                $region89: #{critic_forward.2} parent=76 // loop_footer
                  %s3072 = sadd.s32 %s3070, 1
                $region90: #{critic_forward.2} parent=76 // loop_footer_branch
                  %3069 = sbr.rel target = $region86
                $region91: #{critic_forward.2} parent=76 // loop_exit
                  _
                %s3087 = sshllo.u32 0, %s2905
                loop: start=0, step=1, limit=1
                $region92: #{critic_forward.2} parent=76 // loop_pre_header
                  _
                $region93: #{critic_forward.2} parent=76 // loop_header
                  %s3089 = sphi 0, %s3093
                  %p3090 = scmp.ge.s32.totalorder %s3089, 1
                  %s3094 = sphi %s2907, %s2907
                  %s3095 = sphi %s2909, %s2909
                $region94: #{critic_forward.2} parent=76 // loop_header_branch
                  %3092 = sbr.rel (%p3090) target = $region98
                $region95: #{critic_forward.2} parent=76 // loop_body
                  %v3096 = vld [vmem:[%s3094] sm:%s3087]
                  %3097 = vst [vmem:[%s3095] sm:%s3087] %v3096
                $region96: #{critic_forward.2} parent=76 // loop_footer
                  %s3093 = sadd.s32 1, %s3089
                $region97: #{critic_forward.2} parent=76 // loop_footer_branch
                  %3088 = sbr.rel target = $region93
                $region98: #{critic_forward.2} parent=76 // loop_exit
                  _
              $region77: #{critic_forward.2} parent=43 // pred_fallthru
                _
            $region44: #{critic_forward.2} parent=39 // pred_fallthru
              _
            // Predicated region
            $region45: #{critic_forward.2} parent=39 // pred_check
              %p2706 = pneg %p2702
            $region46: #{critic_forward.2} parent=39 // pred_check_branch
              %2708 = sbr.rel (%p2706) target = $region48
            $region47: #{critic_forward.2} parent=39 // pred_region
              %s2709 = sshllo.u32 0, %s2698
              loop: start=0, step=1, limit=1
              $region49: #{critic_forward.2} parent=47 // loop_pre_header
                _
              $region50: #{critic_forward.2} parent=47 // loop_header
                %s2711 = sphi 0, %s2715
                %p2712 = scmp.ge.s32.totalorder %s2711, 1
                %s2716 = sphi %s2686, %s2686
                %s2717 = sphi %s2697, %s2697
              $region51: #{critic_forward.2} parent=47 // loop_header_branch
                %2714 = sbr.rel (%p2712) target = $region55
              $region52: #{critic_forward.2} parent=47 // loop_body
                %v2718 = vld [vmem:[%s2716] sm:%s2709]
                %2719 = vst [vmem:[%s2717] sm:%s2709] %v2718
              $region53: #{critic_forward.2} parent=47 // loop_footer
                %s2715 = sadd.s32 1, %s2711
              $region54: #{critic_forward.2} parent=47 // loop_footer_branch
                %2710 = sbr.rel target = $region50
              $region55: #{critic_forward.2} parent=47 // loop_exit
                _
            $region48: #{critic_forward.2} parent=39 // pred_fallthru
              _
          $region40: #{critic_forward.2} parent=35 // pred_fallthru
            _
          %3098 = vnop
        $region36: #{critic_forward.2} parent=31 // pred_fallthru
          _
      $region32: #{critic_forward.2} parent=5 // pred_fallthru
        _
      %p3099 = scmp.le.s32.totalorder 2, %s9
      // Predicated region
      $region99: #{critic_forward.2} parent=5 // pred_check
        %p3100 = pneg %p3099
      $region100: #{critic_forward.2} parent=5 // pred_check_branch
        %3102 = sbr.rel (%p3100) target = $region102
      $region101: #{critic_forward.2} parent=5 // pred_region
        %s3103 = ssub.s32 %s9, 2
        // Predicated region
        $region103: #{critic_forward.2} parent=101 // pred_check
          %p3104 = pneg %p106
        $region104: #{critic_forward.2} parent=101 // pred_check_branch
          %3106 = sbr.rel (%p3104) target = $region106
        $region105: #{critic_forward.2} parent=101 // pred_region
          %s3107 = sand.u32 %s91, 1
          %s3108 = sand.u32 %s91, 1
          %s3109 = smul.addr %s3108, 248
          %s3110 = scalar_lea.vmem [#allocation2], %s3109
        $region106: #{critic_forward.2} parent=101 // pred_fallthru
          _
      $region102: #{critic_forward.2} parent=5 // pred_fallthru
        _
    $region6: #{critic_forward.2} parent=1 // loop_footer
      %s13 = sadd.s32 1, %s9
    $region7: #{critic_forward.2} parent=1 // loop_footer_branch
      %8 = sbr.rel target = $region3
    $region8: #{critic_forward.2} parent=1 // loop_exit
      _

// kernel: critic_forward.3
$region0: #{critic_forward.3}
  #allocation0 [shape = 'u32[]', space=smem, size = 0x4, offset = 0x4, fixed_abs, tag = 'smem constant byte address 0x4 - core index']
  #allocation1 [shape = 'u32[144,128]{1,0:T(1,128)}', space=vmem, size = 0x12000, scoped, tag = 'internal scratch']
  #allocation2 [shape = 'f32[1,1]{1,0:T(1,128)S(1)}', space=vmem, size = 0x200, scoped, tag = 'scoped memory for critic_forward.3']
  %s0 = inlined_call_operand.vmem [shape: f32[4,2,125,125], index: 0, kind: input, shape index: {}]
  %s1 = inlined_call_operand.vmem [shape: f32[4,2,125], index: 1, kind: input, shape index: {}]
  %s2 = inlined_call_operand.vmem [shape: f32[2,1], index: 2, kind: input, shape index: {}]
  %s3 = inlined_call_operand.vmem [shape: f32[2,125], index: 3, kind: input, shape index: {}]
  %s4 = inlined_call_operand.<no memory space> [shape: f32[1,1], index: 4, kind: input, shape index: {}]
  %s5 = inlined_call_operand.hbm [shape: f32[1,1,2], index: 5, kind: output, shape index: {}]
  %s6 = sld [smem:[#allocation0]]
  $region30: #{critic_forward.3} parent=0
    _
  %s8 = ssub.s32 1, %s6
  %s9 = scalar_select 0, %s8, %s6
  %v10 = vstv %s4
  %11 = vst [vmem:[#allocation2] sm:$0x1] %v10
  $region1: #{critic_forward.3} parent=0
    #allocation3 [shape = 'u8[512]{0}', space=vmem, size = 0x400, scoped, tag = 'output window, operand 0, single buffered']
    #allocation4 [shape = 's32[1]{0}', space=sflag, size = 0x4, scoped, tag = 'scoped memory for critic_forward.3']
    %12 = vsyncpa [#allocation4], 0
    // Predicated region
    $region2: #{critic_forward.3} parent=1 // pred_check
      _
    $region3: #{critic_forward.3} parent=1 // pred_check_branch
      %14 = sbr.rel (0) target = $region5
    $region4: #{critic_forward.3} parent=1 // pred_region
      _
    $region5: #{critic_forward.3} parent=1 // pred_fallthru
      _
    // Predicated region
    $region6: #{critic_forward.3} parent=1 // pred_check
      _
    $region7: #{critic_forward.3} parent=1 // pred_check_branch
      %16 = sbr.rel (0) target = $region9
    $region8: #{critic_forward.3} parent=1 // pred_region
      _
    $region9: #{critic_forward.3} parent=1 // pred_fallthru
      _
    // Predicated region
    $region10: #{critic_forward.3} parent=1 // pred_check
      _
    $region11: #{critic_forward.3} parent=1 // pred_check_branch
      %18 = sbr.rel (0) target = $region13
    $region12: #{critic_forward.3} parent=1 // pred_region
      _
    $region13: #{critic_forward.3} parent=1 // pred_fallthru
      _
    // Predicated region
    $region14: #{critic_forward.3} parent=1 // pred_check
      _
    $region15: #{critic_forward.3} parent=1 // pred_check_branch
      %20 = sbr.rel (0) target = $region17
    $region16: #{critic_forward.3} parent=1 // pred_region
      _
    $region17: #{critic_forward.3} parent=1 // pred_fallthru
      _
    // Predicated region
    $region18: #{critic_forward.3} parent=1 // pred_check
      _
    $region19: #{critic_forward.3} parent=1 // pred_check_branch
      %22 = sbr.rel (0) target = $region21
    $region20: #{critic_forward.3} parent=1 // pred_region
      _
    $region21: #{critic_forward.3} parent=1 // pred_fallthru
      _
    %v23 = vlaneseq
    %v24 = vand.u32 %v23, 127
    %v25 = vld [vmem:[%s2] sm:$0x3]
    %v26 = vld [vmem:[%s3] sm:$0x3]
    %v27 = vld [vmem:[%s1] sm:$0x3]
    %v28 = vld [vmem:[%s0] sm:$0xff]
    %v29 = vld [vmem:[%s0 + $0x8] sm:$0xff]
    %v30 = vld [vmem:[%s0 + $0x10] sm:$0xff]
    %v31 = vld [vmem:[%s0 + $0x18] sm:$0xff]
    %v32 = vld [vmem:[%s0 + $0x20] sm:$0xff]
    %v33 = vld [vmem:[%s0 + $0x28] sm:$0xff]
    %v34 = vld [vmem:[%s0 + $0x30] sm:$0xff]
    %v35 = vld [vmem:[%s0 + $0x38] sm:$0xff]
    %v36 = vld [vmem:[%s0 + $0x40] sm:$0xff]
    %v37 = vld [vmem:[%s0 + $0x48] sm:$0xff]
    %v38 = vld [vmem:[%s0 + $0x50] sm:$0xff]
    %v39 = vld [vmem:[%s0 + $0x58] sm:$0xff]
    %v40 = vld [vmem:[%s0 + $0x60] sm:$0xff]
    %v41 = vld [vmem:[%s0 + $0x68] sm:$0xff]
    %v42 = vld [vmem:[%s0 + $0x70] sm:$0xff]
    %v43 = vld [vmem:[%s0 + $0x78] sm:$0x1f]
    %s44 = scalar_lea.vmem %s1, 2
    %v45 = vld [vmem:[%s44] sm:$0x3]
    %s46 = scalar_lea.vmem %s0, 256
    %v47 = vld [vmem:[%s46] sm:$0xff]
    %v48 = vld [vmem:[%s46 + $0x8] sm:$0xff]
    %v49 = vld [vmem:[%s46 + $0x10] sm:$0xff]
    %v50 = vld [vmem:[%s46 + $0x18] sm:$0xff]
    %v51 = vld [vmem:[%s46 + $0x20] sm:$0xff]
    %v52 = vld [vmem:[%s46 + $0x28] sm:$0xff]
    %v53 = vld [vmem:[%s46 + $0x30] sm:$0xff]
    %v54 = vld [vmem:[%s46 + $0x38] sm:$0xff]
    %v55 = vld [vmem:[%s46 + $0x40] sm:$0xff]
    %v56 = vld [vmem:[%s46 + $0x48] sm:$0xff]
    %v57 = vld [vmem:[%s46 + $0x50] sm:$0xff]
    %v58 = vld [vmem:[%s46 + $0x58] sm:$0xff]
    %v59 = vld [vmem:[%s46 + $0x60] sm:$0xff]
    %v60 = vld [vmem:[%s46 + $0x68] sm:$0xff]
    %v61 = vld [vmem:[%s46 + $0x70] sm:$0xff]
    %v62 = vld [vmem:[%s46 + $0x78] sm:$0x1f]
    %vm63 = vcmask 1022976
    %v65 = vsel %vm63, %v45, 0
    %vm67 = vcmask 1044480
    %v69 = vsel %vm67, %v62, 0
    %71 = vmatprep.subr.mxu0 0.0
    %72 = vmatpush1.msra.mxu0 %v47
    %73 = vmatprep.subr.mxu0 0.0
    %74 = vmatpush1.msra.mxu0 %v48
    %75 = vmatprep.subr.mxu0 0.0
    %76 = vmatpush1.msra.mxu0 %v49
    %77 = vmatprep.subr.mxu0 0.0
    %78 = vmatpush1.msra.mxu0 %v50
    %79 = vmatprep.subr.mxu0 0.0
    %80 = vmatpush1.msra.mxu0 %v51
    %81 = vmatprep.subr.mxu0 0.0
    %82 = vmatpush1.msra.mxu0 %v52
    %83 = vmatprep.subr.mxu0 0.0
    %84 = vmatpush1.msra.mxu0 %v53
    %85 = vmatprep.subr.mxu0 0.0
    %86 = vmatpush1.msra.mxu0 %v54
    %87 = vmatprep.subr.mxu0 0.0
    %88 = vmatpush1.msra.mxu0 %v55
    %89 = vmatprep.subr.mxu0 0.0
    %90 = vmatpush1.msra.mxu0 %v56
    %91 = vmatprep.subr.mxu0 0.0
    %92 = vmatpush1.msra.mxu0 %v57
    %93 = vmatprep.subr.mxu0 0.0
    %94 = vmatpush1.msra.mxu0 %v58
    %95 = vmatprep.subr.mxu0 0.0
    %96 = vmatpush1.msra.mxu0 %v59
    %97 = vmatprep.subr.mxu0 0.0
    %98 = vmatpush1.msra.mxu0 %v60
    %99 = vmatprep.subr.mxu0 0.0
    %100 = vmatpush1.msra.mxu0 %v61
    %101 = vmatprep.subr.mxu0 0.0
    %102 = vmatpush1.msra.mxu0 %v69
    %103 = vmatprep.subr.mxu0 0.0
    %104 = vmatpush1.msra.mxu0 0.0
    %105 = vmatprep.subr.mxu0 0.0
    %106 = vmatpush1.msra.mxu0 0.0
    %107 = vmatprep.subr.mxu0 0.0
    %108 = vmatpush1.msra.mxu0 0.0
    %109 = vmatprep.subr.mxu0 0.0
    %110 = vmatpush1.msra.mxu0 0.0
    %111 = vmatprep.subr.mxu0 0.0
    %112 = vmatpush1.msra.mxu0 0.0
    %113 = vmatprep.subr.mxu0 0.0
    %114 = vmatpush1.msra.mxu0 0.0
    %115 = vmatprep.subr.mxu0 0.0
    %116 = vmatpush1.msra.mxu0 0.0
    %117 = vmatprep.subr.mxu0 0.0
    %118 = vmatpush1.msra.mxu0 0.0
    %119 = vmatprep.subr.mxu0 0.0
    %120 = vmatpush1.msra.mxu0 0.0
    %121 = vmatprep.subr.mxu0 0.0
    %122 = vmatpush1.msra.mxu0 0.0
    %123 = vmatprep.subr.mxu0 0.0
    %124 = vmatpush1.msra.mxu0 0.0
    %125 = vmatprep.subr.mxu0 0.0
    %126 = vmatpush1.msra.mxu0 0.0
    %127 = vmatprep.subr.mxu0 0.0
    %128 = vmatpush1.msra.mxu0 0.0
    %129 = vmatprep.subr.mxu0 0.0
    %130 = vmatpush1.msra.mxu0 0.0
    %131 = vmatprep.subr.mxu0 0.0
    %132 = vmatpush1.msra.mxu0 0.0
    %133 = vmatprep.subr.mxu0 0.0
    %134 = vmatpush1.msra.mxu0 0.0
    %135 = vmatprep.mubr.f32.mxu0 0.0
    %136 = vmatmul.mubr.f32.gmra.mrb[0].mxu0 %v65
    %v137 = vpop.f32.mrb[0].mxu0
    %v138 = vadd.f32 0.0, %v137
    %v139 = vpop.f32.mrb[0].mxu0
    %140 = vdwg.mxu0
    %v142 = vsel %vm63, %v27, 0
    %v145 = vsel %vm67, %v43, 0
    %147 = vmatprep.subr.mxu0 0.0
    %148 = vmatpush1.msra.mxu0 %v28
    %149 = vmatprep.subr.mxu0 0.0
    %150 = vmatpush1.msra.mxu0 %v29
    %151 = vmatprep.subr.mxu0 0.0
    %152 = vmatpush1.msra.mxu0 %v30
    %153 = vmatprep.subr.mxu0 0.0
    %154 = vmatpush1.msra.mxu0 %v31
    %155 = vmatprep.subr.mxu0 0.0
    %156 = vmatpush1.msra.mxu0 %v32
    %157 = vmatprep.subr.mxu0 0.0
    %158 = vmatpush1.msra.mxu0 %v33
    %159 = vmatprep.subr.mxu0 0.0
    %160 = vmatpush1.msra.mxu0 %v34
    %161 = vmatprep.subr.mxu0 0.0
    %162 = vmatpush1.msra.mxu0 %v35
    %163 = vmatprep.subr.mxu0 0.0
    %164 = vmatpush1.msra.mxu0 %v36
    %165 = vmatprep.subr.mxu0 0.0
    %166 = vmatpush1.msra.mxu0 %v37
    %167 = vmatprep.subr.mxu0 0.0
    %168 = vmatpush1.msra.mxu0 %v38
    %169 = vmatprep.subr.mxu0 0.0
    %170 = vmatpush1.msra.mxu0 %v39
    %171 = vmatprep.subr.mxu0 0.0
    %172 = vmatpush1.msra.mxu0 %v40
    %173 = vmatprep.subr.mxu0 0.0
    %174 = vmatpush1.msra.mxu0 %v41
    %175 = vmatprep.subr.mxu0 0.0
    %176 = vmatpush1.msra.mxu0 %v42
    %177 = vmatprep.subr.mxu0 0.0
    %178 = vmatpush1.msra.mxu0 %v145
    %179 = vmatprep.subr.mxu0 0.0
    %180 = vmatpush1.msra.mxu0 0.0
    %181 = vmatprep.subr.mxu0 0.0
    %182 = vmatpush1.msra.mxu0 0.0
    %183 = vmatprep.subr.mxu0 0.0
    %184 = vmatpush1.msra.mxu0 0.0
    %185 = vmatprep.subr.mxu0 0.0
    %186 = vmatpush1.msra.mxu0 0.0
    %187 = vmatprep.subr.mxu0 0.0
    %188 = vmatpush1.msra.mxu0 0.0
    %189 = vmatprep.subr.mxu0 0.0
    %190 = vmatpush1.msra.mxu0 0.0
    %191 = vmatprep.subr.mxu0 0.0
    %192 = vmatpush1.msra.mxu0 0.0
    %193 = vmatprep.subr.mxu0 0.0
    %194 = vmatpush1.msra.mxu0 0.0
    %195 = vmatprep.subr.mxu0 0.0
    %196 = vmatpush1.msra.mxu0 0.0
    %197 = vmatprep.subr.mxu0 0.0
    %198 = vmatpush1.msra.mxu0 0.0
    %199 = vmatprep.subr.mxu0 0.0
    %200 = vmatpush1.msra.mxu0 0.0
    %201 = vmatprep.subr.mxu0 0.0
    %202 = vmatpush1.msra.mxu0 0.0
    %203 = vmatprep.subr.mxu0 0.0
    %204 = vmatpush1.msra.mxu0 0.0
    %205 = vmatprep.subr.mxu0 0.0
    %206 = vmatpush1.msra.mxu0 0.0
    %207 = vmatprep.subr.mxu0 0.0
    %208 = vmatpush1.msra.mxu0 0.0
    %209 = vmatprep.subr.mxu0 0.0
    %210 = vmatpush1.msra.mxu0 0.0
    %211 = vmatprep.mubr.f32.mxu0 0.0
    %212 = vmatmul.mubr.f32.gmra.mrb[0].mxu0 %v142
    %v213 = vpop.f32.mrb[0].mxu0
    %v214 = vadd.f32 %v138, %v213
    %v215 = vpop.f32.mrb[0].mxu0
    %216 = vdwg.mxu0
    %s217 = scalar_lea.vmem %s1, 4
    %v218 = vld [vmem:[%s217] sm:$0x3]
    %s219 = scalar_lea.vmem %s0, 512
    %v220 = vld [vmem:[%s219] sm:$0xff]
    %v221 = vld [vmem:[%s219 + $0x8] sm:$0xff]
    %v222 = vld [vmem:[%s219 + $0x10] sm:$0xff]
    %v223 = vld [vmem:[%s219 + $0x18] sm:$0xff]
    %v224 = vld [vmem:[%s219 + $0x20] sm:$0xff]
    %v225 = vld [vmem:[%s219 + $0x28] sm:$0xff]
    %v226 = vld [vmem:[%s219 + $0x30] sm:$0xff]
    %v227 = vld [vmem:[%s219 + $0x38] sm:$0xff]
    %v228 = vld [vmem:[%s219 + $0x40] sm:$0xff]
    %v229 = vld [vmem:[%s219 + $0x48] sm:$0xff]
    %v230 = vld [vmem:[%s219 + $0x50] sm:$0xff]
    %v231 = vld [vmem:[%s219 + $0x58] sm:$0xff]
    %v232 = vld [vmem:[%s219 + $0x60] sm:$0xff]
    %v233 = vld [vmem:[%s219 + $0x68] sm:$0xff]
    %v234 = vld [vmem:[%s219 + $0x70] sm:$0xff]
    %v235 = vld [vmem:[%s219 + $0x78] sm:$0x1f]
    %v237 = vsel %vm63, %v218, 0
    %v240 = vsel %vm67, %v235, 0
    %242 = vmatprep.subr.mxu0 0.0
    %243 = vmatpush1.msra.mxu0 %v220
    %244 = vmatprep.subr.mxu0 0.0
    %245 = vmatpush1.msra.mxu0 %v221
    %246 = vmatprep.subr.mxu0 0.0
    %247 = vmatpush1.msra.mxu0 %v222
    %248 = vmatprep.subr.mxu0 0.0
    %249 = vmatpush1.msra.mxu0 %v223
    %250 = vmatprep.subr.mxu0 0.0
    %251 = vmatpush1.msra.mxu0 %v224
    %252 = vmatprep.subr.mxu0 0.0
    %253 = vmatpush1.msra.mxu0 %v225
    %254 = vmatprep.subr.mxu0 0.0
    %255 = vmatpush1.msra.mxu0 %v226
    %256 = vmatprep.subr.mxu0 0.0
    %257 = vmatpush1.msra.mxu0 %v227
    %258 = vmatprep.subr.mxu0 0.0
    %259 = vmatpush1.msra.mxu0 %v228
    %260 = vmatprep.subr.mxu0 0.0
    %261 = vmatpush1.msra.mxu0 %v229
    %262 = vmatprep.subr.mxu0 0.0
    %263 = vmatpush1.msra.mxu0 %v230
    %264 = vmatprep.subr.mxu0 0.0
    %265 = vmatpush1.msra.mxu0 %v231
    %266 = vmatprep.subr.mxu0 0.0
    %267 = vmatpush1.msra.mxu0 %v232
    %268 = vmatprep.subr.mxu0 0.0
    %269 = vmatpush1.msra.mxu0 %v233
    %270 = vmatprep.subr.mxu0 0.0
    %271 = vmatpush1.msra.mxu0 %v234
    %272 = vmatprep.subr.mxu0 0.0
    %273 = vmatpush1.msra.mxu0 %v240
    %274 = vmatprep.subr.mxu0 0.0
    %275 = vmatpush1.msra.mxu0 0.0
    %276 = vmatprep.subr.mxu0 0.0
    %277 = vmatpush1.msra.mxu0 0.0
    %278 = vmatprep.subr.mxu0 0.0
    %279 = vmatpush1.msra.mxu0 0.0
    %280 = vmatprep.subr.mxu0 0.0
    %281 = vmatpush1.msra.mxu0 0.0
    %282 = vmatprep.subr.mxu0 0.0
    %283 = vmatpush1.msra.mxu0 0.0
    %284 = vmatprep.subr.mxu0 0.0
    %285 = vmatpush1.msra.mxu0 0.0
    %286 = vmatprep.subr.mxu0 0.0
    %287 = vmatpush1.msra.mxu0 0.0
    %288 = vmatprep.subr.mxu0 0.0
    %289 = vmatpush1.msra.mxu0 0.0
    %290 = vmatprep.subr.mxu0 0.0
    %291 = vmatpush1.msra.mxu0 0.0
    %292 = vmatprep.subr.mxu0 0.0
    %293 = vmatpush1.msra.mxu0 0.0
    %294 = vmatprep.subr.mxu0 0.0
    %295 = vmatpush1.msra.mxu0 0.0
    %296 = vmatprep.subr.mxu0 0.0
    %297 = vmatpush1.msra.mxu0 0.0
    %298 = vmatprep.subr.mxu0 0.0
    %299 = vmatpush1.msra.mxu0 0.0
    %300 = vmatprep.subr.mxu0 0.0
    %301 = vmatpush1.msra.mxu0 0.0
    %302 = vmatprep.subr.mxu0 0.0
    %303 = vmatpush1.msra.mxu0 0.0
    %304 = vmatprep.subr.mxu0 0.0
    %305 = vmatpush1.msra.mxu0 0.0
    %306 = vmatprep.mubr.f32.mxu0 0.0
    %307 = vmatmul.mubr.f32.gmra.mrb[0].mxu0 %v237
    %v308 = vpop.f32.mrb[0].mxu0
    %v309 = vadd.f32 0.0, %v308
    %v310 = vpop.f32.mrb[0].mxu0
    %311 = vdwg.mxu0
    %v312 = vadd.f32 %v214, %v309
    %s313 = scalar_lea.vmem %s1, 6
    %v314 = vld [vmem:[%s313] sm:$0x3]
    %s315 = scalar_lea.vmem %s0, 768
    %v316 = vld [vmem:[%s315] sm:$0xff]
    %v317 = vld [vmem:[%s315 + $0x8] sm:$0xff]
    %v318 = vld [vmem:[%s315 + $0x10] sm:$0xff]
    %v319 = vld [vmem:[%s315 + $0x18] sm:$0xff]
    %v320 = vld [vmem:[%s315 + $0x20] sm:$0xff]
    %v321 = vld [vmem:[%s315 + $0x28] sm:$0xff]
    %v322 = vld [vmem:[%s315 + $0x30] sm:$0xff]
    %v323 = vld [vmem:[%s315 + $0x38] sm:$0xff]
    %v324 = vld [vmem:[%s315 + $0x40] sm:$0xff]
    %v325 = vld [vmem:[%s315 + $0x48] sm:$0xff]
    %v326 = vld [vmem:[%s315 + $0x50] sm:$0xff]
    %v327 = vld [vmem:[%s315 + $0x58] sm:$0xff]
    %v328 = vld [vmem:[%s315 + $0x60] sm:$0xff]
    %v329 = vld [vmem:[%s315 + $0x68] sm:$0xff]
    %v330 = vld [vmem:[%s315 + $0x70] sm:$0xff]
    %v331 = vld [vmem:[%s315 + $0x78] sm:$0x1f]
    %v333 = vsel %vm63, %v314, 0
    %v336 = vsel %vm67, %v331, 0
    %338 = vmatprep.subr.mxu0 0.0
    %339 = vmatpush1.msra.mxu0 %v316
    %340 = vmatprep.subr.mxu0 0.0
    %341 = vmatpush1.msra.mxu0 %v317
    %342 = vmatprep.subr.mxu0 0.0
    %343 = vmatpush1.msra.mxu0 %v318
    %344 = vmatprep.subr.mxu0 0.0
    %345 = vmatpush1.msra.mxu0 %v319
    %346 = vmatprep.subr.mxu0 0.0
    %347 = vmatpush1.msra.mxu0 %v320
    %348 = vmatprep.subr.mxu0 0.0
    %349 = vmatpush1.msra.mxu0 %v321
    %350 = vmatprep.subr.mxu0 0.0
    %351 = vmatpush1.msra.mxu0 %v322
    %352 = vmatprep.subr.mxu0 0.0
    %353 = vmatpush1.msra.mxu0 %v323
    %354 = vmatprep.subr.mxu0 0.0
    %355 = vmatpush1.msra.mxu0 %v324
    %356 = vmatprep.subr.mxu0 0.0
    %357 = vmatpush1.msra.mxu0 %v325
    %358 = vmatprep.subr.mxu0 0.0
    %359 = vmatpush1.msra.mxu0 %v326
    %360 = vmatprep.subr.mxu0 0.0
    %361 = vmatpush1.msra.mxu0 %v327
    %362 = vmatprep.subr.mxu0 0.0
    %363 = vmatpush1.msra.mxu0 %v328
    %364 = vmatprep.subr.mxu0 0.0
    %365 = vmatpush1.msra.mxu0 %v329
    %366 = vmatprep.subr.mxu0 0.0
    %367 = vmatpush1.msra.mxu0 %v330
    %368 = vmatprep.subr.mxu0 0.0
    %369 = vmatpush1.msra.mxu0 %v336
    %370 = vmatprep.subr.mxu0 0.0
    %371 = vmatpush1.msra.mxu0 0.0
    %372 = vmatprep.subr.mxu0 0.0
    %373 = vmatpush1.msra.mxu0 0.0
    %374 = vmatprep.subr.mxu0 0.0
    %375 = vmatpush1.msra.mxu0 0.0
    %376 = vmatprep.subr.mxu0 0.0
    %377 = vmatpush1.msra.mxu0 0.0
    %378 = vmatprep.subr.mxu0 0.0
    %379 = vmatpush1.msra.mxu0 0.0
    %380 = vmatprep.subr.mxu0 0.0
    %381 = vmatpush1.msra.mxu0 0.0
    %382 = vmatprep.subr.mxu0 0.0
    %383 = vmatpush1.msra.mxu0 0.0
    %384 = vmatprep.subr.mxu0 0.0
    %385 = vmatpush1.msra.mxu0 0.0
    %386 = vmatprep.subr.mxu0 0.0
    %387 = vmatpush1.msra.mxu0 0.0
    %388 = vmatprep.subr.mxu0 0.0
    %389 = vmatpush1.msra.mxu0 0.0
    %390 = vmatprep.subr.mxu0 0.0
    %391 = vmatpush1.msra.mxu0 0.0
    %392 = vmatprep.subr.mxu0 0.0
    %393 = vmatpush1.msra.mxu0 0.0
    %394 = vmatprep.subr.mxu0 0.0
    %395 = vmatpush1.msra.mxu0 0.0
    %396 = vmatprep.subr.mxu0 0.0
    %397 = vmatpush1.msra.mxu0 0.0
    %398 = vmatprep.subr.mxu0 0.0
    %399 = vmatpush1.msra.mxu0 0.0
    %400 = vmatprep.subr.mxu0 0.0
    %401 = vmatpush1.msra.mxu0 0.0
    %402 = vmatprep.mubr.f32.mxu0 0.0
    %403 = vmatmul.mubr.f32.gmra.mrb[0].mxu0 %v333
    %v404 = vpop.f32.mrb[0].mxu0
    %v405 = vadd.f32 0.0, %v404
    %v406 = vpop.f32.mrb[0].mxu0
    %407 = vdwg.mxu0
    %v408 = vadd.f32 %v312, %v405
    %410 = vset.pattern.permute.xlu0 0
    %411 = vperm.xlu0 %410, %v25
    %v412 = vpop.permute.xlu0 %411
    %v414 = vadd.f32 %v408, %v412
    %v415 = vmax.f32 %v414, 0.0
    %v416 = vmul.f32 %v415, %v26
    %vm417 = vcmask 1016832
    %v418 = vsel %vm417, %v416, 0.0
    %419 = vadd.xlane.f32.xlu0 %v418
    %v420 = vpop.xlane.xlu0 %419
    %vm421 = vcmask 1041408
    %v422 = vsel %vm421, %v420, 0.0
    %v423 = vrot.slane %v422, 4
    %v424 = vadd.f32 %v422, %v423
    %v425 = vrot.slane %v424, 2
    %v426 = vadd.f32 %v424, %v425
    %v427 = vrot.slane %v426, 1
    %v428 = vadd.f32 %v426, %v427
    %vm429 = vcmp.eq.s32.totalorder %v24, 0
    %v430 = vsel %vm429, %v428, 0.0
    %v431 = vadd.f32 %v430, 0.0
    %s432 = scalar_lea.vmem %s0, 128
    %v433 = vld [vmem:[%s432] sm:$0xff]
    %v434 = vld [vmem:[%s432 + $0x8] sm:$0xff]
    %v435 = vld [vmem:[%s432 + $0x10] sm:$0xff]
    %v436 = vld [vmem:[%s432 + $0x18] sm:$0xff]
    %v437 = vld [vmem:[%s432 + $0x20] sm:$0xff]
    %v438 = vld [vmem:[%s432 + $0x28] sm:$0xff]
    %v439 = vld [vmem:[%s432 + $0x30] sm:$0xff]
    %v440 = vld [vmem:[%s432 + $0x38] sm:$0xff]
    %v441 = vld [vmem:[%s432 + $0x40] sm:$0xff]
    %v442 = vld [vmem:[%s432 + $0x48] sm:$0xff]
    %v443 = vld [vmem:[%s432 + $0x50] sm:$0xff]
    %v444 = vld [vmem:[%s432 + $0x58] sm:$0xff]
    %v445 = vld [vmem:[%s432 + $0x60] sm:$0xff]
    %v446 = vld [vmem:[%s432 + $0x68] sm:$0xff]
    %v447 = vld [vmem:[%s432 + $0x70] sm:$0xff]
    %v448 = vld [vmem:[%s432 + $0x78] sm:$0x1f]
    %s449 = scalar_lea.vmem %s0, 384
    %v450 = vld [vmem:[%s449] sm:$0xff]
    %v451 = vld [vmem:[%s449 + $0x8] sm:$0xff]
    %v452 = vld [vmem:[%s449 + $0x10] sm:$0xff]
    %v453 = vld [vmem:[%s449 + $0x18] sm:$0xff]
    %v454 = vld [vmem:[%s449 + $0x20] sm:$0xff]
    %v455 = vld [vmem:[%s449 + $0x28] sm:$0xff]
    %v456 = vld [vmem:[%s449 + $0x30] sm:$0xff]
    %v457 = vld [vmem:[%s449 + $0x38] sm:$0xff]
    %v458 = vld [vmem:[%s449 + $0x40] sm:$0xff]
    %v459 = vld [vmem:[%s449 + $0x48] sm:$0xff]
    %v460 = vld [vmem:[%s449 + $0x50] sm:$0xff]
    %v461 = vld [vmem:[%s449 + $0x58] sm:$0xff]
    %v462 = vld [vmem:[%s449 + $0x60] sm:$0xff]
    %v463 = vld [vmem:[%s449 + $0x68] sm:$0xff]
    %v464 = vld [vmem:[%s449 + $0x70] sm:$0xff]
    %v465 = vld [vmem:[%s449 + $0x78] sm:$0x1f]
    %v467 = vsel %vm67, %v465, 0
    %469 = vmatprep.subr.mxu0 0.0
    %470 = vmatpush1.msra.mxu0 %v450
    %471 = vmatprep.subr.mxu0 0.0
    %472 = vmatpush1.msra.mxu0 %v451
    %473 = vmatprep.subr.mxu0 0.0
    %474 = vmatpush1.msra.mxu0 %v452
    %475 = vmatprep.subr.mxu0 0.0
    %476 = vmatpush1.msra.mxu0 %v453
    %477 = vmatprep.subr.mxu0 0.0
    %478 = vmatpush1.msra.mxu0 %v454
    %479 = vmatprep.subr.mxu0 0.0
    %480 = vmatpush1.msra.mxu0 %v455
    %481 = vmatprep.subr.mxu0 0.0
    %482 = vmatpush1.msra.mxu0 %v456
    %483 = vmatprep.subr.mxu0 0.0
    %484 = vmatpush1.msra.mxu0 %v457
    %485 = vmatprep.subr.mxu0 0.0
    %486 = vmatpush1.msra.mxu0 %v458
    %487 = vmatprep.subr.mxu0 0.0
    %488 = vmatpush1.msra.mxu0 %v459
    %489 = vmatprep.subr.mxu0 0.0
    %490 = vmatpush1.msra.mxu0 %v460
    %491 = vmatprep.subr.mxu0 0.0
    %492 = vmatpush1.msra.mxu0 %v461
    %493 = vmatprep.subr.mxu0 0.0
    %494 = vmatpush1.msra.mxu0 %v462
    %495 = vmatprep.subr.mxu0 0.0
    %496 = vmatpush1.msra.mxu0 %v463
    %497 = vmatprep.subr.mxu0 0.0
    %498 = vmatpush1.msra.mxu0 %v464
    %499 = vmatprep.subr.mxu0 0.0
    %500 = vmatpush1.msra.mxu0 %v467
    %501 = vmatprep.subr.mxu0 0.0
    %502 = vmatpush1.msra.mxu0 0.0
    %503 = vmatprep.subr.mxu0 0.0
    %504 = vmatpush1.msra.mxu0 0.0
    %505 = vmatprep.subr.mxu0 0.0
    %506 = vmatpush1.msra.mxu0 0.0
    %507 = vmatprep.subr.mxu0 0.0
    %508 = vmatpush1.msra.mxu0 0.0
    %509 = vmatprep.subr.mxu0 0.0
    %510 = vmatpush1.msra.mxu0 0.0
    %511 = vmatprep.subr.mxu0 0.0
    %512 = vmatpush1.msra.mxu0 0.0
    %513 = vmatprep.subr.mxu0 0.0
    %514 = vmatpush1.msra.mxu0 0.0
    %515 = vmatprep.subr.mxu0 0.0
    %516 = vmatpush1.msra.mxu0 0.0
    %517 = vmatprep.subr.mxu0 0.0
    %518 = vmatpush1.msra.mxu0 0.0
    %519 = vmatprep.subr.mxu0 0.0
    %520 = vmatpush1.msra.mxu0 0.0
    %521 = vmatprep.subr.mxu0 0.0
    %522 = vmatpush1.msra.mxu0 0.0
    %523 = vmatprep.subr.mxu0 0.0
    %524 = vmatpush1.msra.mxu0 0.0
    %525 = vmatprep.subr.mxu0 0.0
    %526 = vmatpush1.msra.mxu0 0.0
    %527 = vmatprep.subr.mxu0 0.0
    %528 = vmatpush1.msra.mxu0 0.0
    %529 = vmatprep.subr.mxu0 0.0
    %530 = vmatpush1.msra.mxu0 0.0
    %531 = vmatprep.subr.mxu0 0.0
    %532 = vmatpush1.msra.mxu0 0.0
    %533 = vmatprep.mubr.f32.mxu0 0.0
    %534 = vmatmul.mubr.f32.gmra.mrb[0].mxu0 %v65
    %v535 = vpop.f32.mrb[0].mxu0
    %v536 = vadd.f32 0.0, %v535
    %v537 = vpop.f32.mrb[0].mxu0
    %538 = vdwg.mxu0
    %v540 = vsel %vm67, %v448, 0
    %542 = vmatprep.subr.mxu0 0.0
    %543 = vmatpush1.msra.mxu0 %v433
    %544 = vmatprep.subr.mxu0 0.0
    %545 = vmatpush1.msra.mxu0 %v434
    %546 = vmatprep.subr.mxu0 0.0
    %547 = vmatpush1.msra.mxu0 %v435
    %548 = vmatprep.subr.mxu0 0.0
    %549 = vmatpush1.msra.mxu0 %v436
    %550 = vmatprep.subr.mxu0 0.0
    %551 = vmatpush1.msra.mxu0 %v437
    %552 = vmatprep.subr.mxu0 0.0
    %553 = vmatpush1.msra.mxu0 %v438
    %554 = vmatprep.subr.mxu0 0.0
    %555 = vmatpush1.msra.mxu0 %v439
    %556 = vmatprep.subr.mxu0 0.0
    %557 = vmatpush1.msra.mxu0 %v440
    %558 = vmatprep.subr.mxu0 0.0
    %559 = vmatpush1.msra.mxu0 %v441
    %560 = vmatprep.subr.mxu0 0.0
    %561 = vmatpush1.msra.mxu0 %v442
    %562 = vmatprep.subr.mxu0 0.0
    %563 = vmatpush1.msra.mxu0 %v443
    %564 = vmatprep.subr.mxu0 0.0
    %565 = vmatpush1.msra.mxu0 %v444
    %566 = vmatprep.subr.mxu0 0.0
    %567 = vmatpush1.msra.mxu0 %v445
    %568 = vmatprep.subr.mxu0 0.0
    %569 = vmatpush1.msra.mxu0 %v446
    %570 = vmatprep.subr.mxu0 0.0
    %571 = vmatpush1.msra.mxu0 %v447
    %572 = vmatprep.subr.mxu0 0.0
    %573 = vmatpush1.msra.mxu0 %v540
    %574 = vmatprep.subr.mxu0 0.0
    %575 = vmatpush1.msra.mxu0 0.0
    %576 = vmatprep.subr.mxu0 0.0
    %577 = vmatpush1.msra.mxu0 0.0
    %578 = vmatprep.subr.mxu0 0.0
    %579 = vmatpush1.msra.mxu0 0.0
    %580 = vmatprep.subr.mxu0 0.0
    %581 = vmatpush1.msra.mxu0 0.0
    %582 = vmatprep.subr.mxu0 0.0
    %583 = vmatpush1.msra.mxu0 0.0
    %584 = vmatprep.subr.mxu0 0.0
    %585 = vmatpush1.msra.mxu0 0.0
    %586 = vmatprep.subr.mxu0 0.0
    %587 = vmatpush1.msra.mxu0 0.0
    %588 = vmatprep.subr.mxu0 0.0
    %589 = vmatpush1.msra.mxu0 0.0
    %590 = vmatprep.subr.mxu0 0.0
    %591 = vmatpush1.msra.mxu0 0.0
    %592 = vmatprep.subr.mxu0 0.0
    %593 = vmatpush1.msra.mxu0 0.0
    %594 = vmatprep.subr.mxu0 0.0
    %595 = vmatpush1.msra.mxu0 0.0
    %596 = vmatprep.subr.mxu0 0.0
    %597 = vmatpush1.msra.mxu0 0.0
    %598 = vmatprep.subr.mxu0 0.0
    %599 = vmatpush1.msra.mxu0 0.0
    %600 = vmatprep.subr.mxu0 0.0
    %601 = vmatpush1.msra.mxu0 0.0
    %602 = vmatprep.subr.mxu0 0.0
    %603 = vmatpush1.msra.mxu0 0.0
    %604 = vmatprep.subr.mxu0 0.0
    %605 = vmatpush1.msra.mxu0 0.0
    %606 = vmatprep.mubr.f32.mxu0 0.0
    %607 = vmatmul.mubr.f32.gmra.mrb[0].mxu0 %v142
    %v608 = vpop.f32.mrb[0].mxu0
    %v609 = vadd.f32 %v536, %v608
    %v610 = vpop.f32.mrb[0].mxu0
    %611 = vdwg.mxu0
    %s612 = scalar_lea.vmem %s0, 640
    %v613 = vld [vmem:[%s612] sm:$0xff]
    %v614 = vld [vmem:[%s612 + $0x8] sm:$0xff]
    %v615 = vld [vmem:[%s612 + $0x10] sm:$0xff]
    %v616 = vld [vmem:[%s612 + $0x18] sm:$0xff]
    %v617 = vld [vmem:[%s612 + $0x20] sm:$0xff]
    %v618 = vld [vmem:[%s612 + $0x28] sm:$0xff]
    %v619 = vld [vmem:[%s612 + $0x30] sm:$0xff]
    %v620 = vld [vmem:[%s612 + $0x38] sm:$0xff]
    %v621 = vld [vmem:[%s612 + $0x40] sm:$0xff]
    %v622 = vld [vmem:[%s612 + $0x48] sm:$0xff]
    %v623 = vld [vmem:[%s612 + $0x50] sm:$0xff]
    %v624 = vld [vmem:[%s612 + $0x58] sm:$0xff]
    %v625 = vld [vmem:[%s612 + $0x60] sm:$0xff]
    %v626 = vld [vmem:[%s612 + $0x68] sm:$0xff]
    %v627 = vld [vmem:[%s612 + $0x70] sm:$0xff]
    %v628 = vld [vmem:[%s612 + $0x78] sm:$0x1f]
    %v630 = vsel %vm67, %v628, 0
    %632 = vmatprep.subr.mxu0 0.0
    %633 = vmatpush1.msra.mxu0 %v613
    %634 = vmatprep.subr.mxu0 0.0
    %635 = vmatpush1.msra.mxu0 %v614
    %636 = vmatprep.subr.mxu0 0.0
    %637 = vmatpush1.msra.mxu0 %v615
    %638 = vmatprep.subr.mxu0 0.0
    %639 = vmatpush1.msra.mxu0 %v616
    %640 = vmatprep.subr.mxu0 0.0
    %641 = vmatpush1.msra.mxu0 %v617
    %642 = vmatprep.subr.mxu0 0.0
    %643 = vmatpush1.msra.mxu0 %v618
    %644 = vmatprep.subr.mxu0 0.0
    %645 = vmatpush1.msra.mxu0 %v619
    %646 = vmatprep.subr.mxu0 0.0
    %647 = vmatpush1.msra.mxu0 %v620
    %648 = vmatprep.subr.mxu0 0.0
    %649 = vmatpush1.msra.mxu0 %v621
    %650 = vmatprep.subr.mxu0 0.0
    %651 = vmatpush1.msra.mxu0 %v622
    %652 = vmatprep.subr.mxu0 0.0
    %653 = vmatpush1.msra.mxu0 %v623
    %654 = vmatprep.subr.mxu0 0.0
    %655 = vmatpush1.msra.mxu0 %v624
    %656 = vmatprep.subr.mxu0 0.0
    %657 = vmatpush1.msra.mxu0 %v625
    %658 = vmatprep.subr.mxu0 0.0
    %659 = vmatpush1.msra.mxu0 %v626
    %660 = vmatprep.subr.mxu0 0.0
    %661 = vmatpush1.msra.mxu0 %v627
    %662 = vmatprep.subr.mxu0 0.0
    %663 = vmatpush1.msra.mxu0 %v630
    %664 = vmatprep.subr.mxu0 0.0
    %665 = vmatpush1.msra.mxu0 0.0
    %666 = vmatprep.subr.mxu0 0.0
    %667 = vmatpush1.msra.mxu0 0.0
    %668 = vmatprep.subr.mxu0 0.0
    %669 = vmatpush1.msra.mxu0 0.0
    %670 = vmatprep.subr.mxu0 0.0
    %671 = vmatpush1.msra.mxu0 0.0
    %672 = vmatprep.subr.mxu0 0.0
    %673 = vmatpush1.msra.mxu0 0.0
    %674 = vmatprep.subr.mxu0 0.0
    %675 = vmatpush1.msra.mxu0 0.0
    %676 = vmatprep.subr.mxu0 0.0
    %677 = vmatpush1.msra.mxu0 0.0
    %678 = vmatprep.subr.mxu0 0.0
    %679 = vmatpush1.msra.mxu0 0.0
    %680 = vmatprep.subr.mxu0 0.0
    %681 = vmatpush1.msra.mxu0 0.0
    %682 = vmatprep.subr.mxu0 0.0
    %683 = vmatpush1.msra.mxu0 0.0
    %684 = vmatprep.subr.mxu0 0.0
    %685 = vmatpush1.msra.mxu0 0.0
    %686 = vmatprep.subr.mxu0 0.0
    %687 = vmatpush1.msra.mxu0 0.0
    %688 = vmatprep.subr.mxu0 0.0
    %689 = vmatpush1.msra.mxu0 0.0
    %690 = vmatprep.subr.mxu0 0.0
    %691 = vmatpush1.msra.mxu0 0.0
    %692 = vmatprep.subr.mxu0 0.0
    %693 = vmatpush1.msra.mxu0 0.0
    %694 = vmatprep.subr.mxu0 0.0
    %695 = vmatpush1.msra.mxu0 0.0
    %696 = vmatprep.mubr.f32.mxu0 0.0
    %697 = vmatmul.mubr.f32.gmra.mrb[0].mxu0 %v237
    %v698 = vpop.f32.mrb[0].mxu0
    %v699 = vadd.f32 0.0, %v698
    %v700 = vpop.f32.mrb[0].mxu0
    %701 = vdwg.mxu0
    %v702 = vadd.f32 %v609, %v699
    %s703 = scalar_lea.vmem %s0, 896
    %v704 = vld [vmem:[%s703] sm:$0xff]
    %v705 = vld [vmem:[%s703 + $0x8] sm:$0xff]
    %v706 = vld [vmem:[%s703 + $0x10] sm:$0xff]
    %v707 = vld [vmem:[%s703 + $0x18] sm:$0xff]
    %v708 = vld [vmem:[%s703 + $0x20] sm:$0xff]
    %v709 = vld [vmem:[%s703 + $0x28] sm:$0xff]
    %v710 = vld [vmem:[%s703 + $0x30] sm:$0xff]
    %v711 = vld [vmem:[%s703 + $0x38] sm:$0xff]
    %v712 = vld [vmem:[%s703 + $0x40] sm:$0xff]
    %v713 = vld [vmem:[%s703 + $0x48] sm:$0xff]
    %v714 = vld [vmem:[%s703 + $0x50] sm:$0xff]
    %v715 = vld [vmem:[%s703 + $0x58] sm:$0xff]
    %v716 = vld [vmem:[%s703 + $0x60] sm:$0xff]
    %v717 = vld [vmem:[%s703 + $0x68] sm:$0xff]
    %v718 = vld [vmem:[%s703 + $0x70] sm:$0xff]
    %v719 = vld [vmem:[%s703 + $0x78] sm:$0x1f]
    %v721 = vsel %vm67, %v719, 0
    %723 = vmatprep.subr.mxu0 0.0
    %724 = vmatpush1.msra.mxu0 %v704
    %725 = vmatprep.subr.mxu0 0.0
    %726 = vmatpush1.msra.mxu0 %v705
    %727 = vmatprep.subr.mxu0 0.0
    %728 = vmatpush1.msra.mxu0 %v706
    %729 = vmatprep.subr.mxu0 0.0
    %730 = vmatpush1.msra.mxu0 %v707
    %731 = vmatprep.subr.mxu0 0.0
    %732 = vmatpush1.msra.mxu0 %v708
    %733 = vmatprep.subr.mxu0 0.0
    %734 = vmatpush1.msra.mxu0 %v709
    %735 = vmatprep.subr.mxu0 0.0
    %736 = vmatpush1.msra.mxu0 %v710
    %737 = vmatprep.subr.mxu0 0.0
    %738 = vmatpush1.msra.mxu0 %v711
    %739 = vmatprep.subr.mxu0 0.0
    %740 = vmatpush1.msra.mxu0 %v712
    %741 = vmatprep.subr.mxu0 0.0
    %742 = vmatpush1.msra.mxu0 %v713
    %743 = vmatprep.subr.mxu0 0.0
    %744 = vmatpush1.msra.mxu0 %v714
    %745 = vmatprep.subr.mxu0 0.0
    %746 = vmatpush1.msra.mxu0 %v715
    %747 = vmatprep.subr.mxu0 0.0
    %748 = vmatpush1.msra.mxu0 %v716
    %749 = vmatprep.subr.mxu0 0.0
    %750 = vmatpush1.msra.mxu0 %v717
    %751 = vmatprep.subr.mxu0 0.0
    %752 = vmatpush1.msra.mxu0 %v718
    %753 = vmatprep.subr.mxu0 0.0
    %754 = vmatpush1.msra.mxu0 %v721
    %755 = vmatprep.subr.mxu0 0.0
    %756 = vmatpush1.msra.mxu0 0.0
    %757 = vmatprep.subr.mxu0 0.0
    %758 = vmatpush1.msra.mxu0 0.0
    %759 = vmatprep.subr.mxu0 0.0
    %760 = vmatpush1.msra.mxu0 0.0
    %761 = vmatprep.subr.mxu0 0.0
    %762 = vmatpush1.msra.mxu0 0.0
    %763 = vmatprep.subr.mxu0 0.0
    %764 = vmatpush1.msra.mxu0 0.0
    %765 = vmatprep.subr.mxu0 0.0
    %766 = vmatpush1.msra.mxu0 0.0
    %767 = vmatprep.subr.mxu0 0.0
    %768 = vmatpush1.msra.mxu0 0.0
    %769 = vmatprep.subr.mxu0 0.0
    %770 = vmatpush1.msra.mxu0 0.0
    %771 = vmatprep.subr.mxu0 0.0
    %772 = vmatpush1.msra.mxu0 0.0
    %773 = vmatprep.subr.mxu0 0.0
    %774 = vmatpush1.msra.mxu0 0.0
    %775 = vmatprep.subr.mxu0 0.0
    %776 = vmatpush1.msra.mxu0 0.0
    %777 = vmatprep.subr.mxu0 0.0
    %778 = vmatpush1.msra.mxu0 0.0
    %779 = vmatprep.subr.mxu0 0.0
    %780 = vmatpush1.msra.mxu0 0.0
    %781 = vmatprep.subr.mxu0 0.0
    %782 = vmatpush1.msra.mxu0 0.0
    %783 = vmatprep.subr.mxu0 0.0
    %784 = vmatpush1.msra.mxu0 0.0
    %785 = vmatprep.subr.mxu0 0.0
    %786 = vmatpush1.msra.mxu0 0.0
    %787 = vmatprep.mubr.f32.mxu0 0.0
    %788 = vmatmul.mubr.f32.gmra.mrb[0].mxu0 %v333
    %v789 = vpop.f32.mrb[0].mxu0
    %v790 = vadd.f32 0.0, %v789
    %v791 = vpop.f32.mrb[0].mxu0
    %792 = vdwg.mxu0
    %v793 = vadd.f32 %v702, %v790
    %v794 = vadd.f32 %v793, %v412
    %v795 = vmax.f32 %v794, 0.0
    %v796 = vmul.f32 %v795, %v26
    %v797 = vsel %vm417, %v796, 0.0
    %798 = vadd.xlane.f32.xlu0 %v797
    %v799 = vpop.xlane.xlu0 %798
    %v800 = vsel %vm421, %v799, 0.0
    %v801 = vrot.slane %v800, 4
    %v802 = vadd.f32 %v800, %v801
    %v803 = vrot.slane %v802, 2
    %v804 = vadd.f32 %v802, %v803
    %v805 = vrot.slane %v804, 1
    %v806 = vadd.f32 %v804, %v805
    %vm807 = vcmp.eq.s32.totalorder %v24, 1
    %v808 = vsel %vm807, %v806, 0.0
    %v809 = vadd.f32 %v431, %v808
    %v810 = vld [vmem:[#allocation2] sm:$0x1]
    %812 = vset.pattern.permute.xlu0 0
    %813 = vperm.xlu0 %812, %v810
    %v814 = vpop.permute.xlu0 %813
    %v816 = vlaneseq
    %v817 = vshrl.u32 %v816, 7
    %v818 = vsub.s32 0, %v817
    %v819 = vrot.slane %v814, %v818
    %v820 = vadd.f32 %v809, %v819
    %vm821 = vcmask 8192
    %822 = vst.msk [vmem:[#allocation3] sm:$0x1] %vm821, %v820
    // Predicated region
    $region22: #{critic_forward.3} parent=1 // pred_check
      _
    $region23: #{critic_forward.3} parent=1 // pred_check_branch
      %824 = sbr.rel (0) target = $region25
    $region24: #{critic_forward.3} parent=1 // pred_region
      %s826 = ssub.s32 16, 16
      %827 = vsyncadd [#allocation4], %s826
      %s829 = sshll.u32 [#allocation3], 4
      %s830 = int_to_ptr.vmem [resolvable:$true] %s829
      %832 = dma.vmem_to_hbm [thread:$0]  %s830, 16, %s5, [#allocation4]
    $region25: #{critic_forward.3} parent=1 // pred_fallthru
      _
    // Predicated region
    $region26: #{critic_forward.3} parent=1 // pred_check
      _
    $region27: #{critic_forward.3} parent=1 // pred_check_branch
      %834 = sbr.rel (0) target = $region29
    $region28: #{critic_forward.3} parent=1 // pred_region
      %835 = dma.done [#allocation4], 16
    $region29: #{critic_forward.3} parent=1 // pred_fallthru
      _
    %836 = vsyncpa [#allocation4], 1

</llo_original>
